<compile_context>
chip_gen: v7x
topology: tpu7x:2x2x1
jax: 0.10.0
libtpu: 0.0.40
codegen_flags: <defaults>
</compile_context>

<pallas_src>
import numpy as np
import jax
import jax.numpy as jnp
from jax.experimental import pallas as pl
from jax.experimental.pallas import tpu as pltpu

TOKEN_DIM = 768          # CLIP branch token_dim from the module
PROJ_IN = 40 * 64        # self.proj = linear(40*64, token_dim)
SEQ = 16
BATCH = 2
MAX_LINES = 8
PLACEHOLDER = 265        # synthetic stand-in for get_clip_token_for_string('*')


def _tensorcores_per_chip():
    """v7x has 2 TensorCores per chip; v5e/v6e have 1.  Splitting the grid only
    pays off when it can be sharded across cores, so gate it on the detected
    chip and fall back to single-core behaviour on any doubt."""
    try:
        kind = jax.devices()[0].device_kind.lower()
    except Exception:
        return 1
    return 2 if "v7" in kind else 1


# --------------------------------------------------------------------------
# encode_text hot path: enc_glyph = proj(recog_emb.reshape(N, -1))
# --------------------------------------------------------------------------
def quantize_weights_int8(w):
    """Per-output-channel symmetric int8 quantization (done once, offline in a
    real deployment).  Returns (w_int8, scale_f32[1, D])."""
    scale = jnp.max(jnp.abs(w), axis=0, keepdims=True) / 127.0
    scale = jnp.maximum(scale, 1e-8)
    w_i8 = jnp.clip(jnp.round(w / scale), -127, 127).astype(jnp.int8)
    return w_i8, scale.astype(jnp.float32)


def proj_kernel(x_ref, w_ref, scale_ref, b_ref, o_ref):
    k = pl.program_id(1)

    @pl.when(k == 0)
    def _():
        # bias folded into the accumulator init (output block is VMEM-resident
        # across the whole K reduction, so accumulate directly into o_ref).
        o_ref[...] = jnp.broadcast_to(b_ref[...], o_ref.shape)

    # int8 weights are a storage/DMA format only: cast to bf16 right before the
    # MXU (portable across v5e/v6e/v7x), apply the per-channel scale to the
    # small (N, tn) partial product instead of the (K, tn) weight tile.
    part = jnp.dot(x_ref[...].astype(jnp.bfloat16),
                   w_ref[...].astype(jnp.bfloat16),
                   preferred_element_type=jnp.float32)
    o_ref[...] += part * scale_ref[...]


def proj_linear(x, w_i8, w_scale, b, *, tk=None, col_blocks=1):
    """y = x @ dequant(w_i8, w_scale) + b, f32 accumulate, f32 out.

    NOTE: at production sizes (many glyph lines) batch all lines into one call
    and pad N up to a multiple of 128 (v5e) / 256 (v6e/v7x) with a parallel M
    grid axis; at N=8 the kernel stays weight-DMA bound so M padding is moot.
    """
    n, kdim = x.shape
    _, d = w_i8.shape
    if tk is None:
        tk = kdim            # whole-K single block: extra K steps only buy
                             # per-step overhead on a DMA-bound kernel.
    assert kdim % tk == 0
    assert d % (col_blocks * 128) == 0
    tn = d // col_blocks
    x = x.astype(jnp.float32)
    b = b.astype(jnp.float32)

    return pl.pallas_call(
        proj_kernel,
        out_shape=jax.ShapeDtypeStruct((n, d), jnp.float32),
        grid_spec=pltpu.PrefetchScalarGridSpec(
            num_scalar_prefetch=0,
            grid=(col_blocks, kdim // tk),
            in_specs=[
                pl.BlockSpec((n, tk), lambda j, k: (0, k)),
                pl.BlockSpec((tk, tn), lambda j, k: (k, j)),
                pl.BlockSpec((1, tn), lambda j, k: (0, j)),
                pl.BlockSpec((1, tn), lambda j, k: (0, j)),
            ],
            out_specs=pl.BlockSpec((n, tn), lambda j, k: (0, j)),
        ),
        compiler_params=pltpu.CompilerParams(
            # column axis shards across v7x's 2 TCs; K is a reduction axis.
            dimension_semantics=("parallel", "arbitrary"),
            vmem_limit_bytes=32 * 1024 * 1024),
    )(x, w_i8, w_scale, b)


# --------------------------------------------------------------------------
# EmbeddingManager.forward: masked scatter of glyph line embeddings
# --------------------------------------------------------------------------
def scatter_kernel(idx_ref, emb_ref, gly_ref, out_ref):
    out = emb_ref[...]                                   # (bt, seq, d)
    gly = gly_ref[...]                                   # (bt, L, d)
    # lane-broadcast the per-position line index ONCE (not per line).
    idx = jnp.broadcast_to(idx_ref[...], out.shape)      # (bt, seq, d) int32
    # Small static unroll of pure VPU selects.  For large max_lines/seq the
    # combine can instead be one small batched MXU matmul:
    #   out = where(idx >= 0, einsum('bsl,bld->bsd', onehot, gly), out)
    for l in range(gly.shape[1]):
        line = jnp.broadcast_to(gly[:, l:l + 1, :], out.shape)
        out = jnp.where(idx == l, line, out)
    out_ref[...] = out.astype(out_ref.dtype)


def embedding_manager_forward(tokenized_text, embedded_text, glyph_embs,
                              n_lines, placeholder):
    b, seq = tokenized_text.shape
    _, max_lines, d = glyph_embs.shape
    assert d % 128 == 0
    tokenized_text = tokenized_text.astype(jnp.int32)
    n_lines = n_lines.astype(jnp.int32)
    glyph_embs = glyph_embs.astype(embedded_text.dtype)
    # NOTE: if the downstream UNet runs bf16, pass embedded_text/glyph_embs as
    # bf16 — the kernel and output dtype simply follow embedded_text.dtype.

    # ---- placeholder bookkeeping hoisted out of the kernel (plain JAX) ----
    # n_lines must be <= max_lines (guaranteed by glyph_embs packing); checked
    # host-side in the harness since it cannot be asserted on traced values.
    mask = tokenized_text == jnp.int32(placeholder)            # (b, seq)
    mask_i = mask.astype(jnp.int32)
    excl = jnp.cumsum(mask_i, axis=1) - mask_i                 # 0-based ordinal
    n_match = jnp.sum(mask_i, axis=1)                          # (b,)
    mismatch = jnp.logical_and(n_match > 0, n_match != n_lines)
    # emulate the python `break`: batches after the first truncation mismatch
    # are left untouched (exclusive prefix-OR of the mismatch flag).
    broken_before = (jnp.cumsum(mismatch.astype(jnp.int32))
                     - mismatch.astype(jnp.int32))
    do_replace = ((broken_before == 0) & (n_match > 0) & (n_match == n_lines))
    # lane-dense per-position line index: >= 0 -> replace with that glyph line,
    # -1 -> keep the original embedding.  Replaces the (b, seq, max_lines)
    # onehot side input (8x smaller, no per-line narrow slices in the kernel).
    line_idx = jnp.where(mask & do_replace[:, None] & (excl < max_lines),
                         excl, -1).astype(jnp.int32)[:, :, None]   # (b, seq, 1)

    # pad seq to a sublane multiple so (bt, seq, d) blocks stay (8,128)-aligned
    # (no-op at seq=16; matters at the real CLIP seq=77 -> 80).
    seq_p = ((seq + 7) // 8) * 8
    if seq_p != seq:
        embedded_text = jnp.pad(embedded_text,
                                ((0, 0), (0, seq_p - seq), (0, 0)))
        line_idx = jnp.pad(line_idx, ((0, 0), (0, seq_p - seq), (0, 0)),
                           constant_values=-1)

    # v7x: split the batch across both TensorCores; v5e/v6e: one full-batch
    # block (extra grid steps are pure overhead on a single-TC chip).
    splits = _tensorcores_per_chip()
    bt = b // splits if (b % splits == 0 and b >= splits) else b
    bt = min(bt, 8)
    while b % bt:
        bt -= 1

    out = pl.pallas_call(
        scatter_kernel,
        out_shape=jax.ShapeDtypeStruct((b, seq_p, d), embedded_text.dtype),
        grid_spec=pltpu.PrefetchScalarGridSpec(
            num_scalar_prefetch=0,
            grid=(b // bt,),
            in_specs=[
                pl.BlockSpec((bt, seq_p, 1), lambda i: (i, 0, 0)),
                pl.BlockSpec((bt, seq_p, d), lambda i: (i, 0, 0)),
                pl.BlockSpec((bt, max_lines, d), lambda i: (i, 0, 0)),
            ],
            out_specs=pl.BlockSpec((bt, seq_p, d), lambda i: (i, 0, 0)),
        ),
        # write the placeholder rows in place (module mutates embedded_text):
        # no fresh HBM output allocation/copy for the untouched bulk.
        input_output_aliases={1: 0},
        compiler_params=pltpu.CompilerParams(
            dimension_semantics=("parallel",)),
    )(line_idx, embedded_text, glyph_embs)

    if seq_p != seq:
        out = out[:, :seq, :]
    return out


if __name__ == "__main__":
    key = jax.random.PRNGKey(0)
    k1, k2, k3, k4 = jax.random.split(key, 4)

    # deterministic "parameters" of EmbeddingManager.proj (Linear(2560, 768))
    w = jax.random.normal(k1, (PROJ_IN, TOKEN_DIM), jnp.float32) / np.sqrt(PROJ_IN)
    bias = jax.random.normal(k2, (1, TOKEN_DIM), jnp.float32) * 0.01

    # encode_text inputs
    n_lines = jnp.array([2, 3], dtype=jnp.int32)      # per-batch line counts
    assert int(jnp.max(n_lines)) <= MAX_LINES
    n_pad = 8                                         # sublane-padded line count
    # TODO(synk): the OCR recognizer (get_recog_emb / PP-OCR predictor) and the
    # CLIP ViT / tokenizer have no Pallas equivalent; synthesize the (N, 40*64)
    # neck features directly instead.
    recog_emb = jax.random.normal(k3, (n_pad, PROJ_IN), jnp.float32)

    # one-time (offline) weight quantization: int8 storage + per-channel scales
    w_i8, w_scale = quantize_weights_int8(w)

    enc_glyph = proj_linear(recog_emb, w_i8, w_scale, bias,
                            col_blocks=_tensorcores_per_chip())   # (8, 768) f32

    # pack per-batch line embeddings (text_embs_all) as [batch, max_lines, dim]
    glyph_embs = jnp.zeros((BATCH, MAX_LINES, TOKEN_DIM), jnp.float32)
    glyph_embs = glyph_embs.at[0, :2].set(enc_glyph[0:2])
    glyph_embs = glyph_embs.at[1, :3].set(enc_glyph[2:5])

    # forward() inputs
    tokenized_text = jnp.full((BATCH, SEQ), 100, dtype=jnp.int32)
    tokenized_text = tokenized_text.at[0, 3].set(PLACEHOLDER)
    tokenized_text = tokenized_text.at[0, 7].set(PLACEHOLDER)
    tokenized_text = tokenized_text.at[1, 1].set(PLACEHOLDER)
    tokenized_text = tokenized_text.at[1, 5].set(PLACEHOLDER)
    tokenized_text = tokenized_text.at[1, 10].set(PLACEHOLDER)
    embedded_text = jax.random.normal(k4, (BATCH, SEQ, TOKEN_DIM), jnp.float32)

    # snapshot before the call (the kernel aliases/updates embedded_text in place)
    emb_np = np.array(embedded_text)
    tok_np = np.array(tokenized_text)
    recog_np = np.array(recog_emb)
    w_np = np.array(w)
    b_np = np.array(bias)

    out = embedding_manager_forward(tokenized_text, embedded_text,
                                    glyph_embs, n_lines, PLACEHOLDER)
    out = jax.block_until_ready(out)

    # ---- full-precision f32 reference of the module semantics ----
    enc_ref = recog_np @ w_np + b_np                     # f32 nn.Linear reference
    # proj kernel vs f32 reference: bounds the int8-weight + bf16-activation error
    np.testing.assert_allclose(np.array(enc_glyph), enc_ref, rtol=0.06, atol=0.06)

    ref = emb_np.copy()
    text_embs_all = [enc_ref[0:2], enc_ref[2:5]]
    for i in range(BATCH):
        idx = tok_np[i] == PLACEHOLDER
        if idx.sum() > 0:
            te = text_embs_all[i]
            if idx.sum() != len(te):
                break
            ref[i][idx] = te[: idx.sum()]
    np.testing.assert_allclose(np.array(out), ref, rtol=0.06, atol=0.06)
    print("KERNEL_OK")
</pallas_src>

<mosaic_0001>
module attributes {stable_mosaic.version = 11 : i64} {
  func.func @proj_kernel(%arg0: i32, %arg1: i32, %arg2: memref<8x2560xf32, #tpu.memory_space<vmem>>, %arg3: memref<2560x768xi8, #tpu.memory_space<vmem>>, %arg4: memref<1x768xf32, #tpu.memory_space<vmem>>, %arg5: memref<1x768xf32, #tpu.memory_space<vmem>>, %arg6: memref<8x768xf32, #tpu.memory_space<vmem>>) attributes {dimension_semantics = [#tpu.dimension_semantics<parallel>, #tpu.dimension_semantics<arbitrary>], iteration_bounds = array<i64: 1, 1>, scalar_prefetch = 0 : i64, scratch_operands = 0 : i64, tpu.core_type = #tpu.core_type<tc>, window_params = [{transform_indices = @transform_0, window_bounds = array<i64: 8, 2560>}, {transform_indices = @transform_1, window_bounds = array<i64: 2560, 768>}, {transform_indices = @transform_2, window_bounds = array<i64: 1, 768>}, {transform_indices = @transform_3, window_bounds = array<i64: 1, 768>}, {transform_indices = @transform_4, window_bounds = array<i64: 8, 768>}]} {
    %c0_i32 = arith.constant 0 : i32
    %0 = arith.cmpi eq, %arg1, %c0_i32 : i32
    %1 = arith.extui %0 : i1 to i32
    %c0_i32_0 = arith.constant 0 : i32
    %2 = arith.cmpi ne, %1, %c0_i32_0 : i32
    scf.if %2 {
      %c0_10 = arith.constant 0 : index
      %c0_11 = arith.constant 0 : index
      %14 = vector.load %arg5[%c0_10, %c0_11] : memref<1x768xf32, #tpu.memory_space<vmem>>, vector<1x768xf32>
      %15 = vector.shape_cast %14 : vector<1x768xf32> to vector<1x768xf32>
      %16 = vector.broadcast %15 : vector<1x768xf32> to vector<8x768xf32>
      %c0_12 = arith.constant 0 : index
      %c0_13 = arith.constant 0 : index
      %17 = vector.load %arg6[%c0_12, %c0_13] : memref<8x768xf32, #tpu.memory_space<vmem>>, vector<8x768xf32>
      tpu.vector_store %arg6[%c0_12, %c0_13], %16 {strides = array<i32>} : memref<8x768xf32, #tpu.memory_space<vmem>>, vector<8x768xf32>,
    } else {
    }
    %c0 = arith.constant 0 : index
    %c0_1 = arith.constant 0 : index
    %3 = vector.load %arg2[%c0, %c0_1] : memref<8x2560xf32, #tpu.memory_space<vmem>>, vector<8x2560xf32>
    %4 = arith.truncf %3 : vector<8x2560xf32> to vector<8x2560xbf16>
    %c0_2 = arith.constant 0 : index
    %c0_3 = arith.constant 0 : index
    %5 = vector.load %arg3[%c0_2, %c0_3] : memref<2560x768xi8, #tpu.memory_space<vmem>>, vector<2560x768xi8>
    %6 = arith.sitofp %5 : vector<2560x768xi8> to vector<2560x768xbf16>
    %cst = arith.constant dense<0.000000e+00> : vector<8x768xf32>
    %7 = tpu.matmul %4, %6, %cst {dimension_numbers = #tpu.dot_dimension_numbers<[1], [0], [0], [1], [0, 0, 1, 1], [], []>} : vector<8x2560xbf16>, vector<2560x768xbf16>, vector<8x768xf32> -> vector<8x768xf32>
    %c0_4 = arith.constant 0 : index
    %c0_5 = arith.constant 0 : index
    %8 = vector.load %arg6[%c0_4, %c0_5] : memref<8x768xf32, #tpu.memory_space<vmem>>, vector<8x768xf32>
    %c0_6 = arith.constant 0 : index
    %c0_7 = arith.constant 0 : index
    %9 = vector.load %arg4[%c0_6, %c0_7] : memref<1x768xf32, #tpu.memory_space<vmem>>, vector<1x768xf32>
    %10 = vector.broadcast %9 : vector<1x768xf32> to vector<8x768xf32>
    %11 = arith.mulf %7, %10 : vector<8x768xf32>
    %12 = arith.addf %8, %11 : vector<8x768xf32>
    %c0_8 = arith.constant 0 : index
    %c0_9 = arith.constant 0 : index
    %13 = vector.load %arg6[%c0_8, %c0_9] : memref<8x768xf32, #tpu.memory_space<vmem>>, vector<8x768xf32>
    tpu.vector_store %arg6[%c0_8, %c0_9], %12 {strides = array<i32>} : memref<8x768xf32, #tpu.memory_space<vmem>>, vector<8x768xf32>,
    return
  }
  func.func @transform_0(%arg0: i32, %arg1: i32) -> (i32, i32) {
    %c0_i32 = arith.constant 0 : i32
    %c0_i32_0 = arith.constant 0 : i32
    return %c0_i32, %arg1 : i32, i32
  }
  func.func @transform_1(%arg0: i32, %arg1: i32) -> (i32, i32) {
    %c0_i32 = arith.constant 0 : i32
    return %arg1, %arg0 : i32, i32
  }
  func.func @transform_2(%arg0: i32, %arg1: i32) -> (i32, i32) {
    %c0_i32 = arith.constant 0 : i32
    %c0_i32_0 = arith.constant 0 : i32
    return %c0_i32, %arg0 : i32, i32
  }
  func.func @transform_3(%arg0: i32, %arg1: i32) -> (i32, i32) {
    %c0_i32 = arith.constant 0 : i32
    %c0_i32_0 = arith.constant 0 : i32
    return %c0_i32, %arg0 : i32, i32
  }
  func.func @transform_4(%arg0: i32, %arg1: i32) -> (i32, i32) {
    %c0_i32 = arith.constant 0 : i32
    %c0_i32_0 = arith.constant 0 : i32
    return %c0_i32, %arg0 : i32, i32
  }
}

</mosaic_0001>

<llo_original>
// kernel: tpu_custom_call.1
$region0: #{tpu_custom_call.1}
  #allocation0 [shape = 'u32[]', space=smem, size = 0x4, offset = 0x4, fixed_abs, tag = 'smem constant byte address 0x4 - core index']
  #allocation1 [shape = 'u32[144,128]{1,0:T(1,128)}', space=vmem, size = 0x12000, scoped, tag = 'internal scratch']
  %s0 = inlined_call_operand.hbm [shape: f32[8,2560], index: 0, kind: input, shape index: {}]
  %s1 = inlined_call_operand.hbm [shape: s8[2560,768], index: 1, kind: input, shape index: {}]
  %s2 = inlined_call_operand.hbm [shape: f32[1,768], index: 2, kind: input, shape index: {}]
  %s3 = inlined_call_operand.hbm [shape: f32[1,768], index: 3, kind: input, shape index: {}]
  %s4 = inlined_call_operand.hbm [shape: f32[8,768], index: 4, kind: output, shape index: {}]
  %s5 = sld [smem:[#allocation0]]
  $region46: #{tpu_custom_call.1} parent=0
    _
  %s7 = ssub.s32 1, %s5
  %s8 = scalar_select 0, %s7, %s5
  $region1: #{tpu_custom_call.1} parent=0
    #allocation2 [shape = 'u8[81920]{0}', space=vmem, size = 0x14000, scoped, tag = 'input window, operand 0, single buffered']
    #allocation3 [shape = 's32[1]{0}', space=sflag, size = 0x4, scoped, tag = 'scoped memory for tpu_custom_call.1']
    #allocation4 [shape = 's32[1]{0}', space=sflag, size = 0x4, scoped, tag = 'scoped memory for tpu_custom_call.1']
    #allocation5 [shape = 'u8[1966080]{0}', space=vmem, size = 0x1e0000, scoped, tag = 'input window, operand 1, single buffered']
    #allocation6 [shape = 's32[1]{0}', space=sflag, size = 0x4, scoped, tag = 'scoped memory for tpu_custom_call.1']
    #allocation7 [shape = 'u8[3072]{0}', space=vmem, size = 0xc00, scoped, tag = 'input window, operand 2, single buffered']
    #allocation8 [shape = 'u8[3072]{0}', space=vmem, size = 0xc00, scoped, tag = 'input window, operand 3, single buffered']
    #allocation9 [shape = 's32[1]{0}', space=sflag, size = 0x4, scoped, tag = 'scoped memory for tpu_custom_call.1']
    #allocation10 [shape = 'u8[24576]{0}', space=vmem, size = 0x6000, scoped, tag = 'output window, operand 0, single buffered']
    %9 = vsyncpa [#allocation3], 0
    %10 = vsyncpa [#allocation6], 0
    %11 = vsyncpa [#allocation9], 0
    %12 = vsyncpa [#allocation4], 0
    // Predicated region
    $region2: #{tpu_custom_call.1} parent=1 // pred_check
      _
    $region3: #{tpu_custom_call.1} parent=1 // pred_check_branch
      %14 = sbr.rel (0) target = $region5
    $region4: #{tpu_custom_call.1} parent=1 // pred_region
      %s16 = ssub.s32 2560, 2560
      %17 = vsyncadd [#allocation3], %s16
      %s19 = sshll.u32 [#allocation2], 4
      %s20 = int_to_ptr.vmem [resolvable:$true] %s19
      %22 = dma.hbm_to_vmem [thread:$0]  %s0, 2560, %s20, [#allocation3]
    $region5: #{tpu_custom_call.1} parent=1 // pred_fallthru
      _
    // Predicated region
    $region6: #{tpu_custom_call.1} parent=1 // pred_check
      _
    $region7: #{tpu_custom_call.1} parent=1 // pred_check_branch
      %24 = sbr.rel (0) target = $region9
    $region8: #{tpu_custom_call.1} parent=1 // pred_region
      %s26 = ssub.s32 61440, 61440
      %27 = vsyncadd [#allocation6], %s26
      %s28 = sshll.u32 [#allocation5], 4
      %s29 = int_to_ptr.vmem [resolvable:$true] %s28
      %34 = dma.hbm_to_vmem [thread:$0]  %s1, 61440, %s29, [#allocation6], 768, 768, 48
    $region9: #{tpu_custom_call.1} parent=1 // pred_fallthru
      _
    // Predicated region
    $region10: #{tpu_custom_call.1} parent=1 // pred_check
      _
    $region11: #{tpu_custom_call.1} parent=1 // pred_check_branch
      %36 = sbr.rel (0) target = $region13
    $region12: #{tpu_custom_call.1} parent=1 // pred_region
      %s38 = ssub.s32 96, 96
      %39 = vsyncadd [#allocation6], %s38
      %s41 = sshll.u32 [#allocation7], 4
      %s42 = int_to_ptr.vmem [resolvable:$true] %s41
      %44 = dma.hbm_to_vmem [thread:$0]  %s2, 96, %s42, [#allocation6]
    $region13: #{tpu_custom_call.1} parent=1 // pred_fallthru
      _
    // Predicated region
    $region14: #{tpu_custom_call.1} parent=1 // pred_check
      _
    $region15: #{tpu_custom_call.1} parent=1 // pred_check_branch
      %46 = sbr.rel (0) target = $region17
    $region16: #{tpu_custom_call.1} parent=1 // pred_region
      %s48 = ssub.s32 96, 96
      %49 = vsyncadd [#allocation9], %s48
      %s51 = sshll.u32 [#allocation8], 4
      %s52 = int_to_ptr.vmem [resolvable:$true] %s51
      %54 = dma.hbm_to_vmem [thread:$0]  %s3, 96, %s52, [#allocation9]
    $region17: #{tpu_custom_call.1} parent=1 // pred_fallthru
      _
    // Predicated region
    $region18: #{tpu_custom_call.1} parent=1 // pred_check
      _
    $region19: #{tpu_custom_call.1} parent=1 // pred_check_branch
      %56 = sbr.rel (0) target = $region21
    $region20: #{tpu_custom_call.1} parent=1 // pred_region
      %57 = dma.done [#allocation3], 2560
    $region21: #{tpu_custom_call.1} parent=1 // pred_fallthru
      _
    // Predicated region
    $region22: #{tpu_custom_call.1} parent=1 // pred_check
      _
    $region23: #{tpu_custom_call.1} parent=1 // pred_check_branch
      %59 = sbr.rel (0) target = $region25
    $region24: #{tpu_custom_call.1} parent=1 // pred_region
      %60 = dma.done [#allocation6], 61440
    $region25: #{tpu_custom_call.1} parent=1 // pred_fallthru
      _
    // Predicated region
    $region26: #{tpu_custom_call.1} parent=1 // pred_check
      _
    $region27: #{tpu_custom_call.1} parent=1 // pred_check_branch
      %62 = sbr.rel (0) target = $region29
    $region28: #{tpu_custom_call.1} parent=1 // pred_region
      %63 = dma.done [#allocation6], 96
    $region29: #{tpu_custom_call.1} parent=1 // pred_fallthru
      _
    // Predicated region
    $region30: #{tpu_custom_call.1} parent=1 // pred_check
      _
    $region31: #{tpu_custom_call.1} parent=1 // pred_check_branch
      %65 = sbr.rel (0) target = $region33
    $region32: #{tpu_custom_call.1} parent=1 // pred_region
      %66 = dma.done [#allocation9], 96
    $region33: #{tpu_custom_call.1} parent=1 // pred_fallthru
      _
    %p67 = scmp.eq.s32.totalorder 0, 0
    // Predicated region
    $region34: #{tpu_custom_call.1} parent=1 // pred_check
      %p68 = pneg %p67
    $region35: #{tpu_custom_call.1} parent=1 // pred_check_branch
      %70 = sbr.rel (%p68) target = $region37
    $region36: #{tpu_custom_call.1} parent=1 // pred_region
      %v71 = vld [vmem:[#allocation8] sm:$0x3f]
      %v73 = vlaneseq
      %v74 = vshrl.u32 %v73, 7
      %v75 = vsub.s32 0, %v74
      %v76 = vrot.slane %v71, %v75
      %v77 = vlaneseq
      %v78 = vshrl.u32 %v77, 7
      %v79 = vsub.s32 1, %v78
      %v80 = vrot.slane %v71, %v79
      %v81 = vlaneseq
      %v82 = vshrl.u32 %v81, 7
      %v83 = vsub.s32 2, %v82
      %v84 = vrot.slane %v71, %v83
      %v85 = vlaneseq
      %v86 = vshrl.u32 %v85, 7
      %v87 = vsub.s32 3, %v86
      %v88 = vrot.slane %v71, %v87
      %v89 = vlaneseq
      %v90 = vshrl.u32 %v89, 7
      %v91 = vsub.s32 4, %v90
      %v92 = vrot.slane %v71, %v91
      %v93 = vlaneseq
      %v94 = vshrl.u32 %v93, 7
      %v95 = vsub.s32 5, %v94
      %v96 = vrot.slane %v71, %v95
      %103 = vst [vmem:[#allocation10] sm:$0xff] %v76
      %104 = vst [vmem:[#allocation10 + $0x8] sm:$0xff] %v80
      %105 = vst [vmem:[#allocation10 + $0x10] sm:$0xff] %v84
      %106 = vst [vmem:[#allocation10 + $0x18] sm:$0xff] %v88
      %107 = vst [vmem:[#allocation10 + $0x20] sm:$0xff] %v92
      %108 = vst [vmem:[#allocation10 + $0x28] sm:$0xff] %v96
    $region37: #{tpu_custom_call.1} parent=1 // pred_fallthru
      _
    %v109 = vld [vmem:[#allocation2] sm:$0xff]
    %v110 = vld [vmem:[#allocation2 + $0x8] sm:$0xff]
    %v111 = vld [vmem:[#allocation2 + $0x10] sm:$0xff]
    %v112 = vld [vmem:[#allocation2 + $0x18] sm:$0xff]
    %v113 = vld [vmem:[#allocation2 + $0x20] sm:$0xff]
    %v114 = vld [vmem:[#allocation2 + $0x28] sm:$0xff]
    %v115 = vld [vmem:[#allocation2 + $0x30] sm:$0xff]
    %v116 = vld [vmem:[#allocation2 + $0x38] sm:$0xff]
    %v117 = vld [vmem:[#allocation2 + $0x40] sm:$0xff]
    %v118 = vld [vmem:[#allocation2 + $0x48] sm:$0xff]
    %v119 = vld [vmem:[#allocation2 + $0x50] sm:$0xff]
    %v120 = vld [vmem:[#allocation2 + $0x58] sm:$0xff]
    %v121 = vld [vmem:[#allocation2 + $0x60] sm:$0xff]
    %v122 = vld [vmem:[#allocation2 + $0x68] sm:$0xff]
    %v123 = vld [vmem:[#allocation2 + $0x70] sm:$0xff]
    %v124 = vld [vmem:[#allocation2 + $0x78] sm:$0xff]
    %v125 = vld [vmem:[#allocation2 + $0x80] sm:$0xff]
    %v126 = vld [vmem:[#allocation2 + $0x88] sm:$0xff]
    %v127 = vld [vmem:[#allocation2 + $0x90] sm:$0xff]
    %v128 = vld [vmem:[#allocation2 + $0x98] sm:$0xff]
    %v129 = vpack.c.bf16 %v109, %v109
    %v130 = vpack.c.bf16 %v110, %v110
    %v131 = vpack.c.bf16 %v111, %v111
    %v132 = vpack.c.bf16 %v112, %v112
    %v133 = vpack.c.bf16 %v113, %v113
    %v134 = vpack.c.bf16 %v114, %v114
    %v135 = vpack.c.bf16 %v115, %v115
    %v136 = vpack.c.bf16 %v116, %v116
    %v137 = vpack.c.bf16 %v117, %v117
    %v138 = vpack.c.bf16 %v118, %v118
    %v139 = vpack.c.bf16 %v119, %v119
    %v140 = vpack.c.bf16 %v120, %v120
    %v141 = vpack.c.bf16 %v121, %v121
    %v142 = vpack.c.bf16 %v122, %v122
    %v143 = vpack.c.bf16 %v123, %v123
    %v144 = vpack.c.bf16 %v124, %v124
    %v145 = vpack.c.bf16 %v125, %v125
    %v146 = vpack.c.bf16 %v126, %v126
    %v147 = vpack.c.bf16 %v127, %v127
    %v148 = vpack.c.bf16 %v128, %v128
    %v149 = vld [vmem:[#allocation5] sm:$0xff]
    %v150 = vld [vmem:[#allocation5 + $0x8] sm:$0xff]
    %v151 = vld [vmem:[#allocation5 + $0x10] sm:$0xff]
    %v152 = vld [vmem:[#allocation5 + $0x18] sm:$0xff]
    %v153 = vld [vmem:[#allocation5 + $0x20] sm:$0xff]
    %v154 = vld [vmem:[#allocation5 + $0x28] sm:$0xff]
    %v155 = vld [vmem:[#allocation5 + $0x30] sm:$0xff]
    %v156 = vld [vmem:[#allocation5 + $0x38] sm:$0xff]
    %v157 = vld [vmem:[#allocation5 + $0x40] sm:$0xff]
    %v158 = vld [vmem:[#allocation5 + $0x48] sm:$0xff]
    %v159 = vld [vmem:[#allocation5 + $0x50] sm:$0xff]
    %v160 = vld [vmem:[#allocation5 + $0x58] sm:$0xff]
    %v161 = vld [vmem:[#allocation5 + $0x60] sm:$0xff]
    %v162 = vld [vmem:[#allocation5 + $0x68] sm:$0xff]
    %v163 = vld [vmem:[#allocation5 + $0x70] sm:$0xff]
    %v164 = vld [vmem:[#allocation5 + $0x78] sm:$0xff]
    %v165 = vld [vmem:[#allocation5 + $0x80] sm:$0xff]
    %v166 = vld [vmem:[#allocation5 + $0x88] sm:$0xff]
    %v167 = vld [vmem:[#allocation5 + $0x90] sm:$0xff]
    %v168 = vld [vmem:[#allocation5 + $0x98] sm:$0xff]
    %v169 = vld [vmem:[#allocation5 + $0xa0] sm:$0xff]
    %v170 = vld [vmem:[#allocation5 + $0xa8] sm:$0xff]
    %v171 = vld [vmem:[#allocation5 + $0xb0] sm:$0xff]
    %v172 = vld [vmem:[#allocation5 + $0xb8] sm:$0xff]
    %v173 = vld [vmem:[#allocation5 + $0xc0] sm:$0xff]
    %v174 = vld [vmem:[#allocation5 + $0xc8] sm:$0xff]
    %v175 = vld [vmem:[#allocation5 + $0xd0] sm:$0xff]
    %v176 = vld [vmem:[#allocation5 + $0xd8] sm:$0xff]
    %v177 = vld [vmem:[#allocation5 + $0xe0] sm:$0xff]
    %v178 = vld [vmem:[#allocation5 + $0xe8] sm:$0xff]
    %v179 = vld [vmem:[#allocation5 + $0xf0] sm:$0xff]
    %v180 = vld [vmem:[#allocation5 + $0xf8] sm:$0xff]
    %v181 = vld [vmem:[#allocation5 + $0x100] sm:$0xff]
    %v182 = vld [vmem:[#allocation5 + $0x108] sm:$0xff]
    %v183 = vld [vmem:[#allocation5 + $0x110] sm:$0xff]
    %v184 = vld [vmem:[#allocation5 + $0x118] sm:$0xff]
    %v185 = vld [vmem:[#allocation5 + $0x120] sm:$0xff]
    %v186 = vld [vmem:[#allocation5 + $0x128] sm:$0xff]
    %v187 = vld [vmem:[#allocation5 + $0x130] sm:$0xff]
    %v188 = vld [vmem:[#allocation5 + $0x138] sm:$0xff]
    %v189 = vld [vmem:[#allocation5 + $0x140] sm:$0xff]
    %v190 = vld [vmem:[#allocation5 + $0x148] sm:$0xff]
    %v191 = vld [vmem:[#allocation5 + $0x150] sm:$0xff]
    %v192 = vld [vmem:[#allocation5 + $0x158] sm:$0xff]
    %v193 = vld [vmem:[#allocation5 + $0x160] sm:$0xff]
    %v194 = vld [vmem:[#allocation5 + $0x168] sm:$0xff]
    %v195 = vld [vmem:[#allocation5 + $0x170] sm:$0xff]
    %v196 = vld [vmem:[#allocation5 + $0x178] sm:$0xff]
    %v197 = vld [vmem:[#allocation5 + $0x180] sm:$0xff]
    %v198 = vld [vmem:[#allocation5 + $0x188] sm:$0xff]
    %v199 = vld [vmem:[#allocation5 + $0x190] sm:$0xff]
    %v200 = vld [vmem:[#allocation5 + $0x198] sm:$0xff]
    %v201 = vld [vmem:[#allocation5 + $0x1a0] sm:$0xff]
    %v202 = vld [vmem:[#allocation5 + $0x1a8] sm:$0xff]
    %v203 = vld [vmem:[#allocation5 + $0x1b0] sm:$0xff]
    %v204 = vld [vmem:[#allocation5 + $0x1b8] sm:$0xff]
    %v205 = vld [vmem:[#allocation5 + $0x1c0] sm:$0xff]
    %v206 = vld [vmem:[#allocation5 + $0x1c8] sm:$0xff]
    %v207 = vld [vmem:[#allocation5 + $0x1d0] sm:$0xff]
    %v208 = vld [vmem:[#allocation5 + $0x1d8] sm:$0xff]
    %v209 = vld [vmem:[#allocation5 + $0x1e0] sm:$0xff]
    %v210 = vld [vmem:[#allocation5 + $0x1e8] sm:$0xff]
    %v211 = vld [vmem:[#allocation5 + $0x1f0] sm:$0xff]
    %v212 = vld [vmem:[#allocation5 + $0x1f8] sm:$0xff]
    %v213 = vld [vmem:[#allocation5 + $0x200] sm:$0xff]
    %v214 = vld [vmem:[#allocation5 + $0x208] sm:$0xff]
    %v215 = vld [vmem:[#allocation5 + $0x210] sm:$0xff]
    %v216 = vld [vmem:[#allocation5 + $0x218] sm:$0xff]
    %v217 = vld [vmem:[#allocation5 + $0x220] sm:$0xff]
    %v218 = vld [vmem:[#allocation5 + $0x228] sm:$0xff]
    %v219 = vld [vmem:[#allocation5 + $0x230] sm:$0xff]
    %v220 = vld [vmem:[#allocation5 + $0x238] sm:$0xff]
    %v221 = vld [vmem:[#allocation5 + $0x240] sm:$0xff]
    %v222 = vld [vmem:[#allocation5 + $0x248] sm:$0xff]
    %v223 = vld [vmem:[#allocation5 + $0x250] sm:$0xff]
    %v224 = vld [vmem:[#allocation5 + $0x258] sm:$0xff]
    %v225 = vld [vmem:[#allocation5 + $0x260] sm:$0xff]
    %v226 = vld [vmem:[#allocation5 + $0x268] sm:$0xff]
    %v227 = vld [vmem:[#allocation5 + $0x270] sm:$0xff]
    %v228 = vld [vmem:[#allocation5 + $0x278] sm:$0xff]
    %v229 = vld [vmem:[#allocation5 + $0x280] sm:$0xff]
    %v230 = vld [vmem:[#allocation5 + $0x288] sm:$0xff]
    %v231 = vld [vmem:[#allocation5 + $0x290] sm:$0xff]
    %v232 = vld [vmem:[#allocation5 + $0x298] sm:$0xff]
    %v233 = vld [vmem:[#allocation5 + $0x2a0] sm:$0xff]
    %v234 = vld [vmem:[#allocation5 + $0x2a8] sm:$0xff]
    %v235 = vld [vmem:[#allocation5 + $0x2b0] sm:$0xff]
    %v236 = vld [vmem:[#allocation5 + $0x2b8] sm:$0xff]
    %v237 = vld [vmem:[#allocation5 + $0x2c0] sm:$0xff]
    %v238 = vld [vmem:[#allocation5 + $0x2c8] sm:$0xff]
    %v239 = vld [vmem:[#allocation5 + $0x2d0] sm:$0xff]
    %v240 = vld [vmem:[#allocation5 + $0x2d8] sm:$0xff]
    %v241 = vld [vmem:[#allocation5 + $0x2e0] sm:$0xff]
    %v242 = vld [vmem:[#allocation5 + $0x2e8] sm:$0xff]
    %v243 = vld [vmem:[#allocation5 + $0x2f0] sm:$0xff]
    %v244 = vld [vmem:[#allocation5 + $0x2f8] sm:$0xff]
    %v245 = vld [vmem:[#allocation5 + $0x300] sm:$0xff]
    %v246 = vld [vmem:[#allocation5 + $0x308] sm:$0xff]
    %v247 = vld [vmem:[#allocation5 + $0x310] sm:$0xff]
    %v248 = vld [vmem:[#allocation5 + $0x318] sm:$0xff]
    %v249 = vld [vmem:[#allocation5 + $0x320] sm:$0xff]
    %v250 = vld [vmem:[#allocation5 + $0x328] sm:$0xff]
    %v251 = vld [vmem:[#allocation5 + $0x330] sm:$0xff]
    %v252 = vld [vmem:[#allocation5 + $0x338] sm:$0xff]
    %v253 = vld [vmem:[#allocation5 + $0x340] sm:$0xff]
    %v254 = vld [vmem:[#allocation5 + $0x348] sm:$0xff]
    %v255 = vld [vmem:[#allocation5 + $0x350] sm:$0xff]
    %v256 = vld [vmem:[#allocation5 + $0x358] sm:$0xff]
    %v257 = vld [vmem:[#allocation5 + $0x360] sm:$0xff]
    %v258 = vld [vmem:[#allocation5 + $0x368] sm:$0xff]
    %v259 = vld [vmem:[#allocation5 + $0x370] sm:$0xff]
    %v260 = vld [vmem:[#allocation5 + $0x378] sm:$0xff]
    %v261 = vld [vmem:[#allocation5 + $0x380] sm:$0xff]
    %v262 = vld [vmem:[#allocation5 + $0x388] sm:$0xff]
    %v263 = vld [vmem:[#allocation5 + $0x390] sm:$0xff]
    %v264 = vld [vmem:[#allocation5 + $0x398] sm:$0xff]
    %v265 = vld [vmem:[#allocation5 + $0x3a0] sm:$0xff]
    %v266 = vld [vmem:[#allocation5 + $0x3a8] sm:$0xff]
    %v267 = vld [vmem:[#allocation5 + $0x3b0] sm:$0xff]
    %v268 = vld [vmem:[#allocation5 + $0x3b8] sm:$0xff]
    %v269 = vld [vmem:[#allocation5 + $0x3c0] sm:$0xff]
    %v270 = vld [vmem:[#allocation5 + $0x3c8] sm:$0xff]
    %v271 = vld [vmem:[#allocation5 + $0x3d0] sm:$0xff]
    %v272 = vld [vmem:[#allocation5 + $0x3d8] sm:$0xff]
    %v273 = vld [vmem:[#allocation5 + $0x3e0] sm:$0xff]
    %v274 = vld [vmem:[#allocation5 + $0x3e8] sm:$0xff]
    %v275 = vld [vmem:[#allocation5 + $0x3f0] sm:$0xff]
    %v276 = vld [vmem:[#allocation5 + $0x3f8] sm:$0xff]
    %v277 = vld [vmem:[#allocation5 + $0x400] sm:$0xff]
    %v278 = vld [vmem:[#allocation5 + $0x408] sm:$0xff]
    %v279 = vld [vmem:[#allocation5 + $0x410] sm:$0xff]
    %v280 = vld [vmem:[#allocation5 + $0x418] sm:$0xff]
    %v281 = vld [vmem:[#allocation5 + $0x420] sm:$0xff]
    %v282 = vld [vmem:[#allocation5 + $0x428] sm:$0xff]
    %v283 = vld [vmem:[#allocation5 + $0x430] sm:$0xff]
    %v284 = vld [vmem:[#allocation5 + $0x438] sm:$0xff]
    %v285 = vld [vmem:[#allocation5 + $0x440] sm:$0xff]
    %v286 = vld [vmem:[#allocation5 + $0x448] sm:$0xff]
    %v287 = vld [vmem:[#allocation5 + $0x450] sm:$0xff]
    %v288 = vld [vmem:[#allocation5 + $0x458] sm:$0xff]
    %v289 = vld [vmem:[#allocation5 + $0x460] sm:$0xff]
    %v290 = vld [vmem:[#allocation5 + $0x468] sm:$0xff]
    %v291 = vld [vmem:[#allocation5 + $0x470] sm:$0xff]
    %v292 = vld [vmem:[#allocation5 + $0x478] sm:$0xff]
    %v293 = vld [vmem:[#allocation5 + $0x480] sm:$0xff]
    %v294 = vld [vmem:[#allocation5 + $0x488] sm:$0xff]
    %v295 = vld [vmem:[#allocation5 + $0x490] sm:$0xff]
    %v296 = vld [vmem:[#allocation5 + $0x498] sm:$0xff]
    %v297 = vld [vmem:[#allocation5 + $0x4a0] sm:$0xff]
    %v298 = vld [vmem:[#allocation5 + $0x4a8] sm:$0xff]
    %v299 = vld [vmem:[#allocation5 + $0x4b0] sm:$0xff]
    %v300 = vld [vmem:[#allocation5 + $0x4b8] sm:$0xff]
    %v301 = vld [vmem:[#allocation5 + $0x4c0] sm:$0xff]
    %v302 = vld [vmem:[#allocation5 + $0x4c8] sm:$0xff]
    %v303 = vld [vmem:[#allocation5 + $0x4d0] sm:$0xff]
    %v304 = vld [vmem:[#allocation5 + $0x4d8] sm:$0xff]
    %v305 = vld [vmem:[#allocation5 + $0x4e0] sm:$0xff]
    %v306 = vld [vmem:[#allocation5 + $0x4e8] sm:$0xff]
    %v307 = vld [vmem:[#allocation5 + $0x4f0] sm:$0xff]
    %v308 = vld [vmem:[#allocation5 + $0x4f8] sm:$0xff]
    %v309 = vld [vmem:[#allocation5 + $0x500] sm:$0xff]
    %v310 = vld [vmem:[#allocation5 + $0x508] sm:$0xff]
    %v311 = vld [vmem:[#allocation5 + $0x510] sm:$0xff]
    %v312 = vld [vmem:[#allocation5 + $0x518] sm:$0xff]
    %v313 = vld [vmem:[#allocation5 + $0x520] sm:$0xff]
    %v314 = vld [vmem:[#allocation5 + $0x528] sm:$0xff]
    %v315 = vld [vmem:[#allocation5 + $0x530] sm:$0xff]
    %v316 = vld [vmem:[#allocation5 + $0x538] sm:$0xff]
    %v317 = vld [vmem:[#allocation5 + $0x540] sm:$0xff]
    %v318 = vld [vmem:[#allocation5 + $0x548] sm:$0xff]
    %v319 = vld [vmem:[#allocation5 + $0x550] sm:$0xff]
    %v320 = vld [vmem:[#allocation5 + $0x558] sm:$0xff]
    %v321 = vld [vmem:[#allocation5 + $0x560] sm:$0xff]
    %v322 = vld [vmem:[#allocation5 + $0x568] sm:$0xff]
    %v323 = vld [vmem:[#allocation5 + $0x570] sm:$0xff]
    %v324 = vld [vmem:[#allocation5 + $0x578] sm:$0xff]
    %v325 = vld [vmem:[#allocation5 + $0x580] sm:$0xff]
    %v326 = vld [vmem:[#allocation5 + $0x588] sm:$0xff]
    %v327 = vld [vmem:[#allocation5 + $0x590] sm:$0xff]
    %v328 = vld [vmem:[#allocation5 + $0x598] sm:$0xff]
    %v329 = vld [vmem:[#allocation5 + $0x5a0] sm:$0xff]
    %v330 = vld [vmem:[#allocation5 + $0x5a8] sm:$0xff]
    %v331 = vld [vmem:[#allocation5 + $0x5b0] sm:$0xff]
    %v332 = vld [vmem:[#allocation5 + $0x5b8] sm:$0xff]
    %v333 = vld [vmem:[#allocation5 + $0x5c0] sm:$0xff]
    %v334 = vld [vmem:[#allocation5 + $0x5c8] sm:$0xff]
    %v335 = vld [vmem:[#allocation5 + $0x5d0] sm:$0xff]
    %v336 = vld [vmem:[#allocation5 + $0x5d8] sm:$0xff]
    %v337 = vld [vmem:[#allocation5 + $0x5e0] sm:$0xff]
    %v338 = vld [vmem:[#allocation5 + $0x5e8] sm:$0xff]
    %v339 = vld [vmem:[#allocation5 + $0x5f0] sm:$0xff]
    %v340 = vld [vmem:[#allocation5 + $0x5f8] sm:$0xff]
    %v341 = vld [vmem:[#allocation5 + $0x600] sm:$0xff]
    %v342 = vld [vmem:[#allocation5 + $0x608] sm:$0xff]
    %v343 = vld [vmem:[#allocation5 + $0x610] sm:$0xff]
    %v344 = vld [vmem:[#allocation5 + $0x618] sm:$0xff]
    %v345 = vld [vmem:[#allocation5 + $0x620] sm:$0xff]
    %v346 = vld [vmem:[#allocation5 + $0x628] sm:$0xff]
    %v347 = vld [vmem:[#allocation5 + $0x630] sm:$0xff]
    %v348 = vld [vmem:[#allocation5 + $0x638] sm:$0xff]
    %v349 = vld [vmem:[#allocation5 + $0x640] sm:$0xff]
    %v350 = vld [vmem:[#allocation5 + $0x648] sm:$0xff]
    %v351 = vld [vmem:[#allocation5 + $0x650] sm:$0xff]
    %v352 = vld [vmem:[#allocation5 + $0x658] sm:$0xff]
    %v353 = vld [vmem:[#allocation5 + $0x660] sm:$0xff]
    %v354 = vld [vmem:[#allocation5 + $0x668] sm:$0xff]
    %v355 = vld [vmem:[#allocation5 + $0x670] sm:$0xff]
    %v356 = vld [vmem:[#allocation5 + $0x678] sm:$0xff]
    %v357 = vld [vmem:[#allocation5 + $0x680] sm:$0xff]
    %v358 = vld [vmem:[#allocation5 + $0x688] sm:$0xff]
    %v359 = vld [vmem:[#allocation5 + $0x690] sm:$0xff]
    %v360 = vld [vmem:[#allocation5 + $0x698] sm:$0xff]
    %v361 = vld [vmem:[#allocation5 + $0x6a0] sm:$0xff]
    %v362 = vld [vmem:[#allocation5 + $0x6a8] sm:$0xff]
    %v363 = vld [vmem:[#allocation5 + $0x6b0] sm:$0xff]
    %v364 = vld [vmem:[#allocation5 + $0x6b8] sm:$0xff]
    %v365 = vld [vmem:[#allocation5 + $0x6c0] sm:$0xff]
    %v366 = vld [vmem:[#allocation5 + $0x6c8] sm:$0xff]
    %v367 = vld [vmem:[#allocation5 + $0x6d0] sm:$0xff]
    %v368 = vld [vmem:[#allocation5 + $0x6d8] sm:$0xff]
    %v369 = vld [vmem:[#allocation5 + $0x6e0] sm:$0xff]
    %v370 = vld [vmem:[#allocation5 + $0x6e8] sm:$0xff]
    %v371 = vld [vmem:[#allocation5 + $0x6f0] sm:$0xff]
    %v372 = vld [vmem:[#allocation5 + $0x6f8] sm:$0xff]
    %v373 = vld [vmem:[#allocation5 + $0x700] sm:$0xff]
    %v374 = vld [vmem:[#allocation5 + $0x708] sm:$0xff]
    %v375 = vld [vmem:[#allocation5 + $0x710] sm:$0xff]
    %v376 = vld [vmem:[#allocation5 + $0x718] sm:$0xff]
    %v377 = vld [vmem:[#allocation5 + $0x720] sm:$0xff]
    %v378 = vld [vmem:[#allocation5 + $0x728] sm:$0xff]
    %v379 = vld [vmem:[#allocation5 + $0x730] sm:$0xff]
    %v380 = vld [vmem:[#allocation5 + $0x738] sm:$0xff]
    %v381 = vld [vmem:[#allocation5 + $0x740] sm:$0xff]
    %v382 = vld [vmem:[#allocation5 + $0x748] sm:$0xff]
    %v383 = vld [vmem:[#allocation5 + $0x750] sm:$0xff]
    %v384 = vld [vmem:[#allocation5 + $0x758] sm:$0xff]
    %v385 = vld [vmem:[#allocation5 + $0x760] sm:$0xff]
    %v386 = vld [vmem:[#allocation5 + $0x768] sm:$0xff]
    %v387 = vld [vmem:[#allocation5 + $0x770] sm:$0xff]
    %v388 = vld [vmem:[#allocation5 + $0x778] sm:$0xff]
    %v389 = vld [vmem:[#allocation5 + $0x780] sm:$0xff]
    %v390 = vld [vmem:[#allocation5 + $0x788] sm:$0xff]
    %v391 = vld [vmem:[#allocation5 + $0x790] sm:$0xff]
    %v392 = vld [vmem:[#allocation5 + $0x798] sm:$0xff]
    %v393 = vld [vmem:[#allocation5 + $0x7a0] sm:$0xff]
    %v394 = vld [vmem:[#allocation5 + $0x7a8] sm:$0xff]
    %v395 = vld [vmem:[#allocation5 + $0x7b0] sm:$0xff]
    %v396 = vld [vmem:[#allocation5 + $0x7b8] sm:$0xff]
    %v397 = vld [vmem:[#allocation5 + $0x7c0] sm:$0xff]
    %v398 = vld [vmem:[#allocation5 + $0x7c8] sm:$0xff]
    %v399 = vld [vmem:[#allocation5 + $0x7d0] sm:$0xff]
    %v400 = vld [vmem:[#allocation5 + $0x7d8] sm:$0xff]
    %v401 = vld [vmem:[#allocation5 + $0x7e0] sm:$0xff]
    %v402 = vld [vmem:[#allocation5 + $0x7e8] sm:$0xff]
    %v403 = vld [vmem:[#allocation5 + $0x7f0] sm:$0xff]
    %v404 = vld [vmem:[#allocation5 + $0x7f8] sm:$0xff]
    %v405 = vld [vmem:[#allocation5 + $0x800] sm:$0xff]
    %v406 = vld [vmem:[#allocation5 + $0x808] sm:$0xff]
    %v407 = vld [vmem:[#allocation5 + $0x810] sm:$0xff]
    %v408 = vld [vmem:[#allocation5 + $0x818] sm:$0xff]
    %v409 = vld [vmem:[#allocation5 + $0x820] sm:$0xff]
    %v410 = vld [vmem:[#allocation5 + $0x828] sm:$0xff]
    %v411 = vld [vmem:[#allocation5 + $0x830] sm:$0xff]
    %v412 = vld [vmem:[#allocation5 + $0x838] sm:$0xff]
    %v413 = vld [vmem:[#allocation5 + $0x840] sm:$0xff]
    %v414 = vld [vmem:[#allocation5 + $0x848] sm:$0xff]
    %v415 = vld [vmem:[#allocation5 + $0x850] sm:$0xff]
    %v416 = vld [vmem:[#allocation5 + $0x858] sm:$0xff]
    %v417 = vld [vmem:[#allocation5 + $0x860] sm:$0xff]
    %v418 = vld [vmem:[#allocation5 + $0x868] sm:$0xff]
    %v419 = vld [vmem:[#allocation5 + $0x870] sm:$0xff]
    %v420 = vld [vmem:[#allocation5 + $0x878] sm:$0xff]
    %v421 = vld [vmem:[#allocation5 + $0x880] sm:$0xff]
    %v422 = vld [vmem:[#allocation5 + $0x888] sm:$0xff]
    %v423 = vld [vmem:[#allocation5 + $0x890] sm:$0xff]
    %v424 = vld [vmem:[#allocation5 + $0x898] sm:$0xff]
    %v425 = vld [vmem:[#allocation5 + $0x8a0] sm:$0xff]
    %v426 = vld [vmem:[#allocation5 + $0x8a8] sm:$0xff]
    %v427 = vld [vmem:[#allocation5 + $0x8b0] sm:$0xff]
    %v428 = vld [vmem:[#allocation5 + $0x8b8] sm:$0xff]
    %v429 = vld [vmem:[#allocation5 + $0x8c0] sm:$0xff]
    %v430 = vld [vmem:[#allocation5 + $0x8c8] sm:$0xff]
    %v431 = vld [vmem:[#allocation5 + $0x8d0] sm:$0xff]
    %v432 = vld [vmem:[#allocation5 + $0x8d8] sm:$0xff]
    %v433 = vld [vmem:[#allocation5 + $0x8e0] sm:$0xff]
    %v434 = vld [vmem:[#allocation5 + $0x8e8] sm:$0xff]
    %v435 = vld [vmem:[#allocation5 + $0x8f0] sm:$0xff]
    %v436 = vld [vmem:[#allocation5 + $0x8f8] sm:$0xff]
    %v437 = vld [vmem:[#allocation5 + $0x900] sm:$0xff]
    %v438 = vld [vmem:[#allocation5 + $0x908] sm:$0xff]
    %v439 = vld [vmem:[#allocation5 + $0x910] sm:$0xff]
    %v440 = vld [vmem:[#allocation5 + $0x918] sm:$0xff]
    %v441 = vld [vmem:[#allocation5 + $0x920] sm:$0xff]
    %v442 = vld [vmem:[#allocation5 + $0x928] sm:$0xff]
    %v443 = vld [vmem:[#allocation5 + $0x930] sm:$0xff]
    %v444 = vld [vmem:[#allocation5 + $0x938] sm:$0xff]
    %v445 = vld [vmem:[#allocation5 + $0x940] sm:$0xff]
    %v446 = vld [vmem:[#allocation5 + $0x948] sm:$0xff]
    %v447 = vld [vmem:[#allocation5 + $0x950] sm:$0xff]
    %v448 = vld [vmem:[#allocation5 + $0x958] sm:$0xff]
    %v449 = vld [vmem:[#allocation5 + $0x960] sm:$0xff]
    %v450 = vld [vmem:[#allocation5 + $0x968] sm:$0xff]
    %v451 = vld [vmem:[#allocation5 + $0x970] sm:$0xff]
    %v452 = vld [vmem:[#allocation5 + $0x978] sm:$0xff]
    %v453 = vld [vmem:[#allocation5 + $0x980] sm:$0xff]
    %v454 = vld [vmem:[#allocation5 + $0x988] sm:$0xff]
    %v455 = vld [vmem:[#allocation5 + $0x990] sm:$0xff]
    %v456 = vld [vmem:[#allocation5 + $0x998] sm:$0xff]
    %v457 = vld [vmem:[#allocation5 + $0x9a0] sm:$0xff]
    %v458 = vld [vmem:[#allocation5 + $0x9a8] sm:$0xff]
    %v459 = vld [vmem:[#allocation5 + $0x9b0] sm:$0xff]
    %v460 = vld [vmem:[#allocation5 + $0x9b8] sm:$0xff]
    %v461 = vld [vmem:[#allocation5 + $0x9c0] sm:$0xff]
    %v462 = vld [vmem:[#allocation5 + $0x9c8] sm:$0xff]
    %v463 = vld [vmem:[#allocation5 + $0x9d0] sm:$0xff]
    %v464 = vld [vmem:[#allocation5 + $0x9d8] sm:$0xff]
    %v465 = vld [vmem:[#allocation5 + $0x9e0] sm:$0xff]
    %v466 = vld [vmem:[#allocation5 + $0x9e8] sm:$0xff]
    %v467 = vld [vmem:[#allocation5 + $0x9f0] sm:$0xff]
    %v468 = vld [vmem:[#allocation5 + $0x9f8] sm:$0xff]
    %v469 = vld [vmem:[#allocation5 + $0xa00] sm:$0xff]
    %v470 = vld [vmem:[#allocation5 + $0xa08] sm:$0xff]
    %v471 = vld [vmem:[#allocation5 + $0xa10] sm:$0xff]
    %v472 = vld [vmem:[#allocation5 + $0xa18] sm:$0xff]
    %v473 = vld [vmem:[#allocation5 + $0xa20] sm:$0xff]
    %v474 = vld [vmem:[#allocation5 + $0xa28] sm:$0xff]
    %v475 = vld [vmem:[#allocation5 + $0xa30] sm:$0xff]
    %v476 = vld [vmem:[#allocation5 + $0xa38] sm:$0xff]
    %v477 = vld [vmem:[#allocation5 + $0xa40] sm:$0xff]
    %v478 = vld [vmem:[#allocation5 + $0xa48] sm:$0xff]
    %v479 = vld [vmem:[#allocation5 + $0xa50] sm:$0xff]
    %v480 = vld [vmem:[#allocation5 + $0xa58] sm:$0xff]
    %v481 = vld [vmem:[#allocation5 + $0xa60] sm:$0xff]
    %v482 = vld [vmem:[#allocation5 + $0xa68] sm:$0xff]
    %v483 = vld [vmem:[#allocation5 + $0xa70] sm:$0xff]
    %v484 = vld [vmem:[#allocation5 + $0xa78] sm:$0xff]
    %v485 = vld [vmem:[#allocation5 + $0xa80] sm:$0xff]
    %v486 = vld [vmem:[#allocation5 + $0xa88] sm:$0xff]
    %v487 = vld [vmem:[#allocation5 + $0xa90] sm:$0xff]
    %v488 = vld [vmem:[#allocation5 + $0xa98] sm:$0xff]
    %v489 = vld [vmem:[#allocation5 + $0xaa0] sm:$0xff]
    %v490 = vld [vmem:[#allocation5 + $0xaa8] sm:$0xff]
    %v491 = vld [vmem:[#allocation5 + $0xab0] sm:$0xff]
    %v492 = vld [vmem:[#allocation5 + $0xab8] sm:$0xff]
    %v493 = vld [vmem:[#allocation5 + $0xac0] sm:$0xff]
    %v494 = vld [vmem:[#allocation5 + $0xac8] sm:$0xff]
    %v495 = vld [vmem:[#allocation5 + $0xad0] sm:$0xff]
    %v496 = vld [vmem:[#allocation5 + $0xad8] sm:$0xff]
    %v497 = vld [vmem:[#allocation5 + $0xae0] sm:$0xff]
    %v498 = vld [vmem:[#allocation5 + $0xae8] sm:$0xff]
    %v499 = vld [vmem:[#allocation5 + $0xaf0] sm:$0xff]
    %v500 = vld [vmem:[#allocation5 + $0xaf8] sm:$0xff]
    %v501 = vld [vmem:[#allocation5 + $0xb00] sm:$0xff]
    %v502 = vld [vmem:[#allocation5 + $0xb08] sm:$0xff]
    %v503 = vld [vmem:[#allocation5 + $0xb10] sm:$0xff]
    %v504 = vld [vmem:[#allocation5 + $0xb18] sm:$0xff]
    %v505 = vld [vmem:[#allocation5 + $0xb20] sm:$0xff]
    %v506 = vld [vmem:[#allocation5 + $0xb28] sm:$0xff]
    %v507 = vld [vmem:[#allocation5 + $0xb30] sm:$0xff]
    %v508 = vld [vmem:[#allocation5 + $0xb38] sm:$0xff]
    %v509 = vld [vmem:[#allocation5 + $0xb40] sm:$0xff]
    %v510 = vld [vmem:[#allocation5 + $0xb48] sm:$0xff]
    %v511 = vld [vmem:[#allocation5 + $0xb50] sm:$0xff]
    %v512 = vld [vmem:[#allocation5 + $0xb58] sm:$0xff]
    %v513 = vld [vmem:[#allocation5 + $0xb60] sm:$0xff]
    %v514 = vld [vmem:[#allocation5 + $0xb68] sm:$0xff]
    %v515 = vld [vmem:[#allocation5 + $0xb70] sm:$0xff]
    %v516 = vld [vmem:[#allocation5 + $0xb78] sm:$0xff]
    %v517 = vld [vmem:[#allocation5 + $0xb80] sm:$0xff]
    %v518 = vld [vmem:[#allocation5 + $0xb88] sm:$0xff]
    %v519 = vld [vmem:[#allocation5 + $0xb90] sm:$0xff]
    %v520 = vld [vmem:[#allocation5 + $0xb98] sm:$0xff]
    %v521 = vld [vmem:[#allocation5 + $0xba0] sm:$0xff]
    %v522 = vld [vmem:[#allocation5 + $0xba8] sm:$0xff]
    %v523 = vld [vmem:[#allocation5 + $0xbb0] sm:$0xff]
    %v524 = vld [vmem:[#allocation5 + $0xbb8] sm:$0xff]
    %v525 = vld [vmem:[#allocation5 + $0xbc0] sm:$0xff]
    %v526 = vld [vmem:[#allocation5 + $0xbc8] sm:$0xff]
    %v527 = vld [vmem:[#allocation5 + $0xbd0] sm:$0xff]
    %v528 = vld [vmem:[#allocation5 + $0xbd8] sm:$0xff]
    %v529 = vld [vmem:[#allocation5 + $0xbe0] sm:$0xff]
    %v530 = vld [vmem:[#allocation5 + $0xbe8] sm:$0xff]
    %v531 = vld [vmem:[#allocation5 + $0xbf0] sm:$0xff]
    %v532 = vld [vmem:[#allocation5 + $0xbf8] sm:$0xff]
    %v533 = vld [vmem:[#allocation5 + $0xc00] sm:$0xff]
    %v534 = vld [vmem:[#allocation5 + $0xc08] sm:$0xff]
    %v535 = vld [vmem:[#allocation5 + $0xc10] sm:$0xff]
    %v536 = vld [vmem:[#allocation5 + $0xc18] sm:$0xff]
    %v537 = vld [vmem:[#allocation5 + $0xc20] sm:$0xff]
    %v538 = vld [vmem:[#allocation5 + $0xc28] sm:$0xff]
    %v539 = vld [vmem:[#allocation5 + $0xc30] sm:$0xff]
    %v540 = vld [vmem:[#allocation5 + $0xc38] sm:$0xff]
    %v541 = vld [vmem:[#allocation5 + $0xc40] sm:$0xff]
    %v542 = vld [vmem:[#allocation5 + $0xc48] sm:$0xff]
    %v543 = vld [vmem:[#allocation5 + $0xc50] sm:$0xff]
    %v544 = vld [vmem:[#allocation5 + $0xc58] sm:$0xff]
    %v545 = vld [vmem:[#allocation5 + $0xc60] sm:$0xff]
    %v546 = vld [vmem:[#allocation5 + $0xc68] sm:$0xff]
    %v547 = vld [vmem:[#allocation5 + $0xc70] sm:$0xff]
    %v548 = vld [vmem:[#allocation5 + $0xc78] sm:$0xff]
    %v549 = vld [vmem:[#allocation5 + $0xc80] sm:$0xff]
    %v550 = vld [vmem:[#allocation5 + $0xc88] sm:$0xff]
    %v551 = vld [vmem:[#allocation5 + $0xc90] sm:$0xff]
    %v552 = vld [vmem:[#allocation5 + $0xc98] sm:$0xff]
    %v553 = vld [vmem:[#allocation5 + $0xca0] sm:$0xff]
    %v554 = vld [vmem:[#allocation5 + $0xca8] sm:$0xff]
    %v555 = vld [vmem:[#allocation5 + $0xcb0] sm:$0xff]
    %v556 = vld [vmem:[#allocation5 + $0xcb8] sm:$0xff]
    %v557 = vld [vmem:[#allocation5 + $0xcc0] sm:$0xff]
    %v558 = vld [vmem:[#allocation5 + $0xcc8] sm:$0xff]
    %v559 = vld [vmem:[#allocation5 + $0xcd0] sm:$0xff]
    %v560 = vld [vmem:[#allocation5 + $0xcd8] sm:$0xff]
    %v561 = vld [vmem:[#allocation5 + $0xce0] sm:$0xff]
    %v562 = vld [vmem:[#allocation5 + $0xce8] sm:$0xff]
    %v563 = vld [vmem:[#allocation5 + $0xcf0] sm:$0xff]
    %v564 = vld [vmem:[#allocation5 + $0xcf8] sm:$0xff]
    %v565 = vld [vmem:[#allocation5 + $0xd00] sm:$0xff]
    %v566 = vld [vmem:[#allocation5 + $0xd08] sm:$0xff]
    %v567 = vld [vmem:[#allocation5 + $0xd10] sm:$0xff]
    %v568 = vld [vmem:[#allocation5 + $0xd18] sm:$0xff]
    %v569 = vld [vmem:[#allocation5 + $0xd20] sm:$0xff]
    %v570 = vld [vmem:[#allocation5 + $0xd28] sm:$0xff]
    %v571 = vld [vmem:[#allocation5 + $0xd30] sm:$0xff]
    %v572 = vld [vmem:[#allocation5 + $0xd38] sm:$0xff]
    %v573 = vld [vmem:[#allocation5 + $0xd40] sm:$0xff]
    %v574 = vld [vmem:[#allocation5 + $0xd48] sm:$0xff]
    %v575 = vld [vmem:[#allocation5 + $0xd50] sm:$0xff]
    %v576 = vld [vmem:[#allocation5 + $0xd58] sm:$0xff]
    %v577 = vld [vmem:[#allocation5 + $0xd60] sm:$0xff]
    %v578 = vld [vmem:[#allocation5 + $0xd68] sm:$0xff]
    %v579 = vld [vmem:[#allocation5 + $0xd70] sm:$0xff]
    %v580 = vld [vmem:[#allocation5 + $0xd78] sm:$0xff]
    %v581 = vld [vmem:[#allocation5 + $0xd80] sm:$0xff]
    %v582 = vld [vmem:[#allocation5 + $0xd88] sm:$0xff]
    %v583 = vld [vmem:[#allocation5 + $0xd90] sm:$0xff]
    %v584 = vld [vmem:[#allocation5 + $0xd98] sm:$0xff]
    %v585 = vld [vmem:[#allocation5 + $0xda0] sm:$0xff]
    %v586 = vld [vmem:[#allocation5 + $0xda8] sm:$0xff]
    %v587 = vld [vmem:[#allocation5 + $0xdb0] sm:$0xff]
    %v588 = vld [vmem:[#allocation5 + $0xdb8] sm:$0xff]
    %v589 = vld [vmem:[#allocation5 + $0xdc0] sm:$0xff]
    %v590 = vld [vmem:[#allocation5 + $0xdc8] sm:$0xff]
    %v591 = vld [vmem:[#allocation5 + $0xdd0] sm:$0xff]
    %v592 = vld [vmem:[#allocation5 + $0xdd8] sm:$0xff]
    %v593 = vld [vmem:[#allocation5 + $0xde0] sm:$0xff]
    %v594 = vld [vmem:[#allocation5 + $0xde8] sm:$0xff]
    %v595 = vld [vmem:[#allocation5 + $0xdf0] sm:$0xff]
    %v596 = vld [vmem:[#allocation5 + $0xdf8] sm:$0xff]
    %v597 = vld [vmem:[#allocation5 + $0xe00] sm:$0xff]
    %v598 = vld [vmem:[#allocation5 + $0xe08] sm:$0xff]
    %v599 = vld [vmem:[#allocation5 + $0xe10] sm:$0xff]
    %v600 = vld [vmem:[#allocation5 + $0xe18] sm:$0xff]
    %v601 = vld [vmem:[#allocation5 + $0xe20] sm:$0xff]
    %v602 = vld [vmem:[#allocation5 + $0xe28] sm:$0xff]
    %v603 = vld [vmem:[#allocation5 + $0xe30] sm:$0xff]
    %v604 = vld [vmem:[#allocation5 + $0xe38] sm:$0xff]
    %v605 = vld [vmem:[#allocation5 + $0xe40] sm:$0xff]
    %v606 = vld [vmem:[#allocation5 + $0xe48] sm:$0xff]
    %v607 = vld [vmem:[#allocation5 + $0xe50] sm:$0xff]
    %v608 = vld [vmem:[#allocation5 + $0xe58] sm:$0xff]
    %v609 = vld [vmem:[#allocation5 + $0xe60] sm:$0xff]
    %v610 = vld [vmem:[#allocation5 + $0xe68] sm:$0xff]
    %v611 = vld [vmem:[#allocation5 + $0xe70] sm:$0xff]
    %v612 = vld [vmem:[#allocation5 + $0xe78] sm:$0xff]
    %v613 = vld [vmem:[#allocation5 + $0xe80] sm:$0xff]
    %v614 = vld [vmem:[#allocation5 + $0xe88] sm:$0xff]
    %v615 = vld [vmem:[#allocation5 + $0xe90] sm:$0xff]
    %v616 = vld [vmem:[#allocation5 + $0xe98] sm:$0xff]
    %v617 = vld [vmem:[#allocation5 + $0xea0] sm:$0xff]
    %v618 = vld [vmem:[#allocation5 + $0xea8] sm:$0xff]
    %v619 = vld [vmem:[#allocation5 + $0xeb0] sm:$0xff]
    %v620 = vld [vmem:[#allocation5 + $0xeb8] sm:$0xff]
    %v621 = vld [vmem:[#allocation5 + $0xec0] sm:$0xff]
    %v622 = vld [vmem:[#allocation5 + $0xec8] sm:$0xff]
    %v623 = vld [vmem:[#allocation5 + $0xed0] sm:$0xff]
    %v624 = vld [vmem:[#allocation5 + $0xed8] sm:$0xff]
    %v625 = vld [vmem:[#allocation5 + $0xee0] sm:$0xff]
    %v626 = vld [vmem:[#allocation5 + $0xee8] sm:$0xff]
    %v627 = vld [vmem:[#allocation5 + $0xef0] sm:$0xff]
    %v628 = vld [vmem:[#allocation5 + $0xef8] sm:$0xff]
    %v629 = vunpack.c.l.s8.bf16 %v149
    %v630 = vunpack.c.l.s8.bf16 %v150
    %v631 = vunpack.c.l.s8.bf16 %v151
    %v632 = vunpack.c.l.s8.bf16 %v152
    %v633 = vunpack.c.l.s8.bf16 %v153
    %v634 = vunpack.c.l.s8.bf16 %v154
    %v635 = vunpack.c.h.s8.bf16 %v149
    %v636 = vunpack.c.h.s8.bf16 %v150
    %v637 = vunpack.c.h.s8.bf16 %v151
    %v638 = vunpack.c.h.s8.bf16 %v152
    %v639 = vunpack.c.h.s8.bf16 %v153
    %v640 = vunpack.c.h.s8.bf16 %v154
    %v641 = vunpack.c.l.s8.bf16 %v155
    %v642 = vunpack.c.l.s8.bf16 %v156
    %v643 = vunpack.c.l.s8.bf16 %v157
    %v644 = vunpack.c.l.s8.bf16 %v158
    %v645 = vunpack.c.l.s8.bf16 %v159
    %v646 = vunpack.c.l.s8.bf16 %v160
    %v647 = vunpack.c.h.s8.bf16 %v155
    %v648 = vunpack.c.h.s8.bf16 %v156
    %v649 = vunpack.c.h.s8.bf16 %v157
    %v650 = vunpack.c.h.s8.bf16 %v158
    %v651 = vunpack.c.h.s8.bf16 %v159
    %v652 = vunpack.c.h.s8.bf16 %v160
    %v653 = vunpack.c.l.s8.bf16 %v161
    %v654 = vunpack.c.l.s8.bf16 %v162
    %v655 = vunpack.c.l.s8.bf16 %v163
    %v656 = vunpack.c.l.s8.bf16 %v164
    %v657 = vunpack.c.l.s8.bf16 %v165
    %v658 = vunpack.c.l.s8.bf16 %v166
    %v659 = vunpack.c.h.s8.bf16 %v161
    %v660 = vunpack.c.h.s8.bf16 %v162
    %v661 = vunpack.c.h.s8.bf16 %v163
    %v662 = vunpack.c.h.s8.bf16 %v164
    %v663 = vunpack.c.h.s8.bf16 %v165
    %v664 = vunpack.c.h.s8.bf16 %v166
    %v665 = vunpack.c.l.s8.bf16 %v167
    %v666 = vunpack.c.l.s8.bf16 %v168
    %v667 = vunpack.c.l.s8.bf16 %v169
    %v668 = vunpack.c.l.s8.bf16 %v170
    %v669 = vunpack.c.l.s8.bf16 %v171
    %v670 = vunpack.c.l.s8.bf16 %v172
    %v671 = vunpack.c.h.s8.bf16 %v167
    %v672 = vunpack.c.h.s8.bf16 %v168
    %v673 = vunpack.c.h.s8.bf16 %v169
    %v674 = vunpack.c.h.s8.bf16 %v170
    %v675 = vunpack.c.h.s8.bf16 %v171
    %v676 = vunpack.c.h.s8.bf16 %v172
    %v677 = vunpack.c.l.s8.bf16 %v173
    %v678 = vunpack.c.l.s8.bf16 %v174
    %v679 = vunpack.c.l.s8.bf16 %v175
    %v680 = vunpack.c.l.s8.bf16 %v176
    %v681 = vunpack.c.l.s8.bf16 %v177
    %v682 = vunpack.c.l.s8.bf16 %v178
    %v683 = vunpack.c.h.s8.bf16 %v173
    %v684 = vunpack.c.h.s8.bf16 %v174
    %v685 = vunpack.c.h.s8.bf16 %v175
    %v686 = vunpack.c.h.s8.bf16 %v176
    %v687 = vunpack.c.h.s8.bf16 %v177
    %v688 = vunpack.c.h.s8.bf16 %v178
    %v689 = vunpack.c.l.s8.bf16 %v179
    %v690 = vunpack.c.l.s8.bf16 %v180
    %v691 = vunpack.c.l.s8.bf16 %v181
    %v692 = vunpack.c.l.s8.bf16 %v182
    %v693 = vunpack.c.l.s8.bf16 %v183
    %v694 = vunpack.c.l.s8.bf16 %v184
    %v695 = vunpack.c.h.s8.bf16 %v179
    %v696 = vunpack.c.h.s8.bf16 %v180
    %v697 = vunpack.c.h.s8.bf16 %v181
    %v698 = vunpack.c.h.s8.bf16 %v182
    %v699 = vunpack.c.h.s8.bf16 %v183
    %v700 = vunpack.c.h.s8.bf16 %v184
    %v701 = vunpack.c.l.s8.bf16 %v185
    %v702 = vunpack.c.l.s8.bf16 %v186
    %v703 = vunpack.c.l.s8.bf16 %v187
    %v704 = vunpack.c.l.s8.bf16 %v188
    %v705 = vunpack.c.l.s8.bf16 %v189
    %v706 = vunpack.c.l.s8.bf16 %v190
    %v707 = vunpack.c.h.s8.bf16 %v185
    %v708 = vunpack.c.h.s8.bf16 %v186
    %v709 = vunpack.c.h.s8.bf16 %v187
    %v710 = vunpack.c.h.s8.bf16 %v188
    %v711 = vunpack.c.h.s8.bf16 %v189
    %v712 = vunpack.c.h.s8.bf16 %v190
    %v713 = vunpack.c.l.s8.bf16 %v191
    %v714 = vunpack.c.l.s8.bf16 %v192
    %v715 = vunpack.c.l.s8.bf16 %v193
    %v716 = vunpack.c.l.s8.bf16 %v194
    %v717 = vunpack.c.l.s8.bf16 %v195
    %v718 = vunpack.c.l.s8.bf16 %v196
    %v719 = vunpack.c.h.s8.bf16 %v191
    %v720 = vunpack.c.h.s8.bf16 %v192
    %v721 = vunpack.c.h.s8.bf16 %v193
    %v722 = vunpack.c.h.s8.bf16 %v194
    %v723 = vunpack.c.h.s8.bf16 %v195
    %v724 = vunpack.c.h.s8.bf16 %v196
    %v725 = vunpack.c.l.s8.bf16 %v197
    %v726 = vunpack.c.l.s8.bf16 %v198
    %v727 = vunpack.c.l.s8.bf16 %v199
    %v728 = vunpack.c.l.s8.bf16 %v200
    %v729 = vunpack.c.l.s8.bf16 %v201
    %v730 = vunpack.c.l.s8.bf16 %v202
    %v731 = vunpack.c.h.s8.bf16 %v197
    %v732 = vunpack.c.h.s8.bf16 %v198
    %v733 = vunpack.c.h.s8.bf16 %v199
    %v734 = vunpack.c.h.s8.bf16 %v200
    %v735 = vunpack.c.h.s8.bf16 %v201
    %v736 = vunpack.c.h.s8.bf16 %v202
    %v737 = vunpack.c.l.s8.bf16 %v203
    %v738 = vunpack.c.l.s8.bf16 %v204
    %v739 = vunpack.c.l.s8.bf16 %v205
    %v740 = vunpack.c.l.s8.bf16 %v206
    %v741 = vunpack.c.l.s8.bf16 %v207
    %v742 = vunpack.c.l.s8.bf16 %v208
    %v743 = vunpack.c.h.s8.bf16 %v203
    %v744 = vunpack.c.h.s8.bf16 %v204
    %v745 = vunpack.c.h.s8.bf16 %v205
    %v746 = vunpack.c.h.s8.bf16 %v206
    %v747 = vunpack.c.h.s8.bf16 %v207
    %v748 = vunpack.c.h.s8.bf16 %v208
    %v749 = vunpack.c.l.s8.bf16 %v209
    %v750 = vunpack.c.l.s8.bf16 %v210
    %v751 = vunpack.c.l.s8.bf16 %v211
    %v752 = vunpack.c.l.s8.bf16 %v212
    %v753 = vunpack.c.l.s8.bf16 %v213
    %v754 = vunpack.c.l.s8.bf16 %v214
    %v755 = vunpack.c.h.s8.bf16 %v209
    %v756 = vunpack.c.h.s8.bf16 %v210
    %v757 = vunpack.c.h.s8.bf16 %v211
    %v758 = vunpack.c.h.s8.bf16 %v212
    %v759 = vunpack.c.h.s8.bf16 %v213
    %v760 = vunpack.c.h.s8.bf16 %v214
    %v761 = vunpack.c.l.s8.bf16 %v215
    %v762 = vunpack.c.l.s8.bf16 %v216
    %v763 = vunpack.c.l.s8.bf16 %v217
    %v764 = vunpack.c.l.s8.bf16 %v218
    %v765 = vunpack.c.l.s8.bf16 %v219
    %v766 = vunpack.c.l.s8.bf16 %v220
    %v767 = vunpack.c.h.s8.bf16 %v215
    %v768 = vunpack.c.h.s8.bf16 %v216
    %v769 = vunpack.c.h.s8.bf16 %v217
    %v770 = vunpack.c.h.s8.bf16 %v218
    %v771 = vunpack.c.h.s8.bf16 %v219
    %v772 = vunpack.c.h.s8.bf16 %v220
    %v773 = vunpack.c.l.s8.bf16 %v221
    %v774 = vunpack.c.l.s8.bf16 %v222
    %v775 = vunpack.c.l.s8.bf16 %v223
    %v776 = vunpack.c.l.s8.bf16 %v224
    %v777 = vunpack.c.l.s8.bf16 %v225
    %v778 = vunpack.c.l.s8.bf16 %v226
    %v779 = vunpack.c.h.s8.bf16 %v221
    %v780 = vunpack.c.h.s8.bf16 %v222
    %v781 = vunpack.c.h.s8.bf16 %v223
    %v782 = vunpack.c.h.s8.bf16 %v224
    %v783 = vunpack.c.h.s8.bf16 %v225
    %v784 = vunpack.c.h.s8.bf16 %v226
    %v785 = vunpack.c.l.s8.bf16 %v227
    %v786 = vunpack.c.l.s8.bf16 %v228
    %v787 = vunpack.c.l.s8.bf16 %v229
    %v788 = vunpack.c.l.s8.bf16 %v230
    %v789 = vunpack.c.l.s8.bf16 %v231
    %v790 = vunpack.c.l.s8.bf16 %v232
    %v791 = vunpack.c.h.s8.bf16 %v227
    %v792 = vunpack.c.h.s8.bf16 %v228
    %v793 = vunpack.c.h.s8.bf16 %v229
    %v794 = vunpack.c.h.s8.bf16 %v230
    %v795 = vunpack.c.h.s8.bf16 %v231
    %v796 = vunpack.c.h.s8.bf16 %v232
    %v797 = vunpack.c.l.s8.bf16 %v233
    %v798 = vunpack.c.l.s8.bf16 %v234
    %v799 = vunpack.c.l.s8.bf16 %v235
    %v800 = vunpack.c.l.s8.bf16 %v236
    %v801 = vunpack.c.l.s8.bf16 %v237
    %v802 = vunpack.c.l.s8.bf16 %v238
    %v803 = vunpack.c.h.s8.bf16 %v233
    %v804 = vunpack.c.h.s8.bf16 %v234
    %v805 = vunpack.c.h.s8.bf16 %v235
    %v806 = vunpack.c.h.s8.bf16 %v236
    %v807 = vunpack.c.h.s8.bf16 %v237
    %v808 = vunpack.c.h.s8.bf16 %v238
    %v809 = vunpack.c.l.s8.bf16 %v239
    %v810 = vunpack.c.l.s8.bf16 %v240
    %v811 = vunpack.c.l.s8.bf16 %v241
    %v812 = vunpack.c.l.s8.bf16 %v242
    %v813 = vunpack.c.l.s8.bf16 %v243
    %v814 = vunpack.c.l.s8.bf16 %v244
    %v815 = vunpack.c.h.s8.bf16 %v239
    %v816 = vunpack.c.h.s8.bf16 %v240
    %v817 = vunpack.c.h.s8.bf16 %v241
    %v818 = vunpack.c.h.s8.bf16 %v242
    %v819 = vunpack.c.h.s8.bf16 %v243
    %v820 = vunpack.c.h.s8.bf16 %v244
    %v821 = vunpack.c.l.s8.bf16 %v245
    %v822 = vunpack.c.l.s8.bf16 %v246
    %v823 = vunpack.c.l.s8.bf16 %v247
    %v824 = vunpack.c.l.s8.bf16 %v248
    %v825 = vunpack.c.l.s8.bf16 %v249
    %v826 = vunpack.c.l.s8.bf16 %v250
    %v827 = vunpack.c.h.s8.bf16 %v245
    %v828 = vunpack.c.h.s8.bf16 %v246
    %v829 = vunpack.c.h.s8.bf16 %v247
    %v830 = vunpack.c.h.s8.bf16 %v248
    %v831 = vunpack.c.h.s8.bf16 %v249
    %v832 = vunpack.c.h.s8.bf16 %v250
    %v833 = vunpack.c.l.s8.bf16 %v251
    %v834 = vunpack.c.l.s8.bf16 %v252
    %v835 = vunpack.c.l.s8.bf16 %v253
    %v836 = vunpack.c.l.s8.bf16 %v254
    %v837 = vunpack.c.l.s8.bf16 %v255
    %v838 = vunpack.c.l.s8.bf16 %v256
    %v839 = vunpack.c.h.s8.bf16 %v251
    %v840 = vunpack.c.h.s8.bf16 %v252
    %v841 = vunpack.c.h.s8.bf16 %v253
    %v842 = vunpack.c.h.s8.bf16 %v254
    %v843 = vunpack.c.h.s8.bf16 %v255
    %v844 = vunpack.c.h.s8.bf16 %v256
    %v845 = vunpack.c.l.s8.bf16 %v257
    %v846 = vunpack.c.l.s8.bf16 %v258
    %v847 = vunpack.c.l.s8.bf16 %v259
    %v848 = vunpack.c.l.s8.bf16 %v260
    %v849 = vunpack.c.l.s8.bf16 %v261
    %v850 = vunpack.c.l.s8.bf16 %v262
    %v851 = vunpack.c.h.s8.bf16 %v257
    %v852 = vunpack.c.h.s8.bf16 %v258
    %v853 = vunpack.c.h.s8.bf16 %v259
    %v854 = vunpack.c.h.s8.bf16 %v260
    %v855 = vunpack.c.h.s8.bf16 %v261
    %v856 = vunpack.c.h.s8.bf16 %v262
    %v857 = vunpack.c.l.s8.bf16 %v263
    %v858 = vunpack.c.l.s8.bf16 %v264
    %v859 = vunpack.c.l.s8.bf16 %v265
    %v860 = vunpack.c.l.s8.bf16 %v266
    %v861 = vunpack.c.l.s8.bf16 %v267
    %v862 = vunpack.c.l.s8.bf16 %v268
    %v863 = vunpack.c.h.s8.bf16 %v263
    %v864 = vunpack.c.h.s8.bf16 %v264
    %v865 = vunpack.c.h.s8.bf16 %v265
    %v866 = vunpack.c.h.s8.bf16 %v266
    %v867 = vunpack.c.h.s8.bf16 %v267
    %v868 = vunpack.c.h.s8.bf16 %v268
    %v869 = vunpack.c.l.s8.bf16 %v269
    %v870 = vunpack.c.l.s8.bf16 %v270
    %v871 = vunpack.c.l.s8.bf16 %v271
    %v872 = vunpack.c.l.s8.bf16 %v272
    %v873 = vunpack.c.l.s8.bf16 %v273
    %v874 = vunpack.c.l.s8.bf16 %v274
    %v875 = vunpack.c.h.s8.bf16 %v269
    %v876 = vunpack.c.h.s8.bf16 %v270
    %v877 = vunpack.c.h.s8.bf16 %v271
    %v878 = vunpack.c.h.s8.bf16 %v272
    %v879 = vunpack.c.h.s8.bf16 %v273
    %v880 = vunpack.c.h.s8.bf16 %v274
    %v881 = vunpack.c.l.s8.bf16 %v275
    %v882 = vunpack.c.l.s8.bf16 %v276
    %v883 = vunpack.c.l.s8.bf16 %v277
    %v884 = vunpack.c.l.s8.bf16 %v278
    %v885 = vunpack.c.l.s8.bf16 %v279
    %v886 = vunpack.c.l.s8.bf16 %v280
    %v887 = vunpack.c.h.s8.bf16 %v275
    %v888 = vunpack.c.h.s8.bf16 %v276
    %v889 = vunpack.c.h.s8.bf16 %v277
    %v890 = vunpack.c.h.s8.bf16 %v278
    %v891 = vunpack.c.h.s8.bf16 %v279
    %v892 = vunpack.c.h.s8.bf16 %v280
    %v893 = vunpack.c.l.s8.bf16 %v281
    %v894 = vunpack.c.l.s8.bf16 %v282
    %v895 = vunpack.c.l.s8.bf16 %v283
    %v896 = vunpack.c.l.s8.bf16 %v284
    %v897 = vunpack.c.l.s8.bf16 %v285
    %v898 = vunpack.c.l.s8.bf16 %v286
    %v899 = vunpack.c.h.s8.bf16 %v281
    %v900 = vunpack.c.h.s8.bf16 %v282
    %v901 = vunpack.c.h.s8.bf16 %v283
    %v902 = vunpack.c.h.s8.bf16 %v284
    %v903 = vunpack.c.h.s8.bf16 %v285
    %v904 = vunpack.c.h.s8.bf16 %v286
    %v905 = vunpack.c.l.s8.bf16 %v287
    %v906 = vunpack.c.l.s8.bf16 %v288
    %v907 = vunpack.c.l.s8.bf16 %v289
    %v908 = vunpack.c.l.s8.bf16 %v290
    %v909 = vunpack.c.l.s8.bf16 %v291
    %v910 = vunpack.c.l.s8.bf16 %v292
    %v911 = vunpack.c.h.s8.bf16 %v287
    %v912 = vunpack.c.h.s8.bf16 %v288
    %v913 = vunpack.c.h.s8.bf16 %v289
    %v914 = vunpack.c.h.s8.bf16 %v290
    %v915 = vunpack.c.h.s8.bf16 %v291
    %v916 = vunpack.c.h.s8.bf16 %v292
    %v917 = vunpack.c.l.s8.bf16 %v293
    %v918 = vunpack.c.l.s8.bf16 %v294
    %v919 = vunpack.c.l.s8.bf16 %v295
    %v920 = vunpack.c.l.s8.bf16 %v296
    %v921 = vunpack.c.l.s8.bf16 %v297
    %v922 = vunpack.c.l.s8.bf16 %v298
    %v923 = vunpack.c.h.s8.bf16 %v293
    %v924 = vunpack.c.h.s8.bf16 %v294
    %v925 = vunpack.c.h.s8.bf16 %v295
    %v926 = vunpack.c.h.s8.bf16 %v296
    %v927 = vunpack.c.h.s8.bf16 %v297
    %v928 = vunpack.c.h.s8.bf16 %v298
    %v929 = vunpack.c.l.s8.bf16 %v299
    %v930 = vunpack.c.l.s8.bf16 %v300
    %v931 = vunpack.c.l.s8.bf16 %v301
    %v932 = vunpack.c.l.s8.bf16 %v302
    %v933 = vunpack.c.l.s8.bf16 %v303
    %v934 = vunpack.c.l.s8.bf16 %v304
    %v935 = vunpack.c.h.s8.bf16 %v299
    %v936 = vunpack.c.h.s8.bf16 %v300
    %v937 = vunpack.c.h.s8.bf16 %v301
    %v938 = vunpack.c.h.s8.bf16 %v302
    %v939 = vunpack.c.h.s8.bf16 %v303
    %v940 = vunpack.c.h.s8.bf16 %v304
    %v941 = vunpack.c.l.s8.bf16 %v305
    %v942 = vunpack.c.l.s8.bf16 %v306
    %v943 = vunpack.c.l.s8.bf16 %v307
    %v944 = vunpack.c.l.s8.bf16 %v308
    %v945 = vunpack.c.l.s8.bf16 %v309
    %v946 = vunpack.c.l.s8.bf16 %v310
    %v947 = vunpack.c.h.s8.bf16 %v305
    %v948 = vunpack.c.h.s8.bf16 %v306
    %v949 = vunpack.c.h.s8.bf16 %v307
    %v950 = vunpack.c.h.s8.bf16 %v308
    %v951 = vunpack.c.h.s8.bf16 %v309
    %v952 = vunpack.c.h.s8.bf16 %v310
    %v953 = vunpack.c.l.s8.bf16 %v311
    %v954 = vunpack.c.l.s8.bf16 %v312
    %v955 = vunpack.c.l.s8.bf16 %v313
    %v956 = vunpack.c.l.s8.bf16 %v314
    %v957 = vunpack.c.l.s8.bf16 %v315
    %v958 = vunpack.c.l.s8.bf16 %v316
    %v959 = vunpack.c.h.s8.bf16 %v311
    %v960 = vunpack.c.h.s8.bf16 %v312
    %v961 = vunpack.c.h.s8.bf16 %v313
    %v962 = vunpack.c.h.s8.bf16 %v314
    %v963 = vunpack.c.h.s8.bf16 %v315
    %v964 = vunpack.c.h.s8.bf16 %v316
    %v965 = vunpack.c.l.s8.bf16 %v317
    %v966 = vunpack.c.l.s8.bf16 %v318
    %v967 = vunpack.c.l.s8.bf16 %v319
    %v968 = vunpack.c.l.s8.bf16 %v320
    %v969 = vunpack.c.l.s8.bf16 %v321
    %v970 = vunpack.c.l.s8.bf16 %v322
    %v971 = vunpack.c.h.s8.bf16 %v317
    %v972 = vunpack.c.h.s8.bf16 %v318
    %v973 = vunpack.c.h.s8.bf16 %v319
    %v974 = vunpack.c.h.s8.bf16 %v320
    %v975 = vunpack.c.h.s8.bf16 %v321
    %v976 = vunpack.c.h.s8.bf16 %v322
    %v977 = vunpack.c.l.s8.bf16 %v323
    %v978 = vunpack.c.l.s8.bf16 %v324
    %v979 = vunpack.c.l.s8.bf16 %v325
    %v980 = vunpack.c.l.s8.bf16 %v326
    %v981 = vunpack.c.l.s8.bf16 %v327
    %v982 = vunpack.c.l.s8.bf16 %v328
    %v983 = vunpack.c.h.s8.bf16 %v323
    %v984 = vunpack.c.h.s8.bf16 %v324
    %v985 = vunpack.c.h.s8.bf16 %v325
    %v986 = vunpack.c.h.s8.bf16 %v326
    %v987 = vunpack.c.h.s8.bf16 %v327
    %v988 = vunpack.c.h.s8.bf16 %v328
    %v989 = vunpack.c.l.s8.bf16 %v329
    %v990 = vunpack.c.l.s8.bf16 %v330
    %v991 = vunpack.c.l.s8.bf16 %v331
    %v992 = vunpack.c.l.s8.bf16 %v332
    %v993 = vunpack.c.l.s8.bf16 %v333
    %v994 = vunpack.c.l.s8.bf16 %v334
    %v995 = vunpack.c.h.s8.bf16 %v329
    %v996 = vunpack.c.h.s8.bf16 %v330
    %v997 = vunpack.c.h.s8.bf16 %v331
    %v998 = vunpack.c.h.s8.bf16 %v332
    %v999 = vunpack.c.h.s8.bf16 %v333
    %v1000 = vunpack.c.h.s8.bf16 %v334
    %v1001 = vunpack.c.l.s8.bf16 %v335
    %v1002 = vunpack.c.l.s8.bf16 %v336
    %v1003 = vunpack.c.l.s8.bf16 %v337
    %v1004 = vunpack.c.l.s8.bf16 %v338
    %v1005 = vunpack.c.l.s8.bf16 %v339
    %v1006 = vunpack.c.l.s8.bf16 %v340
    %v1007 = vunpack.c.h.s8.bf16 %v335
    %v1008 = vunpack.c.h.s8.bf16 %v336
    %v1009 = vunpack.c.h.s8.bf16 %v337
    %v1010 = vunpack.c.h.s8.bf16 %v338
    %v1011 = vunpack.c.h.s8.bf16 %v339
    %v1012 = vunpack.c.h.s8.bf16 %v340
    %v1013 = vunpack.c.l.s8.bf16 %v341
    %v1014 = vunpack.c.l.s8.bf16 %v342
    %v1015 = vunpack.c.l.s8.bf16 %v343
    %v1016 = vunpack.c.l.s8.bf16 %v344
    %v1017 = vunpack.c.l.s8.bf16 %v345
    %v1018 = vunpack.c.l.s8.bf16 %v346
    %v1019 = vunpack.c.h.s8.bf16 %v341
    %v1020 = vunpack.c.h.s8.bf16 %v342
    %v1021 = vunpack.c.h.s8.bf16 %v343
    %v1022 = vunpack.c.h.s8.bf16 %v344
    %v1023 = vunpack.c.h.s8.bf16 %v345
    %v1024 = vunpack.c.h.s8.bf16 %v346
    %v1025 = vunpack.c.l.s8.bf16 %v347
    %v1026 = vunpack.c.l.s8.bf16 %v348
    %v1027 = vunpack.c.l.s8.bf16 %v349
    %v1028 = vunpack.c.l.s8.bf16 %v350
    %v1029 = vunpack.c.l.s8.bf16 %v351
    %v1030 = vunpack.c.l.s8.bf16 %v352
    %v1031 = vunpack.c.h.s8.bf16 %v347
    %v1032 = vunpack.c.h.s8.bf16 %v348
    %v1033 = vunpack.c.h.s8.bf16 %v349
    %v1034 = vunpack.c.h.s8.bf16 %v350
    %v1035 = vunpack.c.h.s8.bf16 %v351
    %v1036 = vunpack.c.h.s8.bf16 %v352
    %v1037 = vunpack.c.l.s8.bf16 %v353
    %v1038 = vunpack.c.l.s8.bf16 %v354
    %v1039 = vunpack.c.l.s8.bf16 %v355
    %v1040 = vunpack.c.l.s8.bf16 %v356
    %v1041 = vunpack.c.l.s8.bf16 %v357
    %v1042 = vunpack.c.l.s8.bf16 %v358
    %v1043 = vunpack.c.h.s8.bf16 %v353
    %v1044 = vunpack.c.h.s8.bf16 %v354
    %v1045 = vunpack.c.h.s8.bf16 %v355
    %v1046 = vunpack.c.h.s8.bf16 %v356
    %v1047 = vunpack.c.h.s8.bf16 %v357
    %v1048 = vunpack.c.h.s8.bf16 %v358
    %v1049 = vunpack.c.l.s8.bf16 %v359
    %v1050 = vunpack.c.l.s8.bf16 %v360
    %v1051 = vunpack.c.l.s8.bf16 %v361
    %v1052 = vunpack.c.l.s8.bf16 %v362
    %v1053 = vunpack.c.l.s8.bf16 %v363
    %v1054 = vunpack.c.l.s8.bf16 %v364
    %v1055 = vunpack.c.h.s8.bf16 %v359
    %v1056 = vunpack.c.h.s8.bf16 %v360
    %v1057 = vunpack.c.h.s8.bf16 %v361
    %v1058 = vunpack.c.h.s8.bf16 %v362
    %v1059 = vunpack.c.h.s8.bf16 %v363
    %v1060 = vunpack.c.h.s8.bf16 %v364
    %v1061 = vunpack.c.l.s8.bf16 %v365
    %v1062 = vunpack.c.l.s8.bf16 %v366
    %v1063 = vunpack.c.l.s8.bf16 %v367
    %v1064 = vunpack.c.l.s8.bf16 %v368
    %v1065 = vunpack.c.l.s8.bf16 %v369
    %v1066 = vunpack.c.l.s8.bf16 %v370
    %v1067 = vunpack.c.h.s8.bf16 %v365
    %v1068 = vunpack.c.h.s8.bf16 %v366
    %v1069 = vunpack.c.h.s8.bf16 %v367
    %v1070 = vunpack.c.h.s8.bf16 %v368
    %v1071 = vunpack.c.h.s8.bf16 %v369
    %v1072 = vunpack.c.h.s8.bf16 %v370
    %v1073 = vunpack.c.l.s8.bf16 %v371
    %v1074 = vunpack.c.l.s8.bf16 %v372
    %v1075 = vunpack.c.l.s8.bf16 %v373
    %v1076 = vunpack.c.l.s8.bf16 %v374
    %v1077 = vunpack.c.l.s8.bf16 %v375
    %v1078 = vunpack.c.l.s8.bf16 %v376
    %v1079 = vunpack.c.h.s8.bf16 %v371
    %v1080 = vunpack.c.h.s8.bf16 %v372
    %v1081 = vunpack.c.h.s8.bf16 %v373
    %v1082 = vunpack.c.h.s8.bf16 %v374
    %v1083 = vunpack.c.h.s8.bf16 %v375
    %v1084 = vunpack.c.h.s8.bf16 %v376
    %v1085 = vunpack.c.l.s8.bf16 %v377
    %v1086 = vunpack.c.l.s8.bf16 %v378
    %v1087 = vunpack.c.l.s8.bf16 %v379
    %v1088 = vunpack.c.l.s8.bf16 %v380
    %v1089 = vunpack.c.l.s8.bf16 %v381
    %v1090 = vunpack.c.l.s8.bf16 %v382
    %v1091 = vunpack.c.h.s8.bf16 %v377
    %v1092 = vunpack.c.h.s8.bf16 %v378
    %v1093 = vunpack.c.h.s8.bf16 %v379
    %v1094 = vunpack.c.h.s8.bf16 %v380
    %v1095 = vunpack.c.h.s8.bf16 %v381
    %v1096 = vunpack.c.h.s8.bf16 %v382
    %v1097 = vunpack.c.l.s8.bf16 %v383
    %v1098 = vunpack.c.l.s8.bf16 %v384
    %v1099 = vunpack.c.l.s8.bf16 %v385
    %v1100 = vunpack.c.l.s8.bf16 %v386
    %v1101 = vunpack.c.l.s8.bf16 %v387
    %v1102 = vunpack.c.l.s8.bf16 %v388
    %v1103 = vunpack.c.h.s8.bf16 %v383
    %v1104 = vunpack.c.h.s8.bf16 %v384
    %v1105 = vunpack.c.h.s8.bf16 %v385
    %v1106 = vunpack.c.h.s8.bf16 %v386
    %v1107 = vunpack.c.h.s8.bf16 %v387
    %v1108 = vunpack.c.h.s8.bf16 %v388
    %v1109 = vunpack.c.l.s8.bf16 %v389
    %v1110 = vunpack.c.l.s8.bf16 %v390
    %v1111 = vunpack.c.l.s8.bf16 %v391
    %v1112 = vunpack.c.l.s8.bf16 %v392
    %v1113 = vunpack.c.l.s8.bf16 %v393
    %v1114 = vunpack.c.l.s8.bf16 %v394
    %v1115 = vunpack.c.h.s8.bf16 %v389
    %v1116 = vunpack.c.h.s8.bf16 %v390
    %v1117 = vunpack.c.h.s8.bf16 %v391
    %v1118 = vunpack.c.h.s8.bf16 %v392
    %v1119 = vunpack.c.h.s8.bf16 %v393
    %v1120 = vunpack.c.h.s8.bf16 %v394
    %v1121 = vunpack.c.l.s8.bf16 %v395
    %v1122 = vunpack.c.l.s8.bf16 %v396
    %v1123 = vunpack.c.l.s8.bf16 %v397
    %v1124 = vunpack.c.l.s8.bf16 %v398
    %v1125 = vunpack.c.l.s8.bf16 %v399
    %v1126 = vunpack.c.l.s8.bf16 %v400
    %v1127 = vunpack.c.h.s8.bf16 %v395
    %v1128 = vunpack.c.h.s8.bf16 %v396
    %v1129 = vunpack.c.h.s8.bf16 %v397
    %v1130 = vunpack.c.h.s8.bf16 %v398
    %v1131 = vunpack.c.h.s8.bf16 %v399
    %v1132 = vunpack.c.h.s8.bf16 %v400
    %v1133 = vunpack.c.l.s8.bf16 %v401
    %v1134 = vunpack.c.l.s8.bf16 %v402
    %v1135 = vunpack.c.l.s8.bf16 %v403
    %v1136 = vunpack.c.l.s8.bf16 %v404
    %v1137 = vunpack.c.l.s8.bf16 %v405
    %v1138 = vunpack.c.l.s8.bf16 %v406
    %v1139 = vunpack.c.h.s8.bf16 %v401
    %v1140 = vunpack.c.h.s8.bf16 %v402
    %v1141 = vunpack.c.h.s8.bf16 %v403
    %v1142 = vunpack.c.h.s8.bf16 %v404
    %v1143 = vunpack.c.h.s8.bf16 %v405
    %v1144 = vunpack.c.h.s8.bf16 %v406
    %v1145 = vunpack.c.l.s8.bf16 %v407
    %v1146 = vunpack.c.l.s8.bf16 %v408
    %v1147 = vunpack.c.l.s8.bf16 %v409
    %v1148 = vunpack.c.l.s8.bf16 %v410
    %v1149 = vunpack.c.l.s8.bf16 %v411
    %v1150 = vunpack.c.l.s8.bf16 %v412
    %v1151 = vunpack.c.h.s8.bf16 %v407
    %v1152 = vunpack.c.h.s8.bf16 %v408
    %v1153 = vunpack.c.h.s8.bf16 %v409
    %v1154 = vunpack.c.h.s8.bf16 %v410
    %v1155 = vunpack.c.h.s8.bf16 %v411
    %v1156 = vunpack.c.h.s8.bf16 %v412
    %v1157 = vunpack.c.l.s8.bf16 %v413
    %v1158 = vunpack.c.l.s8.bf16 %v414
    %v1159 = vunpack.c.l.s8.bf16 %v415
    %v1160 = vunpack.c.l.s8.bf16 %v416
    %v1161 = vunpack.c.l.s8.bf16 %v417
    %v1162 = vunpack.c.l.s8.bf16 %v418
    %v1163 = vunpack.c.h.s8.bf16 %v413
    %v1164 = vunpack.c.h.s8.bf16 %v414
    %v1165 = vunpack.c.h.s8.bf16 %v415
    %v1166 = vunpack.c.h.s8.bf16 %v416
    %v1167 = vunpack.c.h.s8.bf16 %v417
    %v1168 = vunpack.c.h.s8.bf16 %v418
    %v1169 = vunpack.c.l.s8.bf16 %v419
    %v1170 = vunpack.c.l.s8.bf16 %v420
    %v1171 = vunpack.c.l.s8.bf16 %v421
    %v1172 = vunpack.c.l.s8.bf16 %v422
    %v1173 = vunpack.c.l.s8.bf16 %v423
    %v1174 = vunpack.c.l.s8.bf16 %v424
    %v1175 = vunpack.c.h.s8.bf16 %v419
    %v1176 = vunpack.c.h.s8.bf16 %v420
    %v1177 = vunpack.c.h.s8.bf16 %v421
    %v1178 = vunpack.c.h.s8.bf16 %v422
    %v1179 = vunpack.c.h.s8.bf16 %v423
    %v1180 = vunpack.c.h.s8.bf16 %v424
    %v1181 = vunpack.c.l.s8.bf16 %v425
    %v1182 = vunpack.c.l.s8.bf16 %v426
    %v1183 = vunpack.c.l.s8.bf16 %v427
    %v1184 = vunpack.c.l.s8.bf16 %v428
    %v1185 = vunpack.c.l.s8.bf16 %v429
    %v1186 = vunpack.c.l.s8.bf16 %v430
    %v1187 = vunpack.c.h.s8.bf16 %v425
    %v1188 = vunpack.c.h.s8.bf16 %v426
    %v1189 = vunpack.c.h.s8.bf16 %v427
    %v1190 = vunpack.c.h.s8.bf16 %v428
    %v1191 = vunpack.c.h.s8.bf16 %v429
    %v1192 = vunpack.c.h.s8.bf16 %v430
    %v1193 = vunpack.c.l.s8.bf16 %v431
    %v1194 = vunpack.c.l.s8.bf16 %v432
    %v1195 = vunpack.c.l.s8.bf16 %v433
    %v1196 = vunpack.c.l.s8.bf16 %v434
    %v1197 = vunpack.c.l.s8.bf16 %v435
    %v1198 = vunpack.c.l.s8.bf16 %v436
    %v1199 = vunpack.c.h.s8.bf16 %v431
    %v1200 = vunpack.c.h.s8.bf16 %v432
    %v1201 = vunpack.c.h.s8.bf16 %v433
    %v1202 = vunpack.c.h.s8.bf16 %v434
    %v1203 = vunpack.c.h.s8.bf16 %v435
    %v1204 = vunpack.c.h.s8.bf16 %v436
    %v1205 = vunpack.c.l.s8.bf16 %v437
    %v1206 = vunpack.c.l.s8.bf16 %v438
    %v1207 = vunpack.c.l.s8.bf16 %v439
    %v1208 = vunpack.c.l.s8.bf16 %v440
    %v1209 = vunpack.c.l.s8.bf16 %v441
    %v1210 = vunpack.c.l.s8.bf16 %v442
    %v1211 = vunpack.c.h.s8.bf16 %v437
    %v1212 = vunpack.c.h.s8.bf16 %v438
    %v1213 = vunpack.c.h.s8.bf16 %v439
    %v1214 = vunpack.c.h.s8.bf16 %v440
    %v1215 = vunpack.c.h.s8.bf16 %v441
    %v1216 = vunpack.c.h.s8.bf16 %v442
    %v1217 = vunpack.c.l.s8.bf16 %v443
    %v1218 = vunpack.c.l.s8.bf16 %v444
    %v1219 = vunpack.c.l.s8.bf16 %v445
    %v1220 = vunpack.c.l.s8.bf16 %v446
    %v1221 = vunpack.c.l.s8.bf16 %v447
    %v1222 = vunpack.c.l.s8.bf16 %v448
    %v1223 = vunpack.c.h.s8.bf16 %v443
    %v1224 = vunpack.c.h.s8.bf16 %v444
    %v1225 = vunpack.c.h.s8.bf16 %v445
    %v1226 = vunpack.c.h.s8.bf16 %v446
    %v1227 = vunpack.c.h.s8.bf16 %v447
    %v1228 = vunpack.c.h.s8.bf16 %v448
    %v1229 = vunpack.c.l.s8.bf16 %v449
    %v1230 = vunpack.c.l.s8.bf16 %v450
    %v1231 = vunpack.c.l.s8.bf16 %v451
    %v1232 = vunpack.c.l.s8.bf16 %v452
    %v1233 = vunpack.c.l.s8.bf16 %v453
    %v1234 = vunpack.c.l.s8.bf16 %v454
    %v1235 = vunpack.c.h.s8.bf16 %v449
    %v1236 = vunpack.c.h.s8.bf16 %v450
    %v1237 = vunpack.c.h.s8.bf16 %v451
    %v1238 = vunpack.c.h.s8.bf16 %v452
    %v1239 = vunpack.c.h.s8.bf16 %v453
    %v1240 = vunpack.c.h.s8.bf16 %v454
    %v1241 = vunpack.c.l.s8.bf16 %v455
    %v1242 = vunpack.c.l.s8.bf16 %v456
    %v1243 = vunpack.c.l.s8.bf16 %v457
    %v1244 = vunpack.c.l.s8.bf16 %v458
    %v1245 = vunpack.c.l.s8.bf16 %v459
    %v1246 = vunpack.c.l.s8.bf16 %v460
    %v1247 = vunpack.c.h.s8.bf16 %v455
    %v1248 = vunpack.c.h.s8.bf16 %v456
    %v1249 = vunpack.c.h.s8.bf16 %v457
    %v1250 = vunpack.c.h.s8.bf16 %v458
    %v1251 = vunpack.c.h.s8.bf16 %v459
    %v1252 = vunpack.c.h.s8.bf16 %v460
    %v1253 = vunpack.c.l.s8.bf16 %v461
    %v1254 = vunpack.c.l.s8.bf16 %v462
    %v1255 = vunpack.c.l.s8.bf16 %v463
    %v1256 = vunpack.c.l.s8.bf16 %v464
    %v1257 = vunpack.c.l.s8.bf16 %v465
    %v1258 = vunpack.c.l.s8.bf16 %v466
    %v1259 = vunpack.c.h.s8.bf16 %v461
    %v1260 = vunpack.c.h.s8.bf16 %v462
    %v1261 = vunpack.c.h.s8.bf16 %v463
    %v1262 = vunpack.c.h.s8.bf16 %v464
    %v1263 = vunpack.c.h.s8.bf16 %v465
    %v1264 = vunpack.c.h.s8.bf16 %v466
    %v1265 = vunpack.c.l.s8.bf16 %v467
    %v1266 = vunpack.c.l.s8.bf16 %v468
    %v1267 = vunpack.c.l.s8.bf16 %v469
    %v1268 = vunpack.c.l.s8.bf16 %v470
    %v1269 = vunpack.c.l.s8.bf16 %v471
    %v1270 = vunpack.c.l.s8.bf16 %v472
    %v1271 = vunpack.c.h.s8.bf16 %v467
    %v1272 = vunpack.c.h.s8.bf16 %v468
    %v1273 = vunpack.c.h.s8.bf16 %v469
    %v1274 = vunpack.c.h.s8.bf16 %v470
    %v1275 = vunpack.c.h.s8.bf16 %v471
    %v1276 = vunpack.c.h.s8.bf16 %v472
    %v1277 = vunpack.c.l.s8.bf16 %v473
    %v1278 = vunpack.c.l.s8.bf16 %v474
    %v1279 = vunpack.c.l.s8.bf16 %v475
    %v1280 = vunpack.c.l.s8.bf16 %v476
    %v1281 = vunpack.c.l.s8.bf16 %v477
    %v1282 = vunpack.c.l.s8.bf16 %v478
    %v1283 = vunpack.c.h.s8.bf16 %v473
    %v1284 = vunpack.c.h.s8.bf16 %v474
    %v1285 = vunpack.c.h.s8.bf16 %v475
    %v1286 = vunpack.c.h.s8.bf16 %v476
    %v1287 = vunpack.c.h.s8.bf16 %v477
    %v1288 = vunpack.c.h.s8.bf16 %v478
    %v1289 = vunpack.c.l.s8.bf16 %v479
    %v1290 = vunpack.c.l.s8.bf16 %v480
    %v1291 = vunpack.c.l.s8.bf16 %v481
    %v1292 = vunpack.c.l.s8.bf16 %v482
    %v1293 = vunpack.c.l.s8.bf16 %v483
    %v1294 = vunpack.c.l.s8.bf16 %v484
    %v1295 = vunpack.c.h.s8.bf16 %v479
    %v1296 = vunpack.c.h.s8.bf16 %v480
    %v1297 = vunpack.c.h.s8.bf16 %v481
    %v1298 = vunpack.c.h.s8.bf16 %v482
    %v1299 = vunpack.c.h.s8.bf16 %v483
    %v1300 = vunpack.c.h.s8.bf16 %v484
    %v1301 = vunpack.c.l.s8.bf16 %v485
    %v1302 = vunpack.c.l.s8.bf16 %v486
    %v1303 = vunpack.c.l.s8.bf16 %v487
    %v1304 = vunpack.c.l.s8.bf16 %v488
    %v1305 = vunpack.c.l.s8.bf16 %v489
    %v1306 = vunpack.c.l.s8.bf16 %v490
    %v1307 = vunpack.c.h.s8.bf16 %v485
    %v1308 = vunpack.c.h.s8.bf16 %v486
    %v1309 = vunpack.c.h.s8.bf16 %v487
    %v1310 = vunpack.c.h.s8.bf16 %v488
    %v1311 = vunpack.c.h.s8.bf16 %v489
    %v1312 = vunpack.c.h.s8.bf16 %v490
    %v1313 = vunpack.c.l.s8.bf16 %v491
    %v1314 = vunpack.c.l.s8.bf16 %v492
    %v1315 = vunpack.c.l.s8.bf16 %v493
    %v1316 = vunpack.c.l.s8.bf16 %v494
    %v1317 = vunpack.c.l.s8.bf16 %v495
    %v1318 = vunpack.c.l.s8.bf16 %v496
    %v1319 = vunpack.c.h.s8.bf16 %v491
    %v1320 = vunpack.c.h.s8.bf16 %v492
    %v1321 = vunpack.c.h.s8.bf16 %v493
    %v1322 = vunpack.c.h.s8.bf16 %v494
    %v1323 = vunpack.c.h.s8.bf16 %v495
    %v1324 = vunpack.c.h.s8.bf16 %v496
    %v1325 = vunpack.c.l.s8.bf16 %v497
    %v1326 = vunpack.c.l.s8.bf16 %v498
    %v1327 = vunpack.c.l.s8.bf16 %v499
    %v1328 = vunpack.c.l.s8.bf16 %v500
    %v1329 = vunpack.c.l.s8.bf16 %v501
    %v1330 = vunpack.c.l.s8.bf16 %v502
    %v1331 = vunpack.c.h.s8.bf16 %v497
    %v1332 = vunpack.c.h.s8.bf16 %v498
    %v1333 = vunpack.c.h.s8.bf16 %v499
    %v1334 = vunpack.c.h.s8.bf16 %v500
    %v1335 = vunpack.c.h.s8.bf16 %v501
    %v1336 = vunpack.c.h.s8.bf16 %v502
    %v1337 = vunpack.c.l.s8.bf16 %v503
    %v1338 = vunpack.c.l.s8.bf16 %v504
    %v1339 = vunpack.c.l.s8.bf16 %v505
    %v1340 = vunpack.c.l.s8.bf16 %v506
    %v1341 = vunpack.c.l.s8.bf16 %v507
    %v1342 = vunpack.c.l.s8.bf16 %v508
    %v1343 = vunpack.c.h.s8.bf16 %v503
    %v1344 = vunpack.c.h.s8.bf16 %v504
    %v1345 = vunpack.c.h.s8.bf16 %v505
    %v1346 = vunpack.c.h.s8.bf16 %v506
    %v1347 = vunpack.c.h.s8.bf16 %v507
    %v1348 = vunpack.c.h.s8.bf16 %v508
    %v1349 = vunpack.c.l.s8.bf16 %v509
    %v1350 = vunpack.c.l.s8.bf16 %v510
    %v1351 = vunpack.c.l.s8.bf16 %v511
    %v1352 = vunpack.c.l.s8.bf16 %v512
    %v1353 = vunpack.c.l.s8.bf16 %v513
    %v1354 = vunpack.c.l.s8.bf16 %v514
    %v1355 = vunpack.c.h.s8.bf16 %v509
    %v1356 = vunpack.c.h.s8.bf16 %v510
    %v1357 = vunpack.c.h.s8.bf16 %v511
    %v1358 = vunpack.c.h.s8.bf16 %v512
    %v1359 = vunpack.c.h.s8.bf16 %v513
    %v1360 = vunpack.c.h.s8.bf16 %v514
    %v1361 = vunpack.c.l.s8.bf16 %v515
    %v1362 = vunpack.c.l.s8.bf16 %v516
    %v1363 = vunpack.c.l.s8.bf16 %v517
    %v1364 = vunpack.c.l.s8.bf16 %v518
    %v1365 = vunpack.c.l.s8.bf16 %v519
    %v1366 = vunpack.c.l.s8.bf16 %v520
    %v1367 = vunpack.c.h.s8.bf16 %v515
    %v1368 = vunpack.c.h.s8.bf16 %v516
    %v1369 = vunpack.c.h.s8.bf16 %v517
    %v1370 = vunpack.c.h.s8.bf16 %v518
    %v1371 = vunpack.c.h.s8.bf16 %v519
    %v1372 = vunpack.c.h.s8.bf16 %v520
    %v1373 = vunpack.c.l.s8.bf16 %v521
    %v1374 = vunpack.c.l.s8.bf16 %v522
    %v1375 = vunpack.c.l.s8.bf16 %v523
    %v1376 = vunpack.c.l.s8.bf16 %v524
    %v1377 = vunpack.c.l.s8.bf16 %v525
    %v1378 = vunpack.c.l.s8.bf16 %v526
    %v1379 = vunpack.c.h.s8.bf16 %v521
    %v1380 = vunpack.c.h.s8.bf16 %v522
    %v1381 = vunpack.c.h.s8.bf16 %v523
    %v1382 = vunpack.c.h.s8.bf16 %v524
    %v1383 = vunpack.c.h.s8.bf16 %v525
    %v1384 = vunpack.c.h.s8.bf16 %v526
    %v1385 = vunpack.c.l.s8.bf16 %v527
    %v1386 = vunpack.c.l.s8.bf16 %v528
    %v1387 = vunpack.c.l.s8.bf16 %v529
    %v1388 = vunpack.c.l.s8.bf16 %v530
    %v1389 = vunpack.c.l.s8.bf16 %v531
    %v1390 = vunpack.c.l.s8.bf16 %v532
    %v1391 = vunpack.c.h.s8.bf16 %v527
    %v1392 = vunpack.c.h.s8.bf16 %v528
    %v1393 = vunpack.c.h.s8.bf16 %v529
    %v1394 = vunpack.c.h.s8.bf16 %v530
    %v1395 = vunpack.c.h.s8.bf16 %v531
    %v1396 = vunpack.c.h.s8.bf16 %v532
    %v1397 = vunpack.c.l.s8.bf16 %v533
    %v1398 = vunpack.c.l.s8.bf16 %v534
    %v1399 = vunpack.c.l.s8.bf16 %v535
    %v1400 = vunpack.c.l.s8.bf16 %v536
    %v1401 = vunpack.c.l.s8.bf16 %v537
    %v1402 = vunpack.c.l.s8.bf16 %v538
    %v1403 = vunpack.c.h.s8.bf16 %v533
    %v1404 = vunpack.c.h.s8.bf16 %v534
    %v1405 = vunpack.c.h.s8.bf16 %v535
    %v1406 = vunpack.c.h.s8.bf16 %v536
    %v1407 = vunpack.c.h.s8.bf16 %v537
    %v1408 = vunpack.c.h.s8.bf16 %v538
    %v1409 = vunpack.c.l.s8.bf16 %v539
    %v1410 = vunpack.c.l.s8.bf16 %v540
    %v1411 = vunpack.c.l.s8.bf16 %v541
    %v1412 = vunpack.c.l.s8.bf16 %v542
    %v1413 = vunpack.c.l.s8.bf16 %v543
    %v1414 = vunpack.c.l.s8.bf16 %v544
    %v1415 = vunpack.c.h.s8.bf16 %v539
    %v1416 = vunpack.c.h.s8.bf16 %v540
    %v1417 = vunpack.c.h.s8.bf16 %v541
    %v1418 = vunpack.c.h.s8.bf16 %v542
    %v1419 = vunpack.c.h.s8.bf16 %v543
    %v1420 = vunpack.c.h.s8.bf16 %v544
    %v1421 = vunpack.c.l.s8.bf16 %v545
    %v1422 = vunpack.c.l.s8.bf16 %v546
    %v1423 = vunpack.c.l.s8.bf16 %v547
    %v1424 = vunpack.c.l.s8.bf16 %v548
    %v1425 = vunpack.c.l.s8.bf16 %v549
    %v1426 = vunpack.c.l.s8.bf16 %v550
    %v1427 = vunpack.c.h.s8.bf16 %v545
    %v1428 = vunpack.c.h.s8.bf16 %v546
    %v1429 = vunpack.c.h.s8.bf16 %v547
    %v1430 = vunpack.c.h.s8.bf16 %v548
    %v1431 = vunpack.c.h.s8.bf16 %v549
    %v1432 = vunpack.c.h.s8.bf16 %v550
    %v1433 = vunpack.c.l.s8.bf16 %v551
    %v1434 = vunpack.c.l.s8.bf16 %v552
    %v1435 = vunpack.c.l.s8.bf16 %v553
    %v1436 = vunpack.c.l.s8.bf16 %v554
    %v1437 = vunpack.c.l.s8.bf16 %v555
    %v1438 = vunpack.c.l.s8.bf16 %v556
    %v1439 = vunpack.c.h.s8.bf16 %v551
    %v1440 = vunpack.c.h.s8.bf16 %v552
    %v1441 = vunpack.c.h.s8.bf16 %v553
    %v1442 = vunpack.c.h.s8.bf16 %v554
    %v1443 = vunpack.c.h.s8.bf16 %v555
    %v1444 = vunpack.c.h.s8.bf16 %v556
    %v1445 = vunpack.c.l.s8.bf16 %v557
    %v1446 = vunpack.c.l.s8.bf16 %v558
    %v1447 = vunpack.c.l.s8.bf16 %v559
    %v1448 = vunpack.c.l.s8.bf16 %v560
    %v1449 = vunpack.c.l.s8.bf16 %v561
    %v1450 = vunpack.c.l.s8.bf16 %v562
    %v1451 = vunpack.c.h.s8.bf16 %v557
    %v1452 = vunpack.c.h.s8.bf16 %v558
    %v1453 = vunpack.c.h.s8.bf16 %v559
    %v1454 = vunpack.c.h.s8.bf16 %v560
    %v1455 = vunpack.c.h.s8.bf16 %v561
    %v1456 = vunpack.c.h.s8.bf16 %v562
    %v1457 = vunpack.c.l.s8.bf16 %v563
    %v1458 = vunpack.c.l.s8.bf16 %v564
    %v1459 = vunpack.c.l.s8.bf16 %v565
    %v1460 = vunpack.c.l.s8.bf16 %v566
    %v1461 = vunpack.c.l.s8.bf16 %v567
    %v1462 = vunpack.c.l.s8.bf16 %v568
    %v1463 = vunpack.c.h.s8.bf16 %v563
    %v1464 = vunpack.c.h.s8.bf16 %v564
    %v1465 = vunpack.c.h.s8.bf16 %v565
    %v1466 = vunpack.c.h.s8.bf16 %v566
    %v1467 = vunpack.c.h.s8.bf16 %v567
    %v1468 = vunpack.c.h.s8.bf16 %v568
    %v1469 = vunpack.c.l.s8.bf16 %v569
    %v1470 = vunpack.c.l.s8.bf16 %v570
    %v1471 = vunpack.c.l.s8.bf16 %v571
    %v1472 = vunpack.c.l.s8.bf16 %v572
    %v1473 = vunpack.c.l.s8.bf16 %v573
    %v1474 = vunpack.c.l.s8.bf16 %v574
    %v1475 = vunpack.c.h.s8.bf16 %v569
    %v1476 = vunpack.c.h.s8.bf16 %v570
    %v1477 = vunpack.c.h.s8.bf16 %v571
    %v1478 = vunpack.c.h.s8.bf16 %v572
    %v1479 = vunpack.c.h.s8.bf16 %v573
    %v1480 = vunpack.c.h.s8.bf16 %v574
    %v1481 = vunpack.c.l.s8.bf16 %v575
    %v1482 = vunpack.c.l.s8.bf16 %v576
    %v1483 = vunpack.c.l.s8.bf16 %v577
    %v1484 = vunpack.c.l.s8.bf16 %v578
    %v1485 = vunpack.c.l.s8.bf16 %v579
    %v1486 = vunpack.c.l.s8.bf16 %v580
    %v1487 = vunpack.c.h.s8.bf16 %v575
    %v1488 = vunpack.c.h.s8.bf16 %v576
    %v1489 = vunpack.c.h.s8.bf16 %v577
    %v1490 = vunpack.c.h.s8.bf16 %v578
    %v1491 = vunpack.c.h.s8.bf16 %v579
    %v1492 = vunpack.c.h.s8.bf16 %v580
    %v1493 = vunpack.c.l.s8.bf16 %v581
    %v1494 = vunpack.c.l.s8.bf16 %v582
    %v1495 = vunpack.c.l.s8.bf16 %v583
    %v1496 = vunpack.c.l.s8.bf16 %v584
    %v1497 = vunpack.c.l.s8.bf16 %v585
    %v1498 = vunpack.c.l.s8.bf16 %v586
    %v1499 = vunpack.c.h.s8.bf16 %v581
    %v1500 = vunpack.c.h.s8.bf16 %v582
    %v1501 = vunpack.c.h.s8.bf16 %v583
    %v1502 = vunpack.c.h.s8.bf16 %v584
    %v1503 = vunpack.c.h.s8.bf16 %v585
    %v1504 = vunpack.c.h.s8.bf16 %v586
    %v1505 = vunpack.c.l.s8.bf16 %v587
    %v1506 = vunpack.c.l.s8.bf16 %v588
    %v1507 = vunpack.c.l.s8.bf16 %v589
    %v1508 = vunpack.c.l.s8.bf16 %v590
    %v1509 = vunpack.c.l.s8.bf16 %v591
    %v1510 = vunpack.c.l.s8.bf16 %v592
    %v1511 = vunpack.c.h.s8.bf16 %v587
    %v1512 = vunpack.c.h.s8.bf16 %v588
    %v1513 = vunpack.c.h.s8.bf16 %v589
    %v1514 = vunpack.c.h.s8.bf16 %v590
    %v1515 = vunpack.c.h.s8.bf16 %v591
    %v1516 = vunpack.c.h.s8.bf16 %v592
    %v1517 = vunpack.c.l.s8.bf16 %v593
    %v1518 = vunpack.c.l.s8.bf16 %v594
    %v1519 = vunpack.c.l.s8.bf16 %v595
    %v1520 = vunpack.c.l.s8.bf16 %v596
    %v1521 = vunpack.c.l.s8.bf16 %v597
    %v1522 = vunpack.c.l.s8.bf16 %v598
    %v1523 = vunpack.c.h.s8.bf16 %v593
    %v1524 = vunpack.c.h.s8.bf16 %v594
    %v1525 = vunpack.c.h.s8.bf16 %v595
    %v1526 = vunpack.c.h.s8.bf16 %v596
    %v1527 = vunpack.c.h.s8.bf16 %v597
    %v1528 = vunpack.c.h.s8.bf16 %v598
    %v1529 = vunpack.c.l.s8.bf16 %v599
    %v1530 = vunpack.c.l.s8.bf16 %v600
    %v1531 = vunpack.c.l.s8.bf16 %v601
    %v1532 = vunpack.c.l.s8.bf16 %v602
    %v1533 = vunpack.c.l.s8.bf16 %v603
    %v1534 = vunpack.c.l.s8.bf16 %v604
    %v1535 = vunpack.c.h.s8.bf16 %v599
    %v1536 = vunpack.c.h.s8.bf16 %v600
    %v1537 = vunpack.c.h.s8.bf16 %v601
    %v1538 = vunpack.c.h.s8.bf16 %v602
    %v1539 = vunpack.c.h.s8.bf16 %v603
    %v1540 = vunpack.c.h.s8.bf16 %v604
    %v1541 = vunpack.c.l.s8.bf16 %v605
    %v1542 = vunpack.c.l.s8.bf16 %v606
    %v1543 = vunpack.c.l.s8.bf16 %v607
    %v1544 = vunpack.c.l.s8.bf16 %v608
    %v1545 = vunpack.c.l.s8.bf16 %v609
    %v1546 = vunpack.c.l.s8.bf16 %v610
    %v1547 = vunpack.c.h.s8.bf16 %v605
    %v1548 = vunpack.c.h.s8.bf16 %v606
    %v1549 = vunpack.c.h.s8.bf16 %v607
    %v1550 = vunpack.c.h.s8.bf16 %v608
    %v1551 = vunpack.c.h.s8.bf16 %v609
    %v1552 = vunpack.c.h.s8.bf16 %v610
    %v1553 = vunpack.c.l.s8.bf16 %v611
    %v1554 = vunpack.c.l.s8.bf16 %v612
    %v1555 = vunpack.c.l.s8.bf16 %v613
    %v1556 = vunpack.c.l.s8.bf16 %v614
    %v1557 = vunpack.c.l.s8.bf16 %v615
    %v1558 = vunpack.c.l.s8.bf16 %v616
    %v1559 = vunpack.c.h.s8.bf16 %v611
    %v1560 = vunpack.c.h.s8.bf16 %v612
    %v1561 = vunpack.c.h.s8.bf16 %v613
    %v1562 = vunpack.c.h.s8.bf16 %v614
    %v1563 = vunpack.c.h.s8.bf16 %v615
    %v1564 = vunpack.c.h.s8.bf16 %v616
    %v1565 = vunpack.c.l.s8.bf16 %v617
    %v1566 = vunpack.c.l.s8.bf16 %v618
    %v1567 = vunpack.c.l.s8.bf16 %v619
    %v1568 = vunpack.c.l.s8.bf16 %v620
    %v1569 = vunpack.c.l.s8.bf16 %v621
    %v1570 = vunpack.c.l.s8.bf16 %v622
    %v1571 = vunpack.c.h.s8.bf16 %v617
    %v1572 = vunpack.c.h.s8.bf16 %v618
    %v1573 = vunpack.c.h.s8.bf16 %v619
    %v1574 = vunpack.c.h.s8.bf16 %v620
    %v1575 = vunpack.c.h.s8.bf16 %v621
    %v1576 = vunpack.c.h.s8.bf16 %v622
    %v1577 = vunpack.c.l.s8.bf16 %v623
    %v1578 = vunpack.c.l.s8.bf16 %v624
    %v1579 = vunpack.c.l.s8.bf16 %v625
    %v1580 = vunpack.c.l.s8.bf16 %v626
    %v1581 = vunpack.c.l.s8.bf16 %v627
    %v1582 = vunpack.c.l.s8.bf16 %v628
    %v1583 = vunpack.c.h.s8.bf16 %v623
    %v1584 = vunpack.c.h.s8.bf16 %v624
    %v1585 = vunpack.c.h.s8.bf16 %v625
    %v1586 = vunpack.c.h.s8.bf16 %v626
    %v1587 = vunpack.c.h.s8.bf16 %v627
    %v1588 = vunpack.c.h.s8.bf16 %v628
    %1589 = vmatprep.subr.bf16.mxu0 %v630
    %1590 = vmatpush1.bf16.msra.mxu0 %v629
    %1591 = vmatprep.subr.bf16.mxu0 %v636
    %1592 = vmatpush1.bf16.msra.mxu0 %v635
    %1593 = vmatprep.subr.bf16.mxu0 %v642
    %1594 = vmatpush1.bf16.msra.mxu0 %v641
    %1595 = vmatprep.subr.bf16.mxu0 %v648
    %1596 = vmatpush1.bf16.msra.mxu0 %v647
    %1597 = vmatprep.subr.bf16.mxu0 %v654
    %1598 = vmatpush1.bf16.msra.mxu0 %v653
    %1599 = vmatprep.subr.bf16.mxu0 %v660
    %1600 = vmatpush1.bf16.msra.mxu0 %v659
    %1601 = vmatprep.subr.bf16.mxu0 %v666
    %1602 = vmatpush1.bf16.msra.mxu0 %v665
    %1603 = vmatprep.subr.bf16.mxu0 %v672
    %1604 = vmatpush1.bf16.msra.mxu0 %v671
    %1605 = vmatprep.subr.bf16.mxu0 %v678
    %1606 = vmatpush1.bf16.msra.mxu0 %v677
    %1607 = vmatprep.subr.bf16.mxu0 %v684
    %1608 = vmatpush1.bf16.msra.mxu0 %v683
    %1609 = vmatprep.subr.bf16.mxu0 %v690
    %1610 = vmatpush1.bf16.msra.mxu0 %v689
    %1611 = vmatprep.subr.bf16.mxu0 %v696
    %1612 = vmatpush1.bf16.msra.mxu0 %v695
    %1613 = vmatprep.subr.bf16.mxu0 %v702
    %1614 = vmatpush1.bf16.msra.mxu0 %v701
    %1615 = vmatprep.subr.bf16.mxu0 %v708
    %1616 = vmatpush1.bf16.msra.mxu0 %v707
    %1617 = vmatprep.subr.bf16.mxu0 %v714
    %1618 = vmatpush1.bf16.msra.mxu0 %v713
    %1619 = vmatprep.subr.bf16.mxu0 %v720
    %1620 = vmatpush1.bf16.msra.mxu0 %v719
    %1621 = vmatprep.mubr.bf16.mxu0 %v130
    %1622 = vmatmul.mubr.bf16.gmra.mrb[0].mxu0 %v129
    %v1623 = vpop.f32.mrb[0].mxu0
    %v1624 = vadd.f32 0.0, %v1623
    %v1625 = vpop.f32.mrb[0].mxu0
    %v1626 = vadd.f32 0.0, %v1625
    %v1627 = vpop.f32.mrb[0].mxu0
    %v1628 = vpop.f32.mrb[0].mxu0
    %1629 = vdwg.mxu0
    %1630 = vmatprep.subr.bf16.mxu0 %v726
    %1631 = vmatpush1.bf16.msra.mxu0 %v725
    %1632 = vmatprep.subr.bf16.mxu0 %v732
    %1633 = vmatpush1.bf16.msra.mxu0 %v731
    %1634 = vmatprep.subr.bf16.mxu0 %v738
    %1635 = vmatpush1.bf16.msra.mxu0 %v737
    %1636 = vmatprep.subr.bf16.mxu0 %v744
    %1637 = vmatpush1.bf16.msra.mxu0 %v743
    %1638 = vmatprep.subr.bf16.mxu0 %v750
    %1639 = vmatpush1.bf16.msra.mxu0 %v749
    %1640 = vmatprep.subr.bf16.mxu0 %v756
    %1641 = vmatpush1.bf16.msra.mxu0 %v755
    %1642 = vmatprep.subr.bf16.mxu0 %v762
    %1643 = vmatpush1.bf16.msra.mxu0 %v761
    %1644 = vmatprep.subr.bf16.mxu0 %v768
    %1645 = vmatpush1.bf16.msra.mxu0 %v767
    %1646 = vmatprep.subr.bf16.mxu0 %v774
    %1647 = vmatpush1.bf16.msra.mxu0 %v773
    %1648 = vmatprep.subr.bf16.mxu0 %v780
    %1649 = vmatpush1.bf16.msra.mxu0 %v779
    %1650 = vmatprep.subr.bf16.mxu0 %v786
    %1651 = vmatpush1.bf16.msra.mxu0 %v785
    %1652 = vmatprep.subr.bf16.mxu0 %v792
    %1653 = vmatpush1.bf16.msra.mxu0 %v791
    %1654 = vmatprep.subr.bf16.mxu0 %v798
    %1655 = vmatpush1.bf16.msra.mxu0 %v797
    %1656 = vmatprep.subr.bf16.mxu0 %v804
    %1657 = vmatpush1.bf16.msra.mxu0 %v803
    %1658 = vmatprep.subr.bf16.mxu0 %v810
    %1659 = vmatpush1.bf16.msra.mxu0 %v809
    %1660 = vmatprep.subr.bf16.mxu0 %v816
    %1661 = vmatpush1.bf16.msra.mxu0 %v815
    %1662 = vmatprep.mubr.bf16.mxu0 %v132
    %1663 = vmatmul.mubr.bf16.gmra.mrb[0].mxu0 %v131
    %v1664 = vpop.f32.mrb[0].mxu0
    %v1665 = vadd.f32 %v1624, %v1664
    %v1666 = vpop.f32.mrb[0].mxu0
    %v1667 = vadd.f32 %v1626, %v1666
    %v1668 = vpop.f32.mrb[0].mxu0
    %v1669 = vpop.f32.mrb[0].mxu0
    %1670 = vdwg.mxu0
    %1671 = vmatprep.subr.bf16.mxu0 %v822
    %1672 = vmatpush1.bf16.msra.mxu0 %v821
    %1673 = vmatprep.subr.bf16.mxu0 %v828
    %1674 = vmatpush1.bf16.msra.mxu0 %v827
    %1675 = vmatprep.subr.bf16.mxu0 %v834
    %1676 = vmatpush1.bf16.msra.mxu0 %v833
    %1677 = vmatprep.subr.bf16.mxu0 %v840
    %1678 = vmatpush1.bf16.msra.mxu0 %v839
    %1679 = vmatprep.subr.bf16.mxu0 %v846
    %1680 = vmatpush1.bf16.msra.mxu0 %v845
    %1681 = vmatprep.subr.bf16.mxu0 %v852
    %1682 = vmatpush1.bf16.msra.mxu0 %v851
    %1683 = vmatprep.subr.bf16.mxu0 %v858
    %1684 = vmatpush1.bf16.msra.mxu0 %v857
    %1685 = vmatprep.subr.bf16.mxu0 %v864
    %1686 = vmatpush1.bf16.msra.mxu0 %v863
    %1687 = vmatprep.subr.bf16.mxu0 %v870
    %1688 = vmatpush1.bf16.msra.mxu0 %v869
    %1689 = vmatprep.subr.bf16.mxu0 %v876
    %1690 = vmatpush1.bf16.msra.mxu0 %v875
    %1691 = vmatprep.subr.bf16.mxu0 %v882
    %1692 = vmatpush1.bf16.msra.mxu0 %v881
    %1693 = vmatprep.subr.bf16.mxu0 %v888
    %1694 = vmatpush1.bf16.msra.mxu0 %v887
    %1695 = vmatprep.subr.bf16.mxu0 %v894
    %1696 = vmatpush1.bf16.msra.mxu0 %v893
    %1697 = vmatprep.subr.bf16.mxu0 %v900
    %1698 = vmatpush1.bf16.msra.mxu0 %v899
    %1699 = vmatprep.subr.bf16.mxu0 %v906
    %1700 = vmatpush1.bf16.msra.mxu0 %v905
    %1701 = vmatprep.subr.bf16.mxu0 %v912
    %1702 = vmatpush1.bf16.msra.mxu0 %v911
    %1703 = vmatprep.mubr.bf16.mxu0 %v134
    %1704 = vmatmul.mubr.bf16.gmra.mrb[0].mxu0 %v133
    %v1705 = vpop.f32.mrb[0].mxu0
    %v1706 = vadd.f32 %v1665, %v1705
    %v1707 = vpop.f32.mrb[0].mxu0
    %v1708 = vadd.f32 %v1667, %v1707
    %v1709 = vpop.f32.mrb[0].mxu0
    %v1710 = vpop.f32.mrb[0].mxu0
    %1711 = vdwg.mxu0
    %1712 = vmatprep.subr.bf16.mxu0 %v918
    %1713 = vmatpush1.bf16.msra.mxu0 %v917
    %1714 = vmatprep.subr.bf16.mxu0 %v924
    %1715 = vmatpush1.bf16.msra.mxu0 %v923
    %1716 = vmatprep.subr.bf16.mxu0 %v930
    %1717 = vmatpush1.bf16.msra.mxu0 %v929
    %1718 = vmatprep.subr.bf16.mxu0 %v936
    %1719 = vmatpush1.bf16.msra.mxu0 %v935
    %1720 = vmatprep.subr.bf16.mxu0 %v942
    %1721 = vmatpush1.bf16.msra.mxu0 %v941
    %1722 = vmatprep.subr.bf16.mxu0 %v948
    %1723 = vmatpush1.bf16.msra.mxu0 %v947
    %1724 = vmatprep.subr.bf16.mxu0 %v954
    %1725 = vmatpush1.bf16.msra.mxu0 %v953
    %1726 = vmatprep.subr.bf16.mxu0 %v960
    %1727 = vmatpush1.bf16.msra.mxu0 %v959
    %1728 = vmatprep.subr.bf16.mxu0 %v966
    %1729 = vmatpush1.bf16.msra.mxu0 %v965
    %1730 = vmatprep.subr.bf16.mxu0 %v972
    %1731 = vmatpush1.bf16.msra.mxu0 %v971
    %1732 = vmatprep.subr.bf16.mxu0 %v978
    %1733 = vmatpush1.bf16.msra.mxu0 %v977
    %1734 = vmatprep.subr.bf16.mxu0 %v984
    %1735 = vmatpush1.bf16.msra.mxu0 %v983
    %1736 = vmatprep.subr.bf16.mxu0 %v990
    %1737 = vmatpush1.bf16.msra.mxu0 %v989
    %1738 = vmatprep.subr.bf16.mxu0 %v996
    %1739 = vmatpush1.bf16.msra.mxu0 %v995
    %1740 = vmatprep.subr.bf16.mxu0 %v1002
    %1741 = vmatpush1.bf16.msra.mxu0 %v1001
    %1742 = vmatprep.subr.bf16.mxu0 %v1008
    %1743 = vmatpush1.bf16.msra.mxu0 %v1007
    %1744 = vmatprep.mubr.bf16.mxu0 %v136
    %1745 = vmatmul.mubr.bf16.gmra.mrb[0].mxu0 %v135
    %v1746 = vpop.f32.mrb[0].mxu0
    %v1747 = vadd.f32 %v1706, %v1746
    %v1748 = vpop.f32.mrb[0].mxu0
    %v1749 = vadd.f32 %v1708, %v1748
    %v1750 = vpop.f32.mrb[0].mxu0
    %v1751 = vpop.f32.mrb[0].mxu0
    %1752 = vdwg.mxu0
    %1753 = vmatprep.subr.bf16.mxu0 %v1014
    %1754 = vmatpush1.bf16.msra.mxu0 %v1013
    %1755 = vmatprep.subr.bf16.mxu0 %v1020
    %1756 = vmatpush1.bf16.msra.mxu0 %v1019
    %1757 = vmatprep.subr.bf16.mxu0 %v1026
    %1758 = vmatpush1.bf16.msra.mxu0 %v1025
    %1759 = vmatprep.subr.bf16.mxu0 %v1032
    %1760 = vmatpush1.bf16.msra.mxu0 %v1031
    %1761 = vmatprep.subr.bf16.mxu0 %v1038
    %1762 = vmatpush1.bf16.msra.mxu0 %v1037
    %1763 = vmatprep.subr.bf16.mxu0 %v1044
    %1764 = vmatpush1.bf16.msra.mxu0 %v1043
    %1765 = vmatprep.subr.bf16.mxu0 %v1050
    %1766 = vmatpush1.bf16.msra.mxu0 %v1049
    %1767 = vmatprep.subr.bf16.mxu0 %v1056
    %1768 = vmatpush1.bf16.msra.mxu0 %v1055
    %1769 = vmatprep.subr.bf16.mxu0 %v1062
    %1770 = vmatpush1.bf16.msra.mxu0 %v1061
    %1771 = vmatprep.subr.bf16.mxu0 %v1068
    %1772 = vmatpush1.bf16.msra.mxu0 %v1067
    %1773 = vmatprep.subr.bf16.mxu0 %v1074
    %1774 = vmatpush1.bf16.msra.mxu0 %v1073
    %1775 = vmatprep.subr.bf16.mxu0 %v1080
    %1776 = vmatpush1.bf16.msra.mxu0 %v1079
    %1777 = vmatprep.subr.bf16.mxu0 %v1086
    %1778 = vmatpush1.bf16.msra.mxu0 %v1085
    %1779 = vmatprep.subr.bf16.mxu0 %v1092
    %1780 = vmatpush1.bf16.msra.mxu0 %v1091
    %1781 = vmatprep.subr.bf16.mxu0 %v1098
    %1782 = vmatpush1.bf16.msra.mxu0 %v1097
    %1783 = vmatprep.subr.bf16.mxu0 %v1104
    %1784 = vmatpush1.bf16.msra.mxu0 %v1103
    %1785 = vmatprep.mubr.bf16.mxu0 %v138
    %1786 = vmatmul.mubr.bf16.gmra.mrb[0].mxu0 %v137
    %v1787 = vpop.f32.mrb[0].mxu0
    %v1788 = vadd.f32 %v1747, %v1787
    %v1789 = vpop.f32.mrb[0].mxu0
    %v1790 = vadd.f32 %v1749, %v1789
    %v1791 = vpop.f32.mrb[0].mxu0
    %v1792 = vpop.f32.mrb[0].mxu0
    %1793 = vdwg.mxu0
    %1794 = vmatprep.subr.bf16.mxu0 %v1110
    %1795 = vmatpush1.bf16.msra.mxu0 %v1109
    %1796 = vmatprep.subr.bf16.mxu0 %v1116
    %1797 = vmatpush1.bf16.msra.mxu0 %v1115
    %1798 = vmatprep.subr.bf16.mxu0 %v1122
    %1799 = vmatpush1.bf16.msra.mxu0 %v1121
    %1800 = vmatprep.subr.bf16.mxu0 %v1128
    %1801 = vmatpush1.bf16.msra.mxu0 %v1127
    %1802 = vmatprep.subr.bf16.mxu0 %v1134
    %1803 = vmatpush1.bf16.msra.mxu0 %v1133
    %1804 = vmatprep.subr.bf16.mxu0 %v1140
    %1805 = vmatpush1.bf16.msra.mxu0 %v1139
    %1806 = vmatprep.subr.bf16.mxu0 %v1146
    %1807 = vmatpush1.bf16.msra.mxu0 %v1145
    %1808 = vmatprep.subr.bf16.mxu0 %v1152
    %1809 = vmatpush1.bf16.msra.mxu0 %v1151
    %1810 = vmatprep.subr.bf16.mxu0 %v1158
    %1811 = vmatpush1.bf16.msra.mxu0 %v1157
    %1812 = vmatprep.subr.bf16.mxu0 %v1164
    %1813 = vmatpush1.bf16.msra.mxu0 %v1163
    %1814 = vmatprep.subr.bf16.mxu0 %v1170
    %1815 = vmatpush1.bf16.msra.mxu0 %v1169
    %1816 = vmatprep.subr.bf16.mxu0 %v1176
    %1817 = vmatpush1.bf16.msra.mxu0 %v1175
    %1818 = vmatprep.subr.bf16.mxu0 %v1182
    %1819 = vmatpush1.bf16.msra.mxu0 %v1181
    %1820 = vmatprep.subr.bf16.mxu0 %v1188
    %1821 = vmatpush1.bf16.msra.mxu0 %v1187
    %1822 = vmatprep.subr.bf16.mxu0 %v1194
    %1823 = vmatpush1.bf16.msra.mxu0 %v1193
    %1824 = vmatprep.subr.bf16.mxu0 %v1200
    %1825 = vmatpush1.bf16.msra.mxu0 %v1199
    %1826 = vmatprep.mubr.bf16.mxu0 %v140
    %1827 = vmatmul.mubr.bf16.gmra.mrb[0].mxu0 %v139
    %v1828 = vpop.f32.mrb[0].mxu0
    %v1829 = vadd.f32 %v1788, %v1828
    %v1830 = vpop.f32.mrb[0].mxu0
    %v1831 = vadd.f32 %v1790, %v1830
    %v1832 = vpop.f32.mrb[0].mxu0
    %v1833 = vpop.f32.mrb[0].mxu0
    %1834 = vdwg.mxu0
    %1835 = vmatprep.subr.bf16.mxu0 %v1206
    %1836 = vmatpush1.bf16.msra.mxu0 %v1205
    %1837 = vmatprep.subr.bf16.mxu0 %v1212
    %1838 = vmatpush1.bf16.msra.mxu0 %v1211
    %1839 = vmatprep.subr.bf16.mxu0 %v1218
    %1840 = vmatpush1.bf16.msra.mxu0 %v1217
    %1841 = vmatprep.subr.bf16.mxu0 %v1224
    %1842 = vmatpush1.bf16.msra.mxu0 %v1223
    %1843 = vmatprep.subr.bf16.mxu0 %v1230
    %1844 = vmatpush1.bf16.msra.mxu0 %v1229
    %1845 = vmatprep.subr.bf16.mxu0 %v1236
    %1846 = vmatpush1.bf16.msra.mxu0 %v1235
    %1847 = vmatprep.subr.bf16.mxu0 %v1242
    %1848 = vmatpush1.bf16.msra.mxu0 %v1241
    %1849 = vmatprep.subr.bf16.mxu0 %v1248
    %1850 = vmatpush1.bf16.msra.mxu0 %v1247
    %1851 = vmatprep.subr.bf16.mxu0 %v1254
    %1852 = vmatpush1.bf16.msra.mxu0 %v1253
    %1853 = vmatprep.subr.bf16.mxu0 %v1260
    %1854 = vmatpush1.bf16.msra.mxu0 %v1259
    %1855 = vmatprep.subr.bf16.mxu0 %v1266
    %1856 = vmatpush1.bf16.msra.mxu0 %v1265
    %1857 = vmatprep.subr.bf16.mxu0 %v1272
    %1858 = vmatpush1.bf16.msra.mxu0 %v1271
    %1859 = vmatprep.subr.bf16.mxu0 %v1278
    %1860 = vmatpush1.bf16.msra.mxu0 %v1277
    %1861 = vmatprep.subr.bf16.mxu0 %v1284
    %1862 = vmatpush1.bf16.msra.mxu0 %v1283
    %1863 = vmatprep.subr.bf16.mxu0 %v1290
    %1864 = vmatpush1.bf16.msra.mxu0 %v1289
    %1865 = vmatprep.subr.bf16.mxu0 %v1296
    %1866 = vmatpush1.bf16.msra.mxu0 %v1295
    %1867 = vmatprep.mubr.bf16.mxu0 %v142
    %1868 = vmatmul.mubr.bf16.gmra.mrb[0].mxu0 %v141
    %v1869 = vpop.f32.mrb[0].mxu0
    %v1870 = vadd.f32 %v1829, %v1869
    %v1871 = vpop.f32.mrb[0].mxu0
    %v1872 = vadd.f32 %v1831, %v1871
    %v1873 = vpop.f32.mrb[0].mxu0
    %v1874 = vpop.f32.mrb[0].mxu0
    %1875 = vdwg.mxu0
    %1876 = vmatprep.subr.bf16.mxu0 %v1302
    %1877 = vmatpush1.bf16.msra.mxu0 %v1301
    %1878 = vmatprep.subr.bf16.mxu0 %v1308
    %1879 = vmatpush1.bf16.msra.mxu0 %v1307
    %1880 = vmatprep.subr.bf16.mxu0 %v1314
    %1881 = vmatpush1.bf16.msra.mxu0 %v1313
    %1882 = vmatprep.subr.bf16.mxu0 %v1320
    %1883 = vmatpush1.bf16.msra.mxu0 %v1319
    %1884 = vmatprep.subr.bf16.mxu0 %v1326
    %1885 = vmatpush1.bf16.msra.mxu0 %v1325
    %1886 = vmatprep.subr.bf16.mxu0 %v1332
    %1887 = vmatpush1.bf16.msra.mxu0 %v1331
    %1888 = vmatprep.subr.bf16.mxu0 %v1338
    %1889 = vmatpush1.bf16.msra.mxu0 %v1337
    %1890 = vmatprep.subr.bf16.mxu0 %v1344
    %1891 = vmatpush1.bf16.msra.mxu0 %v1343
    %1892 = vmatprep.subr.bf16.mxu0 %v1350
    %1893 = vmatpush1.bf16.msra.mxu0 %v1349
    %1894 = vmatprep.subr.bf16.mxu0 %v1356
    %1895 = vmatpush1.bf16.msra.mxu0 %v1355
    %1896 = vmatprep.subr.bf16.mxu0 %v1362
    %1897 = vmatpush1.bf16.msra.mxu0 %v1361
    %1898 = vmatprep.subr.bf16.mxu0 %v1368
    %1899 = vmatpush1.bf16.msra.mxu0 %v1367
    %1900 = vmatprep.subr.bf16.mxu0 %v1374
    %1901 = vmatpush1.bf16.msra.mxu0 %v1373
    %1902 = vmatprep.subr.bf16.mxu0 %v1380
    %1903 = vmatpush1.bf16.msra.mxu0 %v1379
    %1904 = vmatprep.subr.bf16.mxu0 %v1386
    %1905 = vmatpush1.bf16.msra.mxu0 %v1385
    %1906 = vmatprep.subr.bf16.mxu0 %v1392
    %1907 = vmatpush1.bf16.msra.mxu0 %v1391
    %1908 = vmatprep.mubr.bf16.mxu0 %v144
    %1909 = vmatmul.mubr.bf16.gmra.mrb[0].mxu0 %v143
    %v1910 = vpop.f32.mrb[0].mxu0
    %v1911 = vadd.f32 %v1870, %v1910
    %v1912 = vpop.f32.mrb[0].mxu0
    %v1913 = vadd.f32 %v1872, %v1912
    %v1914 = vpop.f32.mrb[0].mxu0
    %v1915 = vpop.f32.mrb[0].mxu0
    %1916 = vdwg.mxu0
    %1917 = vmatprep.subr.bf16.mxu0 %v1398
    %1918 = vmatpush1.bf16.msra.mxu0 %v1397
    %1919 = vmatprep.subr.bf16.mxu0 %v1404
    %1920 = vmatpush1.bf16.msra.mxu0 %v1403
    %1921 = vmatprep.subr.bf16.mxu0 %v1410
    %1922 = vmatpush1.bf16.msra.mxu0 %v1409
    %1923 = vmatprep.subr.bf16.mxu0 %v1416
    %1924 = vmatpush1.bf16.msra.mxu0 %v1415
    %1925 = vmatprep.subr.bf16.mxu0 %v1422
    %1926 = vmatpush1.bf16.msra.mxu0 %v1421
    %1927 = vmatprep.subr.bf16.mxu0 %v1428
    %1928 = vmatpush1.bf16.msra.mxu0 %v1427
    %1929 = vmatprep.subr.bf16.mxu0 %v1434
    %1930 = vmatpush1.bf16.msra.mxu0 %v1433
    %1931 = vmatprep.subr.bf16.mxu0 %v1440
    %1932 = vmatpush1.bf16.msra.mxu0 %v1439
    %1933 = vmatprep.subr.bf16.mxu0 %v1446
    %1934 = vmatpush1.bf16.msra.mxu0 %v1445
    %1935 = vmatprep.subr.bf16.mxu0 %v1452
    %1936 = vmatpush1.bf16.msra.mxu0 %v1451
    %1937 = vmatprep.subr.bf16.mxu0 %v1458
    %1938 = vmatpush1.bf16.msra.mxu0 %v1457
    %1939 = vmatprep.subr.bf16.mxu0 %v1464
    %1940 = vmatpush1.bf16.msra.mxu0 %v1463
    %1941 = vmatprep.subr.bf16.mxu0 %v1470
    %1942 = vmatpush1.bf16.msra.mxu0 %v1469
    %1943 = vmatprep.subr.bf16.mxu0 %v1476
    %1944 = vmatpush1.bf16.msra.mxu0 %v1475
    %1945 = vmatprep.subr.bf16.mxu0 %v1482
    %1946 = vmatpush1.bf16.msra.mxu0 %v1481
    %1947 = vmatprep.subr.bf16.mxu0 %v1488
    %1948 = vmatpush1.bf16.msra.mxu0 %v1487
    %1949 = vmatprep.mubr.bf16.mxu0 %v146
    %1950 = vmatmul.mubr.bf16.gmra.mrb[0].mxu0 %v145
    %v1951 = vpop.f32.mrb[0].mxu0
    %v1952 = vadd.f32 %v1911, %v1951
    %v1953 = vpop.f32.mrb[0].mxu0
    %v1954 = vadd.f32 %v1913, %v1953
    %v1955 = vpop.f32.mrb[0].mxu0
    %v1956 = vpop.f32.mrb[0].mxu0
    %1957 = vdwg.mxu0
    %1958 = vmatprep.subr.bf16.mxu0 %v1494
    %1959 = vmatpush1.bf16.msra.mxu0 %v1493
    %1960 = vmatprep.subr.bf16.mxu0 %v1500
    %1961 = vmatpush1.bf16.msra.mxu0 %v1499
    %1962 = vmatprep.subr.bf16.mxu0 %v1506
    %1963 = vmatpush1.bf16.msra.mxu0 %v1505
    %1964 = vmatprep.subr.bf16.mxu0 %v1512
    %1965 = vmatpush1.bf16.msra.mxu0 %v1511
    %1966 = vmatprep.subr.bf16.mxu0 %v1518
    %1967 = vmatpush1.bf16.msra.mxu0 %v1517
    %1968 = vmatprep.subr.bf16.mxu0 %v1524
    %1969 = vmatpush1.bf16.msra.mxu0 %v1523
    %1970 = vmatprep.subr.bf16.mxu0 %v1530
    %1971 = vmatpush1.bf16.msra.mxu0 %v1529
    %1972 = vmatprep.subr.bf16.mxu0 %v1536
    %1973 = vmatpush1.bf16.msra.mxu0 %v1535
    %1974 = vmatprep.subr.bf16.mxu0 %v1542
    %1975 = vmatpush1.bf16.msra.mxu0 %v1541
    %1976 = vmatprep.subr.bf16.mxu0 %v1548
    %1977 = vmatpush1.bf16.msra.mxu0 %v1547
    %1978 = vmatprep.subr.bf16.mxu0 %v1554
    %1979 = vmatpush1.bf16.msra.mxu0 %v1553
    %1980 = vmatprep.subr.bf16.mxu0 %v1560
    %1981 = vmatpush1.bf16.msra.mxu0 %v1559
    %1982 = vmatprep.subr.bf16.mxu0 %v1566
    %1983 = vmatpush1.bf16.msra.mxu0 %v1565
    %1984 = vmatprep.subr.bf16.mxu0 %v1572
    %1985 = vmatpush1.bf16.msra.mxu0 %v1571
    %1986 = vmatprep.subr.bf16.mxu0 %v1578
    %1987 = vmatpush1.bf16.msra.mxu0 %v1577
    %1988 = vmatprep.subr.bf16.mxu0 %v1584
    %1989 = vmatpush1.bf16.msra.mxu0 %v1583
    %1990 = vmatprep.mubr.bf16.mxu0 %v148
    %1991 = vmatmul.mubr.bf16.gmra.mrb[0].mxu0 %v147
    %v1992 = vpop.f32.mrb[0].mxu0
    %v1993 = vadd.f32 %v1952, %v1992
    %v1994 = vpop.f32.mrb[0].mxu0
    %v1995 = vadd.f32 %v1954, %v1994
    %v1996 = vpop.f32.mrb[0].mxu0
    %v1997 = vpop.f32.mrb[0].mxu0
    %1998 = vdwg.mxu0
    %1999 = vmatprep.subr.bf16.mxu0 %v632
    %2000 = vmatpush1.bf16.msra.mxu0 %v631
    %2001 = vmatprep.subr.bf16.mxu0 %v638
    %2002 = vmatpush1.bf16.msra.mxu0 %v637
    %2003 = vmatprep.subr.bf16.mxu0 %v644
    %2004 = vmatpush1.bf16.msra.mxu0 %v643
    %2005 = vmatprep.subr.bf16.mxu0 %v650
    %2006 = vmatpush1.bf16.msra.mxu0 %v649
    %2007 = vmatprep.subr.bf16.mxu0 %v656
    %2008 = vmatpush1.bf16.msra.mxu0 %v655
    %2009 = vmatprep.subr.bf16.mxu0 %v662
    %2010 = vmatpush1.bf16.msra.mxu0 %v661
    %2011 = vmatprep.subr.bf16.mxu0 %v668
    %2012 = vmatpush1.bf16.msra.mxu0 %v667
    %2013 = vmatprep.subr.bf16.mxu0 %v674
    %2014 = vmatpush1.bf16.msra.mxu0 %v673
    %2015 = vmatprep.subr.bf16.mxu0 %v680
    %2016 = vmatpush1.bf16.msra.mxu0 %v679
    %2017 = vmatprep.subr.bf16.mxu0 %v686
    %2018 = vmatpush1.bf16.msra.mxu0 %v685
    %2019 = vmatprep.subr.bf16.mxu0 %v692
    %2020 = vmatpush1.bf16.msra.mxu0 %v691
    %2021 = vmatprep.subr.bf16.mxu0 %v698
    %2022 = vmatpush1.bf16.msra.mxu0 %v697
    %2023 = vmatprep.subr.bf16.mxu0 %v704
    %2024 = vmatpush1.bf16.msra.mxu0 %v703
    %2025 = vmatprep.subr.bf16.mxu0 %v710
    %2026 = vmatpush1.bf16.msra.mxu0 %v709
    %2027 = vmatprep.subr.bf16.mxu0 %v716
    %2028 = vmatpush1.bf16.msra.mxu0 %v715
    %2029 = vmatprep.subr.bf16.mxu0 %v722
    %2030 = vmatpush1.bf16.msra.mxu0 %v721
    %2031 = vmatprep.mubr.bf16.mxu0 %v130
    %2032 = vmatmul.mubr.bf16.gmra.mrb[0].mxu0 %v129
    %v2033 = vpop.f32.mrb[0].mxu0
    %v2034 = vadd.f32 0.0, %v2033
    %v2035 = vpop.f32.mrb[0].mxu0
    %v2036 = vadd.f32 0.0, %v2035
    %v2037 = vpop.f32.mrb[0].mxu0
    %v2038 = vpop.f32.mrb[0].mxu0
    %2039 = vdwg.mxu0
    %2040 = vmatprep.subr.bf16.mxu0 %v728
    %2041 = vmatpush1.bf16.msra.mxu0 %v727
    %2042 = vmatprep.subr.bf16.mxu0 %v734
    %2043 = vmatpush1.bf16.msra.mxu0 %v733
    %2044 = vmatprep.subr.bf16.mxu0 %v740
    %2045 = vmatpush1.bf16.msra.mxu0 %v739
    %2046 = vmatprep.subr.bf16.mxu0 %v746
    %2047 = vmatpush1.bf16.msra.mxu0 %v745
    %2048 = vmatprep.subr.bf16.mxu0 %v752
    %2049 = vmatpush1.bf16.msra.mxu0 %v751
    %2050 = vmatprep.subr.bf16.mxu0 %v758
    %2051 = vmatpush1.bf16.msra.mxu0 %v757
    %2052 = vmatprep.subr.bf16.mxu0 %v764
    %2053 = vmatpush1.bf16.msra.mxu0 %v763
    %2054 = vmatprep.subr.bf16.mxu0 %v770
    %2055 = vmatpush1.bf16.msra.mxu0 %v769
    %2056 = vmatprep.subr.bf16.mxu0 %v776
    %2057 = vmatpush1.bf16.msra.mxu0 %v775
    %2058 = vmatprep.subr.bf16.mxu0 %v782
    %2059 = vmatpush1.bf16.msra.mxu0 %v781
    %2060 = vmatprep.subr.bf16.mxu0 %v788
    %2061 = vmatpush1.bf16.msra.mxu0 %v787
    %2062 = vmatprep.subr.bf16.mxu0 %v794
    %2063 = vmatpush1.bf16.msra.mxu0 %v793
    %2064 = vmatprep.subr.bf16.mxu0 %v800
    %2065 = vmatpush1.bf16.msra.mxu0 %v799
    %2066 = vmatprep.subr.bf16.mxu0 %v806
    %2067 = vmatpush1.bf16.msra.mxu0 %v805
    %2068 = vmatprep.subr.bf16.mxu0 %v812
    %2069 = vmatpush1.bf16.msra.mxu0 %v811
    %2070 = vmatprep.subr.bf16.mxu0 %v818
    %2071 = vmatpush1.bf16.msra.mxu0 %v817
    %2072 = vmatprep.mubr.bf16.mxu0 %v132
    %2073 = vmatmul.mubr.bf16.gmra.mrb[0].mxu0 %v131
    %v2074 = vpop.f32.mrb[0].mxu0
    %v2075 = vadd.f32 %v2034, %v2074
    %v2076 = vpop.f32.mrb[0].mxu0
    %v2077 = vadd.f32 %v2036, %v2076
    %v2078 = vpop.f32.mrb[0].mxu0
    %v2079 = vpop.f32.mrb[0].mxu0
    %2080 = vdwg.mxu0
    %2081 = vmatprep.subr.bf16.mxu0 %v824
    %2082 = vmatpush1.bf16.msra.mxu0 %v823
    %2083 = vmatprep.subr.bf16.mxu0 %v830
    %2084 = vmatpush1.bf16.msra.mxu0 %v829
    %2085 = vmatprep.subr.bf16.mxu0 %v836
    %2086 = vmatpush1.bf16.msra.mxu0 %v835
    %2087 = vmatprep.subr.bf16.mxu0 %v842
    %2088 = vmatpush1.bf16.msra.mxu0 %v841
    %2089 = vmatprep.subr.bf16.mxu0 %v848
    %2090 = vmatpush1.bf16.msra.mxu0 %v847
    %2091 = vmatprep.subr.bf16.mxu0 %v854
    %2092 = vmatpush1.bf16.msra.mxu0 %v853
    %2093 = vmatprep.subr.bf16.mxu0 %v860
    %2094 = vmatpush1.bf16.msra.mxu0 %v859
    %2095 = vmatprep.subr.bf16.mxu0 %v866
    %2096 = vmatpush1.bf16.msra.mxu0 %v865
    %2097 = vmatprep.subr.bf16.mxu0 %v872
    %2098 = vmatpush1.bf16.msra.mxu0 %v871
    %2099 = vmatprep.subr.bf16.mxu0 %v878
    %2100 = vmatpush1.bf16.msra.mxu0 %v877
    %2101 = vmatprep.subr.bf16.mxu0 %v884
    %2102 = vmatpush1.bf16.msra.mxu0 %v883
    %2103 = vmatprep.subr.bf16.mxu0 %v890
    %2104 = vmatpush1.bf16.msra.mxu0 %v889
    %2105 = vmatprep.subr.bf16.mxu0 %v896
    %2106 = vmatpush1.bf16.msra.mxu0 %v895
    %2107 = vmatprep.subr.bf16.mxu0 %v902
    %2108 = vmatpush1.bf16.msra.mxu0 %v901
    %2109 = vmatprep.subr.bf16.mxu0 %v908
    %2110 = vmatpush1.bf16.msra.mxu0 %v907
    %2111 = vmatprep.subr.bf16.mxu0 %v914
    %2112 = vmatpush1.bf16.msra.mxu0 %v913
    %2113 = vmatprep.mubr.bf16.mxu0 %v134
    %2114 = vmatmul.mubr.bf16.gmra.mrb[0].mxu0 %v133
    %v2115 = vpop.f32.mrb[0].mxu0
    %v2116 = vadd.f32 %v2075, %v2115
    %v2117 = vpop.f32.mrb[0].mxu0
    %v2118 = vadd.f32 %v2077, %v2117
    %v2119 = vpop.f32.mrb[0].mxu0
    %v2120 = vpop.f32.mrb[0].mxu0
    %2121 = vdwg.mxu0
    %2122 = vmatprep.subr.bf16.mxu0 %v920
    %2123 = vmatpush1.bf16.msra.mxu0 %v919
    %2124 = vmatprep.subr.bf16.mxu0 %v926
    %2125 = vmatpush1.bf16.msra.mxu0 %v925
    %2126 = vmatprep.subr.bf16.mxu0 %v932
    %2127 = vmatpush1.bf16.msra.mxu0 %v931
    %2128 = vmatprep.subr.bf16.mxu0 %v938
    %2129 = vmatpush1.bf16.msra.mxu0 %v937
    %2130 = vmatprep.subr.bf16.mxu0 %v944
    %2131 = vmatpush1.bf16.msra.mxu0 %v943
    %2132 = vmatprep.subr.bf16.mxu0 %v950
    %2133 = vmatpush1.bf16.msra.mxu0 %v949
    %2134 = vmatprep.subr.bf16.mxu0 %v956
    %2135 = vmatpush1.bf16.msra.mxu0 %v955
    %2136 = vmatprep.subr.bf16.mxu0 %v962
    %2137 = vmatpush1.bf16.msra.mxu0 %v961
    %2138 = vmatprep.subr.bf16.mxu0 %v968
    %2139 = vmatpush1.bf16.msra.mxu0 %v967
    %2140 = vmatprep.subr.bf16.mxu0 %v974
    %2141 = vmatpush1.bf16.msra.mxu0 %v973
    %2142 = vmatprep.subr.bf16.mxu0 %v980
    %2143 = vmatpush1.bf16.msra.mxu0 %v979
    %2144 = vmatprep.subr.bf16.mxu0 %v986
    %2145 = vmatpush1.bf16.msra.mxu0 %v985
    %2146 = vmatprep.subr.bf16.mxu0 %v992
    %2147 = vmatpush1.bf16.msra.mxu0 %v991
    %2148 = vmatprep.subr.bf16.mxu0 %v998
    %2149 = vmatpush1.bf16.msra.mxu0 %v997
    %2150 = vmatprep.subr.bf16.mxu0 %v1004
    %2151 = vmatpush1.bf16.msra.mxu0 %v1003
    %2152 = vmatprep.subr.bf16.mxu0 %v1010
    %2153 = vmatpush1.bf16.msra.mxu0 %v1009
    %2154 = vmatprep.mubr.bf16.mxu0 %v136
    %2155 = vmatmul.mubr.bf16.gmra.mrb[0].mxu0 %v135
    %v2156 = vpop.f32.mrb[0].mxu0
    %v2157 = vadd.f32 %v2116, %v2156
    %v2158 = vpop.f32.mrb[0].mxu0
    %v2159 = vadd.f32 %v2118, %v2158
    %v2160 = vpop.f32.mrb[0].mxu0
    %v2161 = vpop.f32.mrb[0].mxu0
    %2162 = vdwg.mxu0
    %2163 = vmatprep.subr.bf16.mxu0 %v1016
    %2164 = vmatpush1.bf16.msra.mxu0 %v1015
    %2165 = vmatprep.subr.bf16.mxu0 %v1022
    %2166 = vmatpush1.bf16.msra.mxu0 %v1021
    %2167 = vmatprep.subr.bf16.mxu0 %v1028
    %2168 = vmatpush1.bf16.msra.mxu0 %v1027
    %2169 = vmatprep.subr.bf16.mxu0 %v1034
    %2170 = vmatpush1.bf16.msra.mxu0 %v1033
    %2171 = vmatprep.subr.bf16.mxu0 %v1040
    %2172 = vmatpush1.bf16.msra.mxu0 %v1039
    %2173 = vmatprep.subr.bf16.mxu0 %v1046
    %2174 = vmatpush1.bf16.msra.mxu0 %v1045
    %2175 = vmatprep.subr.bf16.mxu0 %v1052
    %2176 = vmatpush1.bf16.msra.mxu0 %v1051
    %2177 = vmatprep.subr.bf16.mxu0 %v1058
    %2178 = vmatpush1.bf16.msra.mxu0 %v1057
    %2179 = vmatprep.subr.bf16.mxu0 %v1064
    %2180 = vmatpush1.bf16.msra.mxu0 %v1063
    %2181 = vmatprep.subr.bf16.mxu0 %v1070
    %2182 = vmatpush1.bf16.msra.mxu0 %v1069
    %2183 = vmatprep.subr.bf16.mxu0 %v1076
    %2184 = vmatpush1.bf16.msra.mxu0 %v1075
    %2185 = vmatprep.subr.bf16.mxu0 %v1082
    %2186 = vmatpush1.bf16.msra.mxu0 %v1081
    %2187 = vmatprep.subr.bf16.mxu0 %v1088
    %2188 = vmatpush1.bf16.msra.mxu0 %v1087
    %2189 = vmatprep.subr.bf16.mxu0 %v1094
    %2190 = vmatpush1.bf16.msra.mxu0 %v1093
    %2191 = vmatprep.subr.bf16.mxu0 %v1100
    %2192 = vmatpush1.bf16.msra.mxu0 %v1099
    %2193 = vmatprep.subr.bf16.mxu0 %v1106
    %2194 = vmatpush1.bf16.msra.mxu0 %v1105
    %2195 = vmatprep.mubr.bf16.mxu0 %v138
    %2196 = vmatmul.mubr.bf16.gmra.mrb[0].mxu0 %v137
    %v2197 = vpop.f32.mrb[0].mxu0
    %v2198 = vadd.f32 %v2157, %v2197
    %v2199 = vpop.f32.mrb[0].mxu0
    %v2200 = vadd.f32 %v2159, %v2199
    %v2201 = vpop.f32.mrb[0].mxu0
    %v2202 = vpop.f32.mrb[0].mxu0
    %2203 = vdwg.mxu0
    %2204 = vmatprep.subr.bf16.mxu0 %v1112
    %2205 = vmatpush1.bf16.msra.mxu0 %v1111
    %2206 = vmatprep.subr.bf16.mxu0 %v1118
    %2207 = vmatpush1.bf16.msra.mxu0 %v1117
    %2208 = vmatprep.subr.bf16.mxu0 %v1124
    %2209 = vmatpush1.bf16.msra.mxu0 %v1123
    %2210 = vmatprep.subr.bf16.mxu0 %v1130
    %2211 = vmatpush1.bf16.msra.mxu0 %v1129
    %2212 = vmatprep.subr.bf16.mxu0 %v1136
    %2213 = vmatpush1.bf16.msra.mxu0 %v1135
    %2214 = vmatprep.subr.bf16.mxu0 %v1142
    %2215 = vmatpush1.bf16.msra.mxu0 %v1141
    %2216 = vmatprep.subr.bf16.mxu0 %v1148
    %2217 = vmatpush1.bf16.msra.mxu0 %v1147
    %2218 = vmatprep.subr.bf16.mxu0 %v1154
    %2219 = vmatpush1.bf16.msra.mxu0 %v1153
    %2220 = vmatprep.subr.bf16.mxu0 %v1160
    %2221 = vmatpush1.bf16.msra.mxu0 %v1159
    %2222 = vmatprep.subr.bf16.mxu0 %v1166
    %2223 = vmatpush1.bf16.msra.mxu0 %v1165
    %2224 = vmatprep.subr.bf16.mxu0 %v1172
    %2225 = vmatpush1.bf16.msra.mxu0 %v1171
    %2226 = vmatprep.subr.bf16.mxu0 %v1178
    %2227 = vmatpush1.bf16.msra.mxu0 %v1177
    %2228 = vmatprep.subr.bf16.mxu0 %v1184
    %2229 = vmatpush1.bf16.msra.mxu0 %v1183
    %2230 = vmatprep.subr.bf16.mxu0 %v1190
    %2231 = vmatpush1.bf16.msra.mxu0 %v1189
    %2232 = vmatprep.subr.bf16.mxu0 %v1196
    %2233 = vmatpush1.bf16.msra.mxu0 %v1195
    %2234 = vmatprep.subr.bf16.mxu0 %v1202
    %2235 = vmatpush1.bf16.msra.mxu0 %v1201
    %2236 = vmatprep.mubr.bf16.mxu0 %v140
    %2237 = vmatmul.mubr.bf16.gmra.mrb[0].mxu0 %v139
    %v2238 = vpop.f32.mrb[0].mxu0
    %v2239 = vadd.f32 %v2198, %v2238
    %v2240 = vpop.f32.mrb[0].mxu0
    %v2241 = vadd.f32 %v2200, %v2240
    %v2242 = vpop.f32.mrb[0].mxu0
    %v2243 = vpop.f32.mrb[0].mxu0
    %2244 = vdwg.mxu0
    %2245 = vmatprep.subr.bf16.mxu0 %v1208
    %2246 = vmatpush1.bf16.msra.mxu0 %v1207
    %2247 = vmatprep.subr.bf16.mxu0 %v1214
    %2248 = vmatpush1.bf16.msra.mxu0 %v1213
    %2249 = vmatprep.subr.bf16.mxu0 %v1220
    %2250 = vmatpush1.bf16.msra.mxu0 %v1219
    %2251 = vmatprep.subr.bf16.mxu0 %v1226
    %2252 = vmatpush1.bf16.msra.mxu0 %v1225
    %2253 = vmatprep.subr.bf16.mxu0 %v1232
    %2254 = vmatpush1.bf16.msra.mxu0 %v1231
    %2255 = vmatprep.subr.bf16.mxu0 %v1238
    %2256 = vmatpush1.bf16.msra.mxu0 %v1237
    %2257 = vmatprep.subr.bf16.mxu0 %v1244
    %2258 = vmatpush1.bf16.msra.mxu0 %v1243
    %2259 = vmatprep.subr.bf16.mxu0 %v1250
    %2260 = vmatpush1.bf16.msra.mxu0 %v1249
    %2261 = vmatprep.subr.bf16.mxu0 %v1256
    %2262 = vmatpush1.bf16.msra.mxu0 %v1255
    %2263 = vmatprep.subr.bf16.mxu0 %v1262
    %2264 = vmatpush1.bf16.msra.mxu0 %v1261
    %2265 = vmatprep.subr.bf16.mxu0 %v1268
    %2266 = vmatpush1.bf16.msra.mxu0 %v1267
    %2267 = vmatprep.subr.bf16.mxu0 %v1274
    %2268 = vmatpush1.bf16.msra.mxu0 %v1273
    %2269 = vmatprep.subr.bf16.mxu0 %v1280
    %2270 = vmatpush1.bf16.msra.mxu0 %v1279
    %2271 = vmatprep.subr.bf16.mxu0 %v1286
    %2272 = vmatpush1.bf16.msra.mxu0 %v1285
    %2273 = vmatprep.subr.bf16.mxu0 %v1292
    %2274 = vmatpush1.bf16.msra.mxu0 %v1291
    %2275 = vmatprep.subr.bf16.mxu0 %v1298
    %2276 = vmatpush1.bf16.msra.mxu0 %v1297
    %2277 = vmatprep.mubr.bf16.mxu0 %v142
    %2278 = vmatmul.mubr.bf16.gmra.mrb[0].mxu0 %v141
    %v2279 = vpop.f32.mrb[0].mxu0
    %v2280 = vadd.f32 %v2239, %v2279
    %v2281 = vpop.f32.mrb[0].mxu0
    %v2282 = vadd.f32 %v2241, %v2281
    %v2283 = vpop.f32.mrb[0].mxu0
    %v2284 = vpop.f32.mrb[0].mxu0
    %2285 = vdwg.mxu0
    %2286 = vmatprep.subr.bf16.mxu0 %v1304
    %2287 = vmatpush1.bf16.msra.mxu0 %v1303
    %2288 = vmatprep.subr.bf16.mxu0 %v1310
    %2289 = vmatpush1.bf16.msra.mxu0 %v1309
    %2290 = vmatprep.subr.bf16.mxu0 %v1316
    %2291 = vmatpush1.bf16.msra.mxu0 %v1315
    %2292 = vmatprep.subr.bf16.mxu0 %v1322
    %2293 = vmatpush1.bf16.msra.mxu0 %v1321
    %2294 = vmatprep.subr.bf16.mxu0 %v1328
    %2295 = vmatpush1.bf16.msra.mxu0 %v1327
    %2296 = vmatprep.subr.bf16.mxu0 %v1334
    %2297 = vmatpush1.bf16.msra.mxu0 %v1333
    %2298 = vmatprep.subr.bf16.mxu0 %v1340
    %2299 = vmatpush1.bf16.msra.mxu0 %v1339
    %2300 = vmatprep.subr.bf16.mxu0 %v1346
    %2301 = vmatpush1.bf16.msra.mxu0 %v1345
    %2302 = vmatprep.subr.bf16.mxu0 %v1352
    %2303 = vmatpush1.bf16.msra.mxu0 %v1351
    %2304 = vmatprep.subr.bf16.mxu0 %v1358
    %2305 = vmatpush1.bf16.msra.mxu0 %v1357
    %2306 = vmatprep.subr.bf16.mxu0 %v1364
    %2307 = vmatpush1.bf16.msra.mxu0 %v1363
    %2308 = vmatprep.subr.bf16.mxu0 %v1370
    %2309 = vmatpush1.bf16.msra.mxu0 %v1369
    %2310 = vmatprep.subr.bf16.mxu0 %v1376
    %2311 = vmatpush1.bf16.msra.mxu0 %v1375
    %2312 = vmatprep.subr.bf16.mxu0 %v1382
    %2313 = vmatpush1.bf16.msra.mxu0 %v1381
    %2314 = vmatprep.subr.bf16.mxu0 %v1388
    %2315 = vmatpush1.bf16.msra.mxu0 %v1387
    %2316 = vmatprep.subr.bf16.mxu0 %v1394
    %2317 = vmatpush1.bf16.msra.mxu0 %v1393
    %2318 = vmatprep.mubr.bf16.mxu0 %v144
    %2319 = vmatmul.mubr.bf16.gmra.mrb[0].mxu0 %v143
    %v2320 = vpop.f32.mrb[0].mxu0
    %v2321 = vadd.f32 %v2280, %v2320
    %v2322 = vpop.f32.mrb[0].mxu0
    %v2323 = vadd.f32 %v2282, %v2322
    %v2324 = vpop.f32.mrb[0].mxu0
    %v2325 = vpop.f32.mrb[0].mxu0
    %2326 = vdwg.mxu0
    %2327 = vmatprep.subr.bf16.mxu0 %v1400
    %2328 = vmatpush1.bf16.msra.mxu0 %v1399
    %2329 = vmatprep.subr.bf16.mxu0 %v1406
    %2330 = vmatpush1.bf16.msra.mxu0 %v1405
    %2331 = vmatprep.subr.bf16.mxu0 %v1412
    %2332 = vmatpush1.bf16.msra.mxu0 %v1411
    %2333 = vmatprep.subr.bf16.mxu0 %v1418
    %2334 = vmatpush1.bf16.msra.mxu0 %v1417
    %2335 = vmatprep.subr.bf16.mxu0 %v1424
    %2336 = vmatpush1.bf16.msra.mxu0 %v1423
    %2337 = vmatprep.subr.bf16.mxu0 %v1430
    %2338 = vmatpush1.bf16.msra.mxu0 %v1429
    %2339 = vmatprep.subr.bf16.mxu0 %v1436
    %2340 = vmatpush1.bf16.msra.mxu0 %v1435
    %2341 = vmatprep.subr.bf16.mxu0 %v1442
    %2342 = vmatpush1.bf16.msra.mxu0 %v1441
    %2343 = vmatprep.subr.bf16.mxu0 %v1448
    %2344 = vmatpush1.bf16.msra.mxu0 %v1447
    %2345 = vmatprep.subr.bf16.mxu0 %v1454
    %2346 = vmatpush1.bf16.msra.mxu0 %v1453
    %2347 = vmatprep.subr.bf16.mxu0 %v1460
    %2348 = vmatpush1.bf16.msra.mxu0 %v1459
    %2349 = vmatprep.subr.bf16.mxu0 %v1466
    %2350 = vmatpush1.bf16.msra.mxu0 %v1465
    %2351 = vmatprep.subr.bf16.mxu0 %v1472
    %2352 = vmatpush1.bf16.msra.mxu0 %v1471
    %2353 = vmatprep.subr.bf16.mxu0 %v1478
    %2354 = vmatpush1.bf16.msra.mxu0 %v1477
    %2355 = vmatprep.subr.bf16.mxu0 %v1484
    %2356 = vmatpush1.bf16.msra.mxu0 %v1483
    %2357 = vmatprep.subr.bf16.mxu0 %v1490
    %2358 = vmatpush1.bf16.msra.mxu0 %v1489
    %2359 = vmatprep.mubr.bf16.mxu0 %v146
    %2360 = vmatmul.mubr.bf16.gmra.mrb[0].mxu0 %v145
    %v2361 = vpop.f32.mrb[0].mxu0
    %v2362 = vadd.f32 %v2321, %v2361
    %v2363 = vpop.f32.mrb[0].mxu0
    %v2364 = vadd.f32 %v2323, %v2363
    %v2365 = vpop.f32.mrb[0].mxu0
    %v2366 = vpop.f32.mrb[0].mxu0
    %2367 = vdwg.mxu0
    %2368 = vmatprep.subr.bf16.mxu0 %v1496
    %2369 = vmatpush1.bf16.msra.mxu0 %v1495
    %2370 = vmatprep.subr.bf16.mxu0 %v1502
    %2371 = vmatpush1.bf16.msra.mxu0 %v1501
    %2372 = vmatprep.subr.bf16.mxu0 %v1508
    %2373 = vmatpush1.bf16.msra.mxu0 %v1507
    %2374 = vmatprep.subr.bf16.mxu0 %v1514
    %2375 = vmatpush1.bf16.msra.mxu0 %v1513
    %2376 = vmatprep.subr.bf16.mxu0 %v1520
    %2377 = vmatpush1.bf16.msra.mxu0 %v1519
    %2378 = vmatprep.subr.bf16.mxu0 %v1526
    %2379 = vmatpush1.bf16.msra.mxu0 %v1525
    %2380 = vmatprep.subr.bf16.mxu0 %v1532
    %2381 = vmatpush1.bf16.msra.mxu0 %v1531
    %2382 = vmatprep.subr.bf16.mxu0 %v1538
    %2383 = vmatpush1.bf16.msra.mxu0 %v1537
    %2384 = vmatprep.subr.bf16.mxu0 %v1544
    %2385 = vmatpush1.bf16.msra.mxu0 %v1543
    %2386 = vmatprep.subr.bf16.mxu0 %v1550
    %2387 = vmatpush1.bf16.msra.mxu0 %v1549
    %2388 = vmatprep.subr.bf16.mxu0 %v1556
    %2389 = vmatpush1.bf16.msra.mxu0 %v1555
    %2390 = vmatprep.subr.bf16.mxu0 %v1562
    %2391 = vmatpush1.bf16.msra.mxu0 %v1561
    %2392 = vmatprep.subr.bf16.mxu0 %v1568
    %2393 = vmatpush1.bf16.msra.mxu0 %v1567
    %2394 = vmatprep.subr.bf16.mxu0 %v1574
    %2395 = vmatpush1.bf16.msra.mxu0 %v1573
    %2396 = vmatprep.subr.bf16.mxu0 %v1580
    %2397 = vmatpush1.bf16.msra.mxu0 %v1579
    %2398 = vmatprep.subr.bf16.mxu0 %v1586
    %2399 = vmatpush1.bf16.msra.mxu0 %v1585
    %2400 = vmatprep.mubr.bf16.mxu0 %v148
    %2401 = vmatmul.mubr.bf16.gmra.mrb[0].mxu0 %v147
    %v2402 = vpop.f32.mrb[0].mxu0
    %v2403 = vadd.f32 %v2362, %v2402
    %v2404 = vpop.f32.mrb[0].mxu0
    %v2405 = vadd.f32 %v2364, %v2404
    %v2406 = vpop.f32.mrb[0].mxu0
    %v2407 = vpop.f32.mrb[0].mxu0
    %2408 = vdwg.mxu0
    %2409 = vmatprep.subr.bf16.mxu0 %v634
    %2410 = vmatpush1.bf16.msra.mxu0 %v633
    %2411 = vmatprep.subr.bf16.mxu0 %v640
    %2412 = vmatpush1.bf16.msra.mxu0 %v639
    %2413 = vmatprep.subr.bf16.mxu0 %v646
    %2414 = vmatpush1.bf16.msra.mxu0 %v645
    %2415 = vmatprep.subr.bf16.mxu0 %v652
    %2416 = vmatpush1.bf16.msra.mxu0 %v651
    %2417 = vmatprep.subr.bf16.mxu0 %v658
    %2418 = vmatpush1.bf16.msra.mxu0 %v657
    %2419 = vmatprep.subr.bf16.mxu0 %v664
    %2420 = vmatpush1.bf16.msra.mxu0 %v663
    %2421 = vmatprep.subr.bf16.mxu0 %v670
    %2422 = vmatpush1.bf16.msra.mxu0 %v669
    %2423 = vmatprep.subr.bf16.mxu0 %v676
    %2424 = vmatpush1.bf16.msra.mxu0 %v675
    %2425 = vmatprep.subr.bf16.mxu0 %v682
    %2426 = vmatpush1.bf16.msra.mxu0 %v681
    %2427 = vmatprep.subr.bf16.mxu0 %v688
    %2428 = vmatpush1.bf16.msra.mxu0 %v687
    %2429 = vmatprep.subr.bf16.mxu0 %v694
    %2430 = vmatpush1.bf16.msra.mxu0 %v693
    %2431 = vmatprep.subr.bf16.mxu0 %v700
    %2432 = vmatpush1.bf16.msra.mxu0 %v699
    %2433 = vmatprep.subr.bf16.mxu0 %v706
    %2434 = vmatpush1.bf16.msra.mxu0 %v705
    %2435 = vmatprep.subr.bf16.mxu0 %v712
    %2436 = vmatpush1.bf16.msra.mxu0 %v711
    %2437 = vmatprep.subr.bf16.mxu0 %v718
    %2438 = vmatpush1.bf16.msra.mxu0 %v717
    %2439 = vmatprep.subr.bf16.mxu0 %v724
    %2440 = vmatpush1.bf16.msra.mxu0 %v723
    %2441 = vmatprep.mubr.bf16.mxu0 %v130
    %2442 = vmatmul.mubr.bf16.gmra.mrb[0].mxu0 %v129
    %v2443 = vpop.f32.mrb[0].mxu0
    %v2444 = vadd.f32 0.0, %v2443
    %v2445 = vpop.f32.mrb[0].mxu0
    %v2446 = vadd.f32 0.0, %v2445
    %v2447 = vpop.f32.mrb[0].mxu0
    %v2448 = vpop.f32.mrb[0].mxu0
    %2449 = vdwg.mxu0
    %2450 = vmatprep.subr.bf16.mxu0 %v730
    %2451 = vmatpush1.bf16.msra.mxu0 %v729
    %2452 = vmatprep.subr.bf16.mxu0 %v736
    %2453 = vmatpush1.bf16.msra.mxu0 %v735
    %2454 = vmatprep.subr.bf16.mxu0 %v742
    %2455 = vmatpush1.bf16.msra.mxu0 %v741
    %2456 = vmatprep.subr.bf16.mxu0 %v748
    %2457 = vmatpush1.bf16.msra.mxu0 %v747
    %2458 = vmatprep.subr.bf16.mxu0 %v754
    %2459 = vmatpush1.bf16.msra.mxu0 %v753
    %2460 = vmatprep.subr.bf16.mxu0 %v760
    %2461 = vmatpush1.bf16.msra.mxu0 %v759
    %2462 = vmatprep.subr.bf16.mxu0 %v766
    %2463 = vmatpush1.bf16.msra.mxu0 %v765
    %2464 = vmatprep.subr.bf16.mxu0 %v772
    %2465 = vmatpush1.bf16.msra.mxu0 %v771
    %2466 = vmatprep.subr.bf16.mxu0 %v778
    %2467 = vmatpush1.bf16.msra.mxu0 %v777
    %2468 = vmatprep.subr.bf16.mxu0 %v784
    %2469 = vmatpush1.bf16.msra.mxu0 %v783
    %2470 = vmatprep.subr.bf16.mxu0 %v790
    %2471 = vmatpush1.bf16.msra.mxu0 %v789
    %2472 = vmatprep.subr.bf16.mxu0 %v796
    %2473 = vmatpush1.bf16.msra.mxu0 %v795
    %2474 = vmatprep.subr.bf16.mxu0 %v802
    %2475 = vmatpush1.bf16.msra.mxu0 %v801
    %2476 = vmatprep.subr.bf16.mxu0 %v808
    %2477 = vmatpush1.bf16.msra.mxu0 %v807
    %2478 = vmatprep.subr.bf16.mxu0 %v814
    %2479 = vmatpush1.bf16.msra.mxu0 %v813
    %2480 = vmatprep.subr.bf16.mxu0 %v820
    %2481 = vmatpush1.bf16.msra.mxu0 %v819
    %2482 = vmatprep.mubr.bf16.mxu0 %v132
    %2483 = vmatmul.mubr.bf16.gmra.mrb[0].mxu0 %v131
    %v2484 = vpop.f32.mrb[0].mxu0
    %v2485 = vadd.f32 %v2444, %v2484
    %v2486 = vpop.f32.mrb[0].mxu0
    %v2487 = vadd.f32 %v2446, %v2486
    %v2488 = vpop.f32.mrb[0].mxu0
    %v2489 = vpop.f32.mrb[0].mxu0
    %2490 = vdwg.mxu0
    %2491 = vmatprep.subr.bf16.mxu0 %v826
    %2492 = vmatpush1.bf16.msra.mxu0 %v825
    %2493 = vmatprep.subr.bf16.mxu0 %v832
    %2494 = vmatpush1.bf16.msra.mxu0 %v831
    %2495 = vmatprep.subr.bf16.mxu0 %v838
    %2496 = vmatpush1.bf16.msra.mxu0 %v837
    %2497 = vmatprep.subr.bf16.mxu0 %v844
    %2498 = vmatpush1.bf16.msra.mxu0 %v843
    %2499 = vmatprep.subr.bf16.mxu0 %v850
    %2500 = vmatpush1.bf16.msra.mxu0 %v849
    %2501 = vmatprep.subr.bf16.mxu0 %v856
    %2502 = vmatpush1.bf16.msra.mxu0 %v855
    %2503 = vmatprep.subr.bf16.mxu0 %v862
    %2504 = vmatpush1.bf16.msra.mxu0 %v861
    %2505 = vmatprep.subr.bf16.mxu0 %v868
    %2506 = vmatpush1.bf16.msra.mxu0 %v867
    %2507 = vmatprep.subr.bf16.mxu0 %v874
    %2508 = vmatpush1.bf16.msra.mxu0 %v873
    %2509 = vmatprep.subr.bf16.mxu0 %v880
    %2510 = vmatpush1.bf16.msra.mxu0 %v879
    %2511 = vmatprep.subr.bf16.mxu0 %v886
    %2512 = vmatpush1.bf16.msra.mxu0 %v885
    %2513 = vmatprep.subr.bf16.mxu0 %v892
    %2514 = vmatpush1.bf16.msra.mxu0 %v891
    %2515 = vmatprep.subr.bf16.mxu0 %v898
    %2516 = vmatpush1.bf16.msra.mxu0 %v897
    %2517 = vmatprep.subr.bf16.mxu0 %v904
    %2518 = vmatpush1.bf16.msra.mxu0 %v903
    %2519 = vmatprep.subr.bf16.mxu0 %v910
    %2520 = vmatpush1.bf16.msra.mxu0 %v909
    %2521 = vmatprep.subr.bf16.mxu0 %v916
    %2522 = vmatpush1.bf16.msra.mxu0 %v915
    %2523 = vmatprep.mubr.bf16.mxu0 %v134
    %2524 = vmatmul.mubr.bf16.gmra.mrb[0].mxu0 %v133
    %v2525 = vpop.f32.mrb[0].mxu0
    %v2526 = vadd.f32 %v2485, %v2525
    %v2527 = vpop.f32.mrb[0].mxu0
    %v2528 = vadd.f32 %v2487, %v2527
    %v2529 = vpop.f32.mrb[0].mxu0
    %v2530 = vpop.f32.mrb[0].mxu0
    %2531 = vdwg.mxu0
    %2532 = vmatprep.subr.bf16.mxu0 %v922
    %2533 = vmatpush1.bf16.msra.mxu0 %v921
    %2534 = vmatprep.subr.bf16.mxu0 %v928
    %2535 = vmatpush1.bf16.msra.mxu0 %v927
    %2536 = vmatprep.subr.bf16.mxu0 %v934
    %2537 = vmatpush1.bf16.msra.mxu0 %v933
    %2538 = vmatprep.subr.bf16.mxu0 %v940
    %2539 = vmatpush1.bf16.msra.mxu0 %v939
    %2540 = vmatprep.subr.bf16.mxu0 %v946
    %2541 = vmatpush1.bf16.msra.mxu0 %v945
    %2542 = vmatprep.subr.bf16.mxu0 %v952
    %2543 = vmatpush1.bf16.msra.mxu0 %v951
    %2544 = vmatprep.subr.bf16.mxu0 %v958
    %2545 = vmatpush1.bf16.msra.mxu0 %v957
    %2546 = vmatprep.subr.bf16.mxu0 %v964
    %2547 = vmatpush1.bf16.msra.mxu0 %v963
    %2548 = vmatprep.subr.bf16.mxu0 %v970
    %2549 = vmatpush1.bf16.msra.mxu0 %v969
    %2550 = vmatprep.subr.bf16.mxu0 %v976
    %2551 = vmatpush1.bf16.msra.mxu0 %v975
    %2552 = vmatprep.subr.bf16.mxu0 %v982
    %2553 = vmatpush1.bf16.msra.mxu0 %v981
    %2554 = vmatprep.subr.bf16.mxu0 %v988
    %2555 = vmatpush1.bf16.msra.mxu0 %v987
    %2556 = vmatprep.subr.bf16.mxu0 %v994
    %2557 = vmatpush1.bf16.msra.mxu0 %v993
    %2558 = vmatprep.subr.bf16.mxu0 %v1000
    %2559 = vmatpush1.bf16.msra.mxu0 %v999
    %2560 = vmatprep.subr.bf16.mxu0 %v1006
    %2561 = vmatpush1.bf16.msra.mxu0 %v1005
    %2562 = vmatprep.subr.bf16.mxu0 %v1012
    %2563 = vmatpush1.bf16.msra.mxu0 %v1011
    %2564 = vmatprep.mubr.bf16.mxu0 %v136
    %2565 = vmatmul.mubr.bf16.gmra.mrb[0].mxu0 %v135
    %v2566 = vpop.f32.mrb[0].mxu0
    %v2567 = vadd.f32 %v2526, %v2566
    %v2568 = vpop.f32.mrb[0].mxu0
    %v2569 = vadd.f32 %v2528, %v2568
    %v2570 = vpop.f32.mrb[0].mxu0
    %v2571 = vpop.f32.mrb[0].mxu0
    %2572 = vdwg.mxu0
    %2573 = vmatprep.subr.bf16.mxu0 %v1018
    %2574 = vmatpush1.bf16.msra.mxu0 %v1017
    %2575 = vmatprep.subr.bf16.mxu0 %v1024
    %2576 = vmatpush1.bf16.msra.mxu0 %v1023
    %2577 = vmatprep.subr.bf16.mxu0 %v1030
    %2578 = vmatpush1.bf16.msra.mxu0 %v1029
    %2579 = vmatprep.subr.bf16.mxu0 %v1036
    %2580 = vmatpush1.bf16.msra.mxu0 %v1035
    %2581 = vmatprep.subr.bf16.mxu0 %v1042
    %2582 = vmatpush1.bf16.msra.mxu0 %v1041
    %2583 = vmatprep.subr.bf16.mxu0 %v1048
    %2584 = vmatpush1.bf16.msra.mxu0 %v1047
    %2585 = vmatprep.subr.bf16.mxu0 %v1054
    %2586 = vmatpush1.bf16.msra.mxu0 %v1053
    %2587 = vmatprep.subr.bf16.mxu0 %v1060
    %2588 = vmatpush1.bf16.msra.mxu0 %v1059
    %2589 = vmatprep.subr.bf16.mxu0 %v1066
    %2590 = vmatpush1.bf16.msra.mxu0 %v1065
    %2591 = vmatprep.subr.bf16.mxu0 %v1072
    %2592 = vmatpush1.bf16.msra.mxu0 %v1071
    %2593 = vmatprep.subr.bf16.mxu0 %v1078
    %2594 = vmatpush1.bf16.msra.mxu0 %v1077
    %2595 = vmatprep.subr.bf16.mxu0 %v1084
    %2596 = vmatpush1.bf16.msra.mxu0 %v1083
    %2597 = vmatprep.subr.bf16.mxu0 %v1090
    %2598 = vmatpush1.bf16.msra.mxu0 %v1089
    %2599 = vmatprep.subr.bf16.mxu0 %v1096
    %2600 = vmatpush1.bf16.msra.mxu0 %v1095
    %2601 = vmatprep.subr.bf16.mxu0 %v1102
    %2602 = vmatpush1.bf16.msra.mxu0 %v1101
    %2603 = vmatprep.subr.bf16.mxu0 %v1108
    %2604 = vmatpush1.bf16.msra.mxu0 %v1107
    %2605 = vmatprep.mubr.bf16.mxu0 %v138
    %2606 = vmatmul.mubr.bf16.gmra.mrb[0].mxu0 %v137
    %v2607 = vpop.f32.mrb[0].mxu0
    %v2608 = vadd.f32 %v2567, %v2607
    %v2609 = vpop.f32.mrb[0].mxu0
    %v2610 = vadd.f32 %v2569, %v2609
    %v2611 = vpop.f32.mrb[0].mxu0
    %v2612 = vpop.f32.mrb[0].mxu0
    %2613 = vdwg.mxu0
    %2614 = vmatprep.subr.bf16.mxu0 %v1114
    %2615 = vmatpush1.bf16.msra.mxu0 %v1113
    %2616 = vmatprep.subr.bf16.mxu0 %v1120
    %2617 = vmatpush1.bf16.msra.mxu0 %v1119
    %2618 = vmatprep.subr.bf16.mxu0 %v1126
    %2619 = vmatpush1.bf16.msra.mxu0 %v1125
    %2620 = vmatprep.subr.bf16.mxu0 %v1132
    %2621 = vmatpush1.bf16.msra.mxu0 %v1131
    %2622 = vmatprep.subr.bf16.mxu0 %v1138
    %2623 = vmatpush1.bf16.msra.mxu0 %v1137
    %2624 = vmatprep.subr.bf16.mxu0 %v1144
    %2625 = vmatpush1.bf16.msra.mxu0 %v1143
    %2626 = vmatprep.subr.bf16.mxu0 %v1150
    %2627 = vmatpush1.bf16.msra.mxu0 %v1149
    %2628 = vmatprep.subr.bf16.mxu0 %v1156
    %2629 = vmatpush1.bf16.msra.mxu0 %v1155
    %2630 = vmatprep.subr.bf16.mxu0 %v1162
    %2631 = vmatpush1.bf16.msra.mxu0 %v1161
    %2632 = vmatprep.subr.bf16.mxu0 %v1168
    %2633 = vmatpush1.bf16.msra.mxu0 %v1167
    %2634 = vmatprep.subr.bf16.mxu0 %v1174
    %2635 = vmatpush1.bf16.msra.mxu0 %v1173
    %2636 = vmatprep.subr.bf16.mxu0 %v1180
    %2637 = vmatpush1.bf16.msra.mxu0 %v1179
    %2638 = vmatprep.subr.bf16.mxu0 %v1186
    %2639 = vmatpush1.bf16.msra.mxu0 %v1185
    %2640 = vmatprep.subr.bf16.mxu0 %v1192
    %2641 = vmatpush1.bf16.msra.mxu0 %v1191
    %2642 = vmatprep.subr.bf16.mxu0 %v1198
    %2643 = vmatpush1.bf16.msra.mxu0 %v1197
    %2644 = vmatprep.subr.bf16.mxu0 %v1204
    %2645 = vmatpush1.bf16.msra.mxu0 %v1203
    %2646 = vmatprep.mubr.bf16.mxu0 %v140
    %2647 = vmatmul.mubr.bf16.gmra.mrb[0].mxu0 %v139
    %v2648 = vpop.f32.mrb[0].mxu0
    %v2649 = vadd.f32 %v2608, %v2648
    %v2650 = vpop.f32.mrb[0].mxu0
    %v2651 = vadd.f32 %v2610, %v2650
    %v2652 = vpop.f32.mrb[0].mxu0
    %v2653 = vpop.f32.mrb[0].mxu0
    %2654 = vdwg.mxu0
    %2655 = vmatprep.subr.bf16.mxu0 %v1210
    %2656 = vmatpush1.bf16.msra.mxu0 %v1209
    %2657 = vmatprep.subr.bf16.mxu0 %v1216
    %2658 = vmatpush1.bf16.msra.mxu0 %v1215
    %2659 = vmatprep.subr.bf16.mxu0 %v1222
    %2660 = vmatpush1.bf16.msra.mxu0 %v1221
    %2661 = vmatprep.subr.bf16.mxu0 %v1228
    %2662 = vmatpush1.bf16.msra.mxu0 %v1227
    %2663 = vmatprep.subr.bf16.mxu0 %v1234
    %2664 = vmatpush1.bf16.msra.mxu0 %v1233
    %2665 = vmatprep.subr.bf16.mxu0 %v1240
    %2666 = vmatpush1.bf16.msra.mxu0 %v1239
    %2667 = vmatprep.subr.bf16.mxu0 %v1246
    %2668 = vmatpush1.bf16.msra.mxu0 %v1245
    %2669 = vmatprep.subr.bf16.mxu0 %v1252
    %2670 = vmatpush1.bf16.msra.mxu0 %v1251
    %2671 = vmatprep.subr.bf16.mxu0 %v1258
    %2672 = vmatpush1.bf16.msra.mxu0 %v1257
    %2673 = vmatprep.subr.bf16.mxu0 %v1264
    %2674 = vmatpush1.bf16.msra.mxu0 %v1263
    %2675 = vmatprep.subr.bf16.mxu0 %v1270
    %2676 = vmatpush1.bf16.msra.mxu0 %v1269
    %2677 = vmatprep.subr.bf16.mxu0 %v1276
    %2678 = vmatpush1.bf16.msra.mxu0 %v1275
    %2679 = vmatprep.subr.bf16.mxu0 %v1282
    %2680 = vmatpush1.bf16.msra.mxu0 %v1281
    %2681 = vmatprep.subr.bf16.mxu0 %v1288
    %2682 = vmatpush1.bf16.msra.mxu0 %v1287
    %2683 = vmatprep.subr.bf16.mxu0 %v1294
    %2684 = vmatpush1.bf16.msra.mxu0 %v1293
    %2685 = vmatprep.subr.bf16.mxu0 %v1300
    %2686 = vmatpush1.bf16.msra.mxu0 %v1299
    %2687 = vmatprep.mubr.bf16.mxu0 %v142
    %2688 = vmatmul.mubr.bf16.gmra.mrb[0].mxu0 %v141
    %v2689 = vpop.f32.mrb[0].mxu0
    %v2690 = vadd.f32 %v2649, %v2689
    %v2691 = vpop.f32.mrb[0].mxu0
    %v2692 = vadd.f32 %v2651, %v2691
    %v2693 = vpop.f32.mrb[0].mxu0
    %v2694 = vpop.f32.mrb[0].mxu0
    %2695 = vdwg.mxu0
    %2696 = vmatprep.subr.bf16.mxu0 %v1306
    %2697 = vmatpush1.bf16.msra.mxu0 %v1305
    %2698 = vmatprep.subr.bf16.mxu0 %v1312
    %2699 = vmatpush1.bf16.msra.mxu0 %v1311
    %2700 = vmatprep.subr.bf16.mxu0 %v1318
    %2701 = vmatpush1.bf16.msra.mxu0 %v1317
    %2702 = vmatprep.subr.bf16.mxu0 %v1324
    %2703 = vmatpush1.bf16.msra.mxu0 %v1323
    %2704 = vmatprep.subr.bf16.mxu0 %v1330
    %2705 = vmatpush1.bf16.msra.mxu0 %v1329
    %2706 = vmatprep.subr.bf16.mxu0 %v1336
    %2707 = vmatpush1.bf16.msra.mxu0 %v1335
    %2708 = vmatprep.subr.bf16.mxu0 %v1342
    %2709 = vmatpush1.bf16.msra.mxu0 %v1341
    %2710 = vmatprep.subr.bf16.mxu0 %v1348
    %2711 = vmatpush1.bf16.msra.mxu0 %v1347
    %2712 = vmatprep.subr.bf16.mxu0 %v1354
    %2713 = vmatpush1.bf16.msra.mxu0 %v1353
    %2714 = vmatprep.subr.bf16.mxu0 %v1360
    %2715 = vmatpush1.bf16.msra.mxu0 %v1359
    %2716 = vmatprep.subr.bf16.mxu0 %v1366
    %2717 = vmatpush1.bf16.msra.mxu0 %v1365
    %2718 = vmatprep.subr.bf16.mxu0 %v1372
    %2719 = vmatpush1.bf16.msra.mxu0 %v1371
    %2720 = vmatprep.subr.bf16.mxu0 %v1378
    %2721 = vmatpush1.bf16.msra.mxu0 %v1377
    %2722 = vmatprep.subr.bf16.mxu0 %v1384
    %2723 = vmatpush1.bf16.msra.mxu0 %v1383
    %2724 = vmatprep.subr.bf16.mxu0 %v1390
    %2725 = vmatpush1.bf16.msra.mxu0 %v1389
    %2726 = vmatprep.subr.bf16.mxu0 %v1396
    %2727 = vmatpush1.bf16.msra.mxu0 %v1395
    %2728 = vmatprep.mubr.bf16.mxu0 %v144
    %2729 = vmatmul.mubr.bf16.gmra.mrb[0].mxu0 %v143
    %v2730 = vpop.f32.mrb[0].mxu0
    %v2731 = vadd.f32 %v2690, %v2730
    %v2732 = vpop.f32.mrb[0].mxu0
    %v2733 = vadd.f32 %v2692, %v2732
    %v2734 = vpop.f32.mrb[0].mxu0
    %v2735 = vpop.f32.mrb[0].mxu0
    %2736 = vdwg.mxu0
    %2737 = vmatprep.subr.bf16.mxu0 %v1402
    %2738 = vmatpush1.bf16.msra.mxu0 %v1401
    %2739 = vmatprep.subr.bf16.mxu0 %v1408
    %2740 = vmatpush1.bf16.msra.mxu0 %v1407
    %2741 = vmatprep.subr.bf16.mxu0 %v1414
    %2742 = vmatpush1.bf16.msra.mxu0 %v1413
    %2743 = vmatprep.subr.bf16.mxu0 %v1420
    %2744 = vmatpush1.bf16.msra.mxu0 %v1419
    %2745 = vmatprep.subr.bf16.mxu0 %v1426
    %2746 = vmatpush1.bf16.msra.mxu0 %v1425
    %2747 = vmatprep.subr.bf16.mxu0 %v1432
    %2748 = vmatpush1.bf16.msra.mxu0 %v1431
    %2749 = vmatprep.subr.bf16.mxu0 %v1438
    %2750 = vmatpush1.bf16.msra.mxu0 %v1437
    %2751 = vmatprep.subr.bf16.mxu0 %v1444
    %2752 = vmatpush1.bf16.msra.mxu0 %v1443
    %2753 = vmatprep.subr.bf16.mxu0 %v1450
    %2754 = vmatpush1.bf16.msra.mxu0 %v1449
    %2755 = vmatprep.subr.bf16.mxu0 %v1456
    %2756 = vmatpush1.bf16.msra.mxu0 %v1455
    %2757 = vmatprep.subr.bf16.mxu0 %v1462
    %2758 = vmatpush1.bf16.msra.mxu0 %v1461
    %2759 = vmatprep.subr.bf16.mxu0 %v1468
    %2760 = vmatpush1.bf16.msra.mxu0 %v1467
    %2761 = vmatprep.subr.bf16.mxu0 %v1474
    %2762 = vmatpush1.bf16.msra.mxu0 %v1473
    %2763 = vmatprep.subr.bf16.mxu0 %v1480
    %2764 = vmatpush1.bf16.msra.mxu0 %v1479
    %2765 = vmatprep.subr.bf16.mxu0 %v1486
    %2766 = vmatpush1.bf16.msra.mxu0 %v1485
    %2767 = vmatprep.subr.bf16.mxu0 %v1492
    %2768 = vmatpush1.bf16.msra.mxu0 %v1491
    %2769 = vmatprep.mubr.bf16.mxu0 %v146
    %2770 = vmatmul.mubr.bf16.gmra.mrb[0].mxu0 %v145
    %v2771 = vpop.f32.mrb[0].mxu0
    %v2772 = vadd.f32 %v2731, %v2771
    %v2773 = vpop.f32.mrb[0].mxu0
    %v2774 = vadd.f32 %v2733, %v2773
    %v2775 = vpop.f32.mrb[0].mxu0
    %v2776 = vpop.f32.mrb[0].mxu0
    %2777 = vdwg.mxu0
    %2778 = vmatprep.subr.bf16.mxu0 %v1498
    %2779 = vmatpush1.bf16.msra.mxu0 %v1497
    %2780 = vmatprep.subr.bf16.mxu0 %v1504
    %2781 = vmatpush1.bf16.msra.mxu0 %v1503
    %2782 = vmatprep.subr.bf16.mxu0 %v1510
    %2783 = vmatpush1.bf16.msra.mxu0 %v1509
    %2784 = vmatprep.subr.bf16.mxu0 %v1516
    %2785 = vmatpush1.bf16.msra.mxu0 %v1515
    %2786 = vmatprep.subr.bf16.mxu0 %v1522
    %2787 = vmatpush1.bf16.msra.mxu0 %v1521
    %2788 = vmatprep.subr.bf16.mxu0 %v1528
    %2789 = vmatpush1.bf16.msra.mxu0 %v1527
    %2790 = vmatprep.subr.bf16.mxu0 %v1534
    %2791 = vmatpush1.bf16.msra.mxu0 %v1533
    %2792 = vmatprep.subr.bf16.mxu0 %v1540
    %2793 = vmatpush1.bf16.msra.mxu0 %v1539
    %2794 = vmatprep.subr.bf16.mxu0 %v1546
    %2795 = vmatpush1.bf16.msra.mxu0 %v1545
    %2796 = vmatprep.subr.bf16.mxu0 %v1552
    %2797 = vmatpush1.bf16.msra.mxu0 %v1551
    %2798 = vmatprep.subr.bf16.mxu0 %v1558
    %2799 = vmatpush1.bf16.msra.mxu0 %v1557
    %2800 = vmatprep.subr.bf16.mxu0 %v1564
    %2801 = vmatpush1.bf16.msra.mxu0 %v1563
    %2802 = vmatprep.subr.bf16.mxu0 %v1570
    %2803 = vmatpush1.bf16.msra.mxu0 %v1569
    %2804 = vmatprep.subr.bf16.mxu0 %v1576
    %2805 = vmatpush1.bf16.msra.mxu0 %v1575
    %2806 = vmatprep.subr.bf16.mxu0 %v1582
    %2807 = vmatpush1.bf16.msra.mxu0 %v1581
    %2808 = vmatprep.subr.bf16.mxu0 %v1588
    %2809 = vmatpush1.bf16.msra.mxu0 %v1587
    %2810 = vmatprep.mubr.bf16.mxu0 %v148
    %2811 = vmatmul.mubr.bf16.gmra.mrb[0].mxu0 %v147
    %v2812 = vpop.f32.mrb[0].mxu0
    %v2813 = vadd.f32 %v2772, %v2812
    %v2814 = vpop.f32.mrb[0].mxu0
    %v2815 = vadd.f32 %v2774, %v2814
    %v2816 = vpop.f32.mrb[0].mxu0
    %v2817 = vpop.f32.mrb[0].mxu0
    %2818 = vdwg.mxu0
    %v2819 = vld [vmem:[#allocation10] sm:$0xff]
    %v2820 = vld [vmem:[#allocation10 + $0x8] sm:$0xff]
    %v2821 = vld [vmem:[#allocation10 + $0x10] sm:$0xff]
    %v2822 = vld [vmem:[#allocation10 + $0x18] sm:$0xff]
    %v2823 = vld [vmem:[#allocation10 + $0x20] sm:$0xff]
    %v2824 = vld [vmem:[#allocation10 + $0x28] sm:$0xff]
    %v2825 = vld [vmem:[#allocation7] sm:$0x3f]
    %v2827 = vlaneseq
    %v2828 = vshrl.u32 %v2827, 7
    %v2829 = vsub.s32 0, %v2828
    %v2830 = vrot.slane %v2825, %v2829
    %v2831 = vlaneseq
    %v2832 = vshrl.u32 %v2831, 7
    %v2833 = vsub.s32 1, %v2832
    %v2834 = vrot.slane %v2825, %v2833
    %v2835 = vlaneseq
    %v2836 = vshrl.u32 %v2835, 7
    %v2837 = vsub.s32 2, %v2836
    %v2838 = vrot.slane %v2825, %v2837
    %v2839 = vlaneseq
    %v2840 = vshrl.u32 %v2839, 7
    %v2841 = vsub.s32 3, %v2840
    %v2842 = vrot.slane %v2825, %v2841
    %v2843 = vlaneseq
    %v2844 = vshrl.u32 %v2843, 7
    %v2845 = vsub.s32 4, %v2844
    %v2846 = vrot.slane %v2825, %v2845
    %v2847 = vlaneseq
    %v2848 = vshrl.u32 %v2847, 7
    %v2849 = vsub.s32 5, %v2848
    %v2850 = vrot.slane %v2825, %v2849
    %v2857 = vmul.f32 %v1993, %v2830
    %v2858 = vmul.f32 %v1995, %v2834
    %v2859 = vmul.f32 %v2403, %v2838
    %v2860 = vmul.f32 %v2405, %v2842
    %v2861 = vmul.f32 %v2813, %v2846
    %v2862 = vmul.f32 %v2815, %v2850
    %v2863 = vadd.f32 %v2819, %v2857
    %v2864 = vadd.f32 %v2820, %v2858
    %v2865 = vadd.f32 %v2821, %v2859
    %v2866 = vadd.f32 %v2822, %v2860
    %v2867 = vadd.f32 %v2823, %v2861
    %v2868 = vadd.f32 %v2824, %v2862
    %2869 = vst [vmem:[#allocation10] sm:$0xff] %v2863
    %2870 = vst [vmem:[#allocation10 + $0x8] sm:$0xff] %v2864
    %2871 = vst [vmem:[#allocation10 + $0x10] sm:$0xff] %v2865
    %2872 = vst [vmem:[#allocation10 + $0x18] sm:$0xff] %v2866
    %2873 = vst [vmem:[#allocation10 + $0x20] sm:$0xff] %v2867
    %2874 = vst [vmem:[#allocation10 + $0x28] sm:$0xff] %v2868
    // Predicated region
    $region38: #{tpu_custom_call.1} parent=1 // pred_check
      _
    $region39: #{tpu_custom_call.1} parent=1 // pred_check_branch
      %2876 = sbr.rel (0) target = $region41
    $region40: #{tpu_custom_call.1} parent=1 // pred_region
      %s2878 = ssub.s32 768, 768
      %2879 = vsyncadd [#allocation4], %s2878
      %s2881 = sshll.u32 [#allocation10], 4
      %s2882 = int_to_ptr.vmem [resolvable:$true] %s2881
      %2884 = dma.vmem_to_hbm [thread:$0]  %s2882, 768, %s4, [#allocation4]
    $region41: #{tpu_custom_call.1} parent=1 // pred_fallthru
      _
    // Predicated region
    $region42: #{tpu_custom_call.1} parent=1 // pred_check
      _
    $region43: #{tpu_custom_call.1} parent=1 // pred_check_branch
      %2886 = sbr.rel (0) target = $region45
    $region44: #{tpu_custom_call.1} parent=1 // pred_region
      %2887 = dma.done [#allocation4], 768
    $region45: #{tpu_custom_call.1} parent=1 // pred_fallthru
      _
    %2888 = vsyncpa [#allocation3], 1
    %2889 = vsyncpa [#allocation6], 1
    %2890 = vsyncpa [#allocation9], 1
    %2891 = vsyncpa [#allocation4], 1

</llo_original>
